<compile_context>
chip_gen: v5e
topology: v5e:2x2
jax: 0.10.0
libtpu: 0.0.40
codegen_flags: <defaults>
</compile_context>

<pallas_src>
import functools

import jax
import jax.numpy as jnp
import numpy as np
from jax import lax
from jax.experimental import pallas as pl
from jax.experimental.pallas import tpu as pltpu


# --------------------------- tiling helpers ---------------------------------

def _row_tile(n, target=512):
    """Largest multiple of 8 that divides n and is <= target (fallback: n)."""
    t = min(n, target)
    t -= t % 8
    while t >= 8:
        if n % t == 0:
            return t
        t -= 8
    return n


def _lane_tile(n, target=512):
    """Largest multiple of 128 that divides n and is <= target (fallback: n)."""
    t = min(n, target)
    t -= t % 128
    while t >= 128:
        if n % t == 0:
            return t
        t -= 128
    return n


# ----------------------------- Pallas kernels --------------------------------

def _linear_kernel(x_ref, w_ref, b_ref, o_ref):
    o_ref[...] = (jnp.dot(x_ref[...], w_ref[...],
                          preferred_element_type=jnp.float32) + b_ref[...])


def _deconv_mm_stats_kernel(p_ref, w_ref, b_ref, o_ref, s_ref, q_ref):
    # One lane-dense MXU matmul per row tile: (TR, 4*Cin) @ (4*Cin, Npad) + bias.
    y = jnp.dot(p_ref[...], w_ref[...],
                preferred_element_type=jnp.float32) + b_ref[...]
    o_ref[...] = y
    # Streamed BatchNorm statistics: per-tile partial sum / sum-of-squares per
    # output column, broadcast over 8 sublanes to keep the stat block (8,128)-tiled.
    s_ref[...] = jnp.broadcast_to(jnp.sum(y, axis=0, keepdims=True), s_ref.shape)
    q_ref[...] = jnp.broadcast_to(jnp.sum(y * y, axis=0, keepdims=True), q_ref.shape)


def _bn_relu_kernel(y_ref, sc_ref, sh_ref, o_ref):
    o_ref[...] = jnp.maximum(y_ref[...] * sc_ref[...] + sh_ref[...], 0.0)


# ------------------------------ layer wrappers --------------------------------

def linear_pallas(x, w, b):
    B, L = x.shape
    Hn = w.shape[1]
    M = ((B + 7) // 8) * 8                       # pad M to a full sublane group
    xp = jnp.pad(x, ((0, M - B), (0, 0)))
    tn = _lane_tile(Hn, 512)
    nt = Hn // tn
    out = pl.pallas_call(
        _linear_kernel,
        out_shape=jax.ShapeDtypeStruct((M, Hn), jnp.float32),
        grid=(nt,),
        in_specs=[pl.BlockSpec((M, L), lambda j: (0, 0)),
                  pl.BlockSpec((L, tn), lambda j: (0, j)),
                  pl.BlockSpec((1, tn), lambda j: (0, j))],
        out_specs=pl.BlockSpec((M, tn), lambda j: (0, j)),
        compiler_params=pltpu.CompilerParams(dimension_semantics=("parallel",)),
    )(xp, w, b.reshape(1, Hn))
    return out[:B]


def _deconv_phase_matmul(x_nhwc, w_pt, b, row_target=512):
    """ConvTranspose2d(k=3, s=2, p=1, op=1) via stride-2 phase decomposition.

    Output phase (r, c) at position (m, n) only touches the 2x2 input patch
    x[m+dh, n+dw] with kernel tap (kh, kw) = (r+1-2*dh, c+1-2*dw) when valid,
    so the whole layer is one matmul of the 2x2-patch im2col (rows, 4*Cin)
    against a tap x phase packed weight (4*Cin, 4*Cout [lane-padded]).
    Returns the phase-packed (rows, Np) slab plus per-column BN partial stats.
    """
    B, H, W, Cin = x_nhwc.shape
    Cout = w_pt.shape[1]
    K = 4 * Cin
    N4 = 4 * Cout
    Np = max(128, ((N4 + 127) // 128) * 128)     # lane-dense output columns
    rows = B * H * W

    # Sub-pixel im2col on the UN-dilated input (pure relayout, no zero-mults).
    xp = jnp.pad(x_nhwc, ((0, 0), (0, 1), (0, 1), (0, 0)))
    patches = jnp.concatenate(
        [xp[:, :H, :W, :], xp[:, :H, 1:, :], xp[:, 1:, :W, :], xp[:, 1:, 1:, :]],
        axis=-1).reshape(rows, K)

    # Tap-major (rows of Wp) x phase-major (cols of Wp) packed weight.
    tap_blocks = []
    for dh in (0, 1):
        for dw in (0, 1):
            phase_cols = []
            for r in (0, 1):
                for c in (0, 1):
                    kh, kw = r + 1 - 2 * dh, c + 1 - 2 * dw
                    if 0 <= kh <= 2 and 0 <= kw <= 2:
                        phase_cols.append(w_pt[:, :, kh, kw])
                    else:
                        phase_cols.append(jnp.zeros((Cin, Cout), w_pt.dtype))
            tap_blocks.append(jnp.concatenate(phase_cols, axis=1))
    wp = jnp.concatenate(tap_blocks, axis=0)      # (4*Cin, 4*Cout)
    bp = jnp.tile(b, 4)                           # (4*Cout,)
    if Np != N4:                                  # pad Cout=3 layer to 128 lanes
        wp = jnp.pad(wp, ((0, 0), (0, Np - N4)))
        bp = jnp.pad(bp, ((0, Np - N4),))

    tr = _row_tile(rows, row_target)
    nt = rows // tr
    y, ps, pq = pl.pallas_call(
        _deconv_mm_stats_kernel,
        out_shape=(jax.ShapeDtypeStruct((rows, Np), jnp.float32),
                   jax.ShapeDtypeStruct((nt * 8, Np), jnp.float32),
                   jax.ShapeDtypeStruct((nt * 8, Np), jnp.float32)),
        grid=(nt,),
        in_specs=[pl.BlockSpec((tr, K), lambda i: (i, 0)),
                  pl.BlockSpec((K, Np), lambda i: (0, 0)),
                  pl.BlockSpec((1, Np), lambda i: (0, 0))],
        out_specs=(pl.BlockSpec((tr, Np), lambda i: (i, 0)),
                   pl.BlockSpec((8, Np), lambda i: (i, 0)),
                   pl.BlockSpec((8, Np), lambda i: (i, 0))),
        compiler_params=pltpu.CompilerParams(dimension_semantics=("parallel",)),
    )(patches, wp, bp.reshape(1, Np))

    col_sum = ps.reshape(nt, 8, Np)[:, 0, :].sum(axis=0)
    col_sq = pq.reshape(nt, 8, Np)[:, 0, :].sum(axis=0)
    return y, col_sum, col_sq, (B, H, W, Cout, N4, Np, rows)


def _phase_to_nhwc(y, B, H, W, Cout, N4):
    # Pixel-shuffle the phase-packed columns back to (B, 2H, 2W, Cout).
    y = y[:, :N4].reshape(B, H, W, 2, 2, Cout)
    return y.transpose(0, 1, 3, 2, 4, 5).reshape(B, 2 * H, 2 * W, Cout)


def _bn_relu_apply(y, col_sum, col_sq, gamma, beta, meta, eps=1e-5):
    B, H, W, Cout, N4, Np, rows = meta
    # Combine per-tile partial sums over tiles and over the 4 phase blocks:
    # stats are over the full N*OH*OW extent (= rows * 4 elements per channel).
    ch_sum = col_sum[:N4].reshape(4, Cout).sum(axis=0)
    ch_sq = col_sq[:N4].reshape(4, Cout).sum(axis=0)
    cnt = jnp.float32(rows * 4)
    mean = ch_sum / cnt
    var = ch_sq / cnt - mean * mean              # biased var (training-mode BN)
    scale = gamma * lax.rsqrt(var + eps)
    shift = beta - mean * scale
    sc = jnp.pad(jnp.tile(scale, 4), (0, Np - N4)).reshape(1, Np)
    sh = jnp.pad(jnp.tile(shift, 4), (0, Np - N4)).reshape(1, Np)

    tr = _row_tile(rows, 512)
    nt = rows // tr
    return pl.pallas_call(
        _bn_relu_kernel,
        out_shape=jax.ShapeDtypeStruct((rows, Np), jnp.float32),
        grid=(nt,),
        in_specs=[pl.BlockSpec((tr, Np), lambda i: (i, 0)),
                  pl.BlockSpec((1, Np), lambda i: (0, 0)),
                  pl.BlockSpec((1, Np), lambda i: (0, 0))],
        out_specs=pl.BlockSpec((tr, Np), lambda i: (i, 0)),
        compiler_params=pltpu.CompilerParams(dimension_semantics=("parallel",)),
    )(y, sc, sh)


def deconv_bn_relu(x_nhwc, w_pt, b, gamma, beta):
    y, cs, cq, meta = _deconv_phase_matmul(x_nhwc, w_pt, b)
    yn = _bn_relu_apply(y, cs, cq, gamma, beta, meta)
    B, H, W, Cout, N4, _, _ = meta
    return _phase_to_nhwc(yn, B, H, W, Cout, N4)


def deconv_out(x_nhwc, w_pt, b):
    y, _, _, meta = _deconv_phase_matmul(x_nhwc, w_pt, b)
    B, H, W, Cout, N4, _, _ = meta
    return _phase_to_nhwc(y, B, H, W, Cout, N4)


# --------------------------------- Decoder ------------------------------------

def decoder_forward(x, p, *, s):
    B = x.shape[0]
    cmid = 256
    # Fold the NCHW->NHWC unflatten into the Linear by permuting output columns:
    # new column (h, w, c) <- original column c*s*s + h*s + w.
    idx = jnp.arange(cmid * s * s).reshape(cmid, s, s).transpose(1, 2, 0).reshape(-1)
    h = linear_pallas(x, p['mlp_w'][:, idx], p['mlp_b'][idx]).reshape(B, s, s, cmid)
    h = deconv_bn_relu(h, p['w1'], p['b1'], p['g1'], p['bt1'])
    h = deconv_bn_relu(h, p['w2'], p['b2'], p['g2'], p['bt2'])
    h = deconv_out(h, p['w3'], p['b3'])
    return h.transpose(0, 3, 1, 2)                          # NHWC -> NCHW


# ------------------------- pure-JAX reference (check) --------------------------

def _ref_deconv(x_nhwc, w_pt, b):
    Cout = w_pt.shape[1]
    wf = jnp.flip(w_pt, axis=(2, 3)).transpose(2, 3, 0, 1)  # HWIO
    y = lax.conv_general_dilated(
        x_nhwc, wf, window_strides=(1, 1), padding=[(1, 2), (1, 2)],
        lhs_dilation=(2, 2), dimension_numbers=('NHWC', 'HWIO', 'NHWC'))
    return y + b.reshape(1, 1, 1, Cout)


def _ref_bn_relu(x_nhwc, g, bt):
    mean = jnp.mean(x_nhwc, axis=(0, 1, 2), keepdims=True)
    var = jnp.mean((x_nhwc - mean) ** 2, axis=(0, 1, 2), keepdims=True)
    y = (x_nhwc - mean) * lax.rsqrt(var + 1e-5) * g.reshape(1, 1, 1, -1) \
        + bt.reshape(1, 1, 1, -1)
    return jnp.maximum(y, 0.0)


def decoder_ref(x, p, *, s):
    B = x.shape[0]
    h = x @ p['mlp_w'] + p['mlp_b']
    h = h.reshape(B, 256, s, s).transpose(0, 2, 3, 1)
    h = _ref_bn_relu(_ref_deconv(h, p['w1'], p['b1']), p['g1'], p['bt1'])
    h = _ref_bn_relu(_ref_deconv(h, p['w2'], p['b2']), p['g2'], p['bt2'])
    h = _ref_deconv(h, p['w3'], p['b3'])
    return h.transpose(0, 3, 1, 2)


# ----------------------------------- main --------------------------------------

if __name__ == "__main__":
    B, latent = 2, 32
    s = 4                         # = input_dim // 8 in the original module
    hidden = 256 * s * s

    ks = jax.random.split(jax.random.PRNGKey(0), 12)
    params = {
        'mlp_w': jax.random.normal(ks[0], (latent, hidden), jnp.float32)
                 / jnp.sqrt(jnp.float32(latent)),
        'mlp_b': 0.01 * jax.random.normal(ks[1], (hidden,), jnp.float32),
        'w1': 0.02 * jax.random.normal(ks[2], (256, 128, 3, 3), jnp.float32),
        'b1': 0.01 * jax.random.normal(ks[3], (128,), jnp.float32),
        'g1': 1.0 + 0.1 * jax.random.normal(ks[4], (128,), jnp.float32),
        'bt1': 0.1 * jax.random.normal(ks[5], (128,), jnp.float32),
        'w2': 0.03 * jax.random.normal(ks[6], (128, 64, 3, 3), jnp.float32),
        'b2': 0.01 * jax.random.normal(ks[7], (64,), jnp.float32),
        'g2': 1.0 + 0.1 * jax.random.normal(ks[8], (64,), jnp.float32),
        'bt2': 0.1 * jax.random.normal(ks[9], (64,), jnp.float32),
        'w3': 0.05 * jax.random.normal(ks[10], (64, 3, 3, 3), jnp.float32),
        'b3': 0.01 * jax.random.normal(ks[11], (3,), jnp.float32),
    }
    x = jax.random.normal(jax.random.PRNGKey(1), (B, latent), jnp.float32)

    fwd = jax.jit(functools.partial(decoder_forward, s=s))
    out = jax.block_until_ready(fwd(x, params))
    assert out.shape == (B, 3, 8 * s, 8 * s), out.shape

    ref = jax.block_until_ready(decoder_ref(x, params, s=s))
    np.testing.assert_allclose(np.asarray(out), np.asarray(ref),
                               rtol=2e-3, atol=2e-3)
    print("KERNEL_OK")
</pallas_src>

<mosaic_0001>
module attributes {stable_mosaic.version = 11 : i64} {
  func.func @_linear_kernel(%arg0: i32, %arg1: memref<8x32xf32, #tpu.memory_space<vmem>>, %arg2: memref<32x512xf32, #tpu.memory_space<vmem>>, %arg3: memref<1x512xf32, #tpu.memory_space<vmem>>, %arg4: memref<8x512xf32, #tpu.memory_space<vmem>>) attributes {dimension_semantics = [#tpu.dimension_semantics<parallel>], iteration_bounds = array<i64: 8>, scalar_prefetch = 0 : i64, scratch_operands = 0 : i64, tpu.core_type = #tpu.core_type<tc>, window_params = [{pipeline_mode = #tpu.pipeline_mode<synchronous>, transform_indices = @transform_0, window_bounds = array<i64: 8, 32>}, {transform_indices = @transform_1, window_bounds = array<i64: 32, 512>}, {transform_indices = @transform_2, window_bounds = array<i64: 1, 512>}, {transform_indices = @transform_3, window_bounds = array<i64: 8, 512>}]} {
    %c0 = arith.constant 0 : index
    %c0_0 = arith.constant 0 : index
    %0 = vector.load %arg1[%c0, %c0_0] : memref<8x32xf32, #tpu.memory_space<vmem>>, vector<8x32xf32>
    %c0_1 = arith.constant 0 : index
    %c0_2 = arith.constant 0 : index
    %1 = vector.load %arg2[%c0_1, %c0_2] : memref<32x512xf32, #tpu.memory_space<vmem>>, vector<32x512xf32>
    %cst = arith.constant dense<0.000000e+00> : vector<8x512xf32>
    %2 = tpu.matmul %0, %1, %cst {dimension_numbers = #tpu.dot_dimension_numbers<[1], [0], [0], [1], [0, 0, 1, 1], [], []>} : vector<8x32xf32>, vector<32x512xf32>, vector<8x512xf32> -> vector<8x512xf32>
    %c0_3 = arith.constant 0 : index
    %c0_4 = arith.constant 0 : index
    %3 = vector.load %arg3[%c0_3, %c0_4] : memref<1x512xf32, #tpu.memory_space<vmem>>, vector<1x512xf32>
    %4 = vector.broadcast %3 : vector<1x512xf32> to vector<8x512xf32>
    %5 = arith.addf %2, %4 : vector<8x512xf32>
    %c0_5 = arith.constant 0 : index
    %c0_6 = arith.constant 0 : index
    %6 = vector.load %arg4[%c0_5, %c0_6] : memref<8x512xf32, #tpu.memory_space<vmem>>, vector<8x512xf32>
    tpu.vector_store %arg4[%c0_5, %c0_6], %5 {strides = array<i32>} : memref<8x512xf32, #tpu.memory_space<vmem>>, vector<8x512xf32>,
    return
  }
  func.func @transform_0(%arg0: i32) -> (i32, i32) {
    %c0_i32 = arith.constant 0 : i32
    %c0_i32_0 = arith.constant 0 : i32
    %c0_i32_1 = arith.constant 0 : i32
    return %c0_i32, %c0_i32_0 : i32, i32
  }
  func.func @transform_1(%arg0: i32) -> (i32, i32) {
    %c0_i32 = arith.constant 0 : i32
    %c0_i32_0 = arith.constant 0 : i32
    return %c0_i32, %arg0 : i32, i32
  }
  func.func @transform_2(%arg0: i32) -> (i32, i32) {
    %c0_i32 = arith.constant 0 : i32
    %c0_i32_0 = arith.constant 0 : i32
    return %c0_i32, %arg0 : i32, i32
  }
  func.func @transform_3(%arg0: i32) -> (i32, i32) {
    %c0_i32 = arith.constant 0 : i32
    %c0_i32_0 = arith.constant 0 : i32
    return %c0_i32, %arg0 : i32, i32
  }
}

module attributes {stable_mosaic.version = 11 : i64} {
  func.func @_bn_relu_kernel(%arg0: i32, %arg1: memref<32x512xf32, #tpu.memory_space<vmem>>, %arg2: memref<1x512xf32, #tpu.memory_space<vmem>>, %arg3: memref<1x512xf32, #tpu.memory_space<vmem>>, %arg4: memref<32x512xf32, #tpu.memory_space<vmem>>) attributes {dimension_semantics = [#tpu.dimension_semantics<parallel>], iteration_bounds = array<i64: 1>, scalar_prefetch = 0 : i64, scratch_operands = 0 : i64, tpu.core_type = #tpu.core_type<tc>, window_params = [{transform_indices = @transform_0, window_bounds = array<i64: 32, 512>}, {pipeline_mode = #tpu.pipeline_mode<synchronous>, transform_indices = @transform_1, window_bounds = array<i64: 1, 512>}, {pipeline_mode = #tpu.pipeline_mode<synchronous>, transform_indices = @transform_2, window_bounds = array<i64: 1, 512>}, {transform_indices = @transform_3, window_bounds = array<i64: 32, 512>}]} {
    %c0 = arith.constant 0 : index
    %c0_0 = arith.constant 0 : index
    %0 = vector.load %arg1[%c0, %c0_0] : memref<32x512xf32, #tpu.memory_space<vmem>>, vector<32x512xf32>
    %c0_1 = arith.constant 0 : index
    %c0_2 = arith.constant 0 : index
    %1 = vector.load %arg2[%c0_1, %c0_2] : memref<1x512xf32, #tpu.memory_space<vmem>>, vector<1x512xf32>
    %2 = vector.broadcast %1 : vector<1x512xf32> to vector<32x512xf32>
    %3 = arith.mulf %0, %2 : vector<32x512xf32>
    %c0_3 = arith.constant 0 : index
    %c0_4 = arith.constant 0 : index
    %4 = vector.load %arg3[%c0_3, %c0_4] : memref<1x512xf32, #tpu.memory_space<vmem>>, vector<1x512xf32>
    %5 = vector.broadcast %4 : vector<1x512xf32> to vector<32x512xf32>
    %6 = arith.addf %3, %5 : vector<32x512xf32>
    %cst = arith.constant 0.000000e+00 : f32
    %7 = vector.broadcast %cst : f32 to vector<32x512xf32>
    %8 = arith.maximumf %6, %7 : vector<32x512xf32>
    %c0_5 = arith.constant 0 : index
    %c0_6 = arith.constant 0 : index
    %9 = vector.load %arg4[%c0_5, %c0_6] : memref<32x512xf32, #tpu.memory_space<vmem>>, vector<32x512xf32>
    tpu.vector_store %arg4[%c0_5, %c0_6], %8 {strides = array<i32>} : memref<32x512xf32, #tpu.memory_space<vmem>>, vector<32x512xf32>,
    return
  }
  func.func @transform_0(%arg0: i32) -> (i32, i32) {
    %c0_i32 = arith.constant 0 : i32
    %c0_i32_0 = arith.constant 0 : i32
    return %arg0, %c0_i32 : i32, i32
  }
  func.func @transform_1(%arg0: i32) -> (i32, i32) {
    %c0_i32 = arith.constant 0 : i32
    %c0_i32_0 = arith.constant 0 : i32
    %c0_i32_1 = arith.constant 0 : i32
    return %c0_i32, %c0_i32_0 : i32, i32
  }
  func.func @transform_2(%arg0: i32) -> (i32, i32) {
    %c0_i32 = arith.constant 0 : i32
    %c0_i32_0 = arith.constant 0 : i32
    %c0_i32_1 = arith.constant 0 : i32
    return %c0_i32, %c0_i32_0 : i32, i32
  }
  func.func @transform_3(%arg0: i32) -> (i32, i32) {
    %c0_i32 = arith.constant 0 : i32
    %c0_i32_0 = arith.constant 0 : i32
    return %arg0, %c0_i32 : i32, i32
  }
}

module attributes {stable_mosaic.version = 11 : i64} {
  func.func @_deconv_mm_stats_kernel(%arg0: i32, %arg1: memref<32x1024xf32, #tpu.memory_space<vmem>>, %arg2: memref<1024x512xf32, #tpu.memory_space<vmem>>, %arg3: memref<1x512xf32, #tpu.memory_space<vmem>>, %arg4: memref<32x512xf32, #tpu.memory_space<vmem>>, %arg5: memref<8x512xf32, #tpu.memory_space<vmem>>, %arg6: memref<8x512xf32, #tpu.memory_space<vmem>>) attributes {dimension_semantics = [#tpu.dimension_semantics<parallel>], iteration_bounds = array<i64: 1>, scalar_prefetch = 0 : i64, scratch_operands = 0 : i64, tpu.core_type = #tpu.core_type<tc>, window_params = [{transform_indices = @transform_0, window_bounds = array<i64: 32, 1024>}, {pipeline_mode = #tpu.pipeline_mode<synchronous>, transform_indices = @transform_1, window_bounds = array<i64: 1024, 512>}, {pipeline_mode = #tpu.pipeline_mode<synchronous>, transform_indices = @transform_2, window_bounds = array<i64: 1, 512>}, {transform_indices = @transform_3, window_bounds = array<i64: 32, 512>}, {transform_indices = @transform_4, window_bounds = array<i64: 8, 512>}, {transform_indices = @transform_5, window_bounds = array<i64: 8, 512>}]} {
    %c0 = arith.constant 0 : index
    %c0_0 = arith.constant 0 : index
    %0 = vector.load %arg1[%c0, %c0_0] : memref<32x1024xf32, #tpu.memory_space<vmem>>, vector<32x1024xf32>
    %c0_1 = arith.constant 0 : index
    %c0_2 = arith.constant 0 : index
    %1 = vector.load %arg2[%c0_1, %c0_2] : memref<1024x512xf32, #tpu.memory_space<vmem>>, vector<1024x512xf32>
    %cst = arith.constant dense<0.000000e+00> : vector<32x512xf32>
    %2 = tpu.matmul %0, %1, %cst {dimension_numbers = #tpu.dot_dimension_numbers<[1], [0], [0], [1], [0, 0, 1, 1], [], []>} : vector<32x1024xf32>, vector<1024x512xf32>, vector<32x512xf32> -> vector<32x512xf32>
    %c0_3 = arith.constant 0 : index
    %c0_4 = arith.constant 0 : index
    %3 = vector.load %arg3[%c0_3, %c0_4] : memref<1x512xf32, #tpu.memory_space<vmem>>, vector<1x512xf32>
    %4 = vector.broadcast %3 : vector<1x512xf32> to vector<32x512xf32>
    %5 = arith.addf %2, %4 : vector<32x512xf32>
    %c0_5 = arith.constant 0 : index
    %c0_6 = arith.constant 0 : index
    %6 = vector.load %arg4[%c0_5, %c0_6] : memref<32x512xf32, #tpu.memory_space<vmem>>, vector<32x512xf32>
    tpu.vector_store %arg4[%c0_5, %c0_6], %5 {strides = array<i32>} : memref<32x512xf32, #tpu.memory_space<vmem>>, vector<32x512xf32>,
    %cst_7 = arith.constant dense<0.000000e+00> : vector<512xf32>
    %7 = vector.multi_reduction <add>, %5, %cst_7 [0] : vector<32x512xf32> to vector<512xf32>
    %8 = vector.shape_cast %7 : vector<512xf32> to vector<1x512xf32>
    %9 = vector.shape_cast %8 : vector<1x512xf32> to vector<1x512xf32>
    %10 = vector.broadcast %9 : vector<1x512xf32> to vector<8x512xf32>
    %c0_8 = arith.constant 0 : index
    %c0_9 = arith.constant 0 : index
    %11 = vector.load %arg5[%c0_8, %c0_9] : memref<8x512xf32, #tpu.memory_space<vmem>>, vector<8x512xf32>
    tpu.vector_store %arg5[%c0_8, %c0_9], %10 {strides = array<i32>} : memref<8x512xf32, #tpu.memory_space<vmem>>, vector<8x512xf32>,
    %12 = arith.mulf %5, %5 : vector<32x512xf32>
    %cst_10 = arith.constant dense<0.000000e+00> : vector<512xf32>
    %13 = vector.multi_reduction <add>, %12, %cst_10 [0] : vector<32x512xf32> to vector<512xf32>
    %14 = vector.shape_cast %13 : vector<512xf32> to vector<1x512xf32>
    %15 = vector.shape_cast %14 : vector<1x512xf32> to vector<1x512xf32>
    %16 = vector.broadcast %15 : vector<1x512xf32> to vector<8x512xf32>
    %c0_11 = arith.constant 0 : index
    %c0_12 = arith.constant 0 : index
    %17 = vector.load %arg6[%c0_11, %c0_12] : memref<8x512xf32, #tpu.memory_space<vmem>>, vector<8x512xf32>
    tpu.vector_store %arg6[%c0_11, %c0_12], %16 {strides = array<i32>} : memref<8x512xf32, #tpu.memory_space<vmem>>, vector<8x512xf32>,
    return
  }
  func.func @transform_0(%arg0: i32) -> (i32, i32) {
    %c0_i32 = arith.constant 0 : i32
    %c0_i32_0 = arith.constant 0 : i32
    return %arg0, %c0_i32 : i32, i32
  }
  func.func @transform_1(%arg0: i32) -> (i32, i32) {
    %c0_i32 = arith.constant 0 : i32
    %c0_i32_0 = arith.constant 0 : i32
    %c0_i32_1 = arith.constant 0 : i32
    return %c0_i32, %c0_i32_0 : i32, i32
  }
  func.func @transform_2(%arg0: i32) -> (i32, i32) {
    %c0_i32 = arith.constant 0 : i32
    %c0_i32_0 = arith.constant 0 : i32
    %c0_i32_1 = arith.constant 0 : i32
    return %c0_i32, %c0_i32_0 : i32, i32
  }
  func.func @transform_3(%arg0: i32) -> (i32, i32) {
    %c0_i32 = arith.constant 0 : i32
    %c0_i32_0 = arith.constant 0 : i32
    return %arg0, %c0_i32 : i32, i32
  }
  func.func @transform_4(%arg0: i32) -> (i32, i32) {
    %c0_i32 = arith.constant 0 : i32
    %c0_i32_0 = arith.constant 0 : i32
    return %arg0, %c0_i32 : i32, i32
  }
  func.func @transform_5(%arg0: i32) -> (i32, i32) {
    %c0_i32 = arith.constant 0 : i32
    %c0_i32_0 = arith.constant 0 : i32
    return %arg0, %c0_i32 : i32, i32
  }
}

module attributes {stable_mosaic.version = 11 : i64} {
  func.func @_deconv_mm_stats_kernel(%arg0: i32, %arg1: memref<128x512xf32, #tpu.memory_space<vmem>>, %arg2: memref<512x256xf32, #tpu.memory_space<vmem>>, %arg3: memref<1x256xf32, #tpu.memory_space<vmem>>, %arg4: memref<128x256xf32, #tpu.memory_space<vmem>>, %arg5: memref<8x256xf32, #tpu.memory_space<vmem>>, %arg6: memref<8x256xf32, #tpu.memory_space<vmem>>) attributes {dimension_semantics = [#tpu.dimension_semantics<parallel>], iteration_bounds = array<i64: 1>, scalar_prefetch = 0 : i64, scratch_operands = 0 : i64, tpu.core_type = #tpu.core_type<tc>, window_params = [{transform_indices = @transform_0, window_bounds = array<i64: 128, 512>}, {pipeline_mode = #tpu.pipeline_mode<synchronous>, transform_indices = @transform_1, window_bounds = array<i64: 512, 256>}, {pipeline_mode = #tpu.pipeline_mode<synchronous>, transform_indices = @transform_2, window_bounds = array<i64: 1, 256>}, {transform_indices = @transform_3, window_bounds = array<i64: 128, 256>}, {transform_indices = @transform_4, window_bounds = array<i64: 8, 256>}, {transform_indices = @transform_5, window_bounds = array<i64: 8, 256>}]} {
    %c0 = arith.constant 0 : index
    %c0_0 = arith.constant 0 : index
    %0 = vector.load %arg1[%c0, %c0_0] : memref<128x512xf32, #tpu.memory_space<vmem>>, vector<128x512xf32>
    %c0_1 = arith.constant 0 : index
    %c0_2 = arith.constant 0 : index
    %1 = vector.load %arg2[%c0_1, %c0_2] : memref<512x256xf32, #tpu.memory_space<vmem>>, vector<512x256xf32>
    %cst = arith.constant dense<0.000000e+00> : vector<128x256xf32>
    %2 = tpu.matmul %0, %1, %cst {dimension_numbers = #tpu.dot_dimension_numbers<[1], [0], [0], [1], [0, 0, 1, 1], [], []>} : vector<128x512xf32>, vector<512x256xf32>, vector<128x256xf32> -> vector<128x256xf32>
    %c0_3 = arith.constant 0 : index
    %c0_4 = arith.constant 0 : index
    %3 = vector.load %arg3[%c0_3, %c0_4] : memref<1x256xf32, #tpu.memory_space<vmem>>, vector<1x256xf32>
    %4 = vector.broadcast %3 : vector<1x256xf32> to vector<128x256xf32>
    %5 = arith.addf %2, %4 : vector<128x256xf32>
    %c0_5 = arith.constant 0 : index
    %c0_6 = arith.constant 0 : index
    %6 = vector.load %arg4[%c0_5, %c0_6] : memref<128x256xf32, #tpu.memory_space<vmem>>, vector<128x256xf32>
    tpu.vector_store %arg4[%c0_5, %c0_6], %5 {strides = array<i32>} : memref<128x256xf32, #tpu.memory_space<vmem>>, vector<128x256xf32>,
    %cst_7 = arith.constant dense<0.000000e+00> : vector<256xf32>
    %7 = vector.multi_reduction <add>, %5, %cst_7 [0] : vector<128x256xf32> to vector<256xf32>
    %8 = vector.shape_cast %7 : vector<256xf32> to vector<1x256xf32>
    %9 = vector.shape_cast %8 : vector<1x256xf32> to vector<1x256xf32>
    %10 = vector.broadcast %9 : vector<1x256xf32> to vector<8x256xf32>
    %c0_8 = arith.constant 0 : index
    %c0_9 = arith.constant 0 : index
    %11 = vector.load %arg5[%c0_8, %c0_9] : memref<8x256xf32, #tpu.memory_space<vmem>>, vector<8x256xf32>
    tpu.vector_store %arg5[%c0_8, %c0_9], %10 {strides = array<i32>} : memref<8x256xf32, #tpu.memory_space<vmem>>, vector<8x256xf32>,
    %12 = arith.mulf %5, %5 : vector<128x256xf32>
    %cst_10 = arith.constant dense<0.000000e+00> : vector<256xf32>
    %13 = vector.multi_reduction <add>, %12, %cst_10 [0] : vector<128x256xf32> to vector<256xf32>
    %14 = vector.shape_cast %13 : vector<256xf32> to vector<1x256xf32>
    %15 = vector.shape_cast %14 : vector<1x256xf32> to vector<1x256xf32>
    %16 = vector.broadcast %15 : vector<1x256xf32> to vector<8x256xf32>
    %c0_11 = arith.constant 0 : index
    %c0_12 = arith.constant 0 : index
    %17 = vector.load %arg6[%c0_11, %c0_12] : memref<8x256xf32, #tpu.memory_space<vmem>>, vector<8x256xf32>
    tpu.vector_store %arg6[%c0_11, %c0_12], %16 {strides = array<i32>} : memref<8x256xf32, #tpu.memory_space<vmem>>, vector<8x256xf32>,
    return
  }
  func.func @transform_0(%arg0: i32) -> (i32, i32) {
    %c0_i32 = arith.constant 0 : i32
    %c0_i32_0 = arith.constant 0 : i32
    return %arg0, %c0_i32 : i32, i32
  }
  func.func @transform_1(%arg0: i32) -> (i32, i32) {
    %c0_i32 = arith.constant 0 : i32
    %c0_i32_0 = arith.constant 0 : i32
    %c0_i32_1 = arith.constant 0 : i32
    return %c0_i32, %c0_i32_0 : i32, i32
  }
  func.func @transform_2(%arg0: i32) -> (i32, i32) {
    %c0_i32 = arith.constant 0 : i32
    %c0_i32_0 = arith.constant 0 : i32
    %c0_i32_1 = arith.constant 0 : i32
    return %c0_i32, %c0_i32_0 : i32, i32
  }
  func.func @transform_3(%arg0: i32) -> (i32, i32) {
    %c0_i32 = arith.constant 0 : i32
    %c0_i32_0 = arith.constant 0 : i32
    return %arg0, %c0_i32 : i32, i32
  }
  func.func @transform_4(%arg0: i32) -> (i32, i32) {
    %c0_i32 = arith.constant 0 : i32
    %c0_i32_0 = arith.constant 0 : i32
    return %arg0, %c0_i32 : i32, i32
  }
  func.func @transform_5(%arg0: i32) -> (i32, i32) {
    %c0_i32 = arith.constant 0 : i32
    %c0_i32_0 = arith.constant 0 : i32
    return %arg0, %c0_i32 : i32, i32
  }
}

module attributes {stable_mosaic.version = 11 : i64} {
  func.func @_bn_relu_kernel(%arg0: i32, %arg1: memref<128x256xf32, #tpu.memory_space<vmem>>, %arg2: memref<1x256xf32, #tpu.memory_space<vmem>>, %arg3: memref<1x256xf32, #tpu.memory_space<vmem>>, %arg4: memref<128x256xf32, #tpu.memory_space<vmem>>) attributes {dimension_semantics = [#tpu.dimension_semantics<parallel>], iteration_bounds = array<i64: 1>, scalar_prefetch = 0 : i64, scratch_operands = 0 : i64, tpu.core_type = #tpu.core_type<tc>, window_params = [{transform_indices = @transform_0, window_bounds = array<i64: 128, 256>}, {pipeline_mode = #tpu.pipeline_mode<synchronous>, transform_indices = @transform_1, window_bounds = array<i64: 1, 256>}, {pipeline_mode = #tpu.pipeline_mode<synchronous>, transform_indices = @transform_2, window_bounds = array<i64: 1, 256>}, {transform_indices = @transform_3, window_bounds = array<i64: 128, 256>}]} {
    %c0 = arith.constant 0 : index
    %c0_0 = arith.constant 0 : index
    %0 = vector.load %arg1[%c0, %c0_0] : memref<128x256xf32, #tpu.memory_space<vmem>>, vector<128x256xf32>
    %c0_1 = arith.constant 0 : index
    %c0_2 = arith.constant 0 : index
    %1 = vector.load %arg2[%c0_1, %c0_2] : memref<1x256xf32, #tpu.memory_space<vmem>>, vector<1x256xf32>
    %2 = vector.broadcast %1 : vector<1x256xf32> to vector<128x256xf32>
    %3 = arith.mulf %0, %2 : vector<128x256xf32>
    %c0_3 = arith.constant 0 : index
    %c0_4 = arith.constant 0 : index
    %4 = vector.load %arg3[%c0_3, %c0_4] : memref<1x256xf32, #tpu.memory_space<vmem>>, vector<1x256xf32>
    %5 = vector.broadcast %4 : vector<1x256xf32> to vector<128x256xf32>
    %6 = arith.addf %3, %5 : vector<128x256xf32>
    %cst = arith.constant 0.000000e+00 : f32
    %7 = vector.broadcast %cst : f32 to vector<128x256xf32>
    %8 = arith.maximumf %6, %7 : vector<128x256xf32>
    %c0_5 = arith.constant 0 : index
    %c0_6 = arith.constant 0 : index
    %9 = vector.load %arg4[%c0_5, %c0_6] : memref<128x256xf32, #tpu.memory_space<vmem>>, vector<128x256xf32>
    tpu.vector_store %arg4[%c0_5, %c0_6], %8 {strides = array<i32>} : memref<128x256xf32, #tpu.memory_space<vmem>>, vector<128x256xf32>,
    return
  }
  func.func @transform_0(%arg0: i32) -> (i32, i32) {
    %c0_i32 = arith.constant 0 : i32
    %c0_i32_0 = arith.constant 0 : i32
    return %arg0, %c0_i32 : i32, i32
  }
  func.func @transform_1(%arg0: i32) -> (i32, i32) {
    %c0_i32 = arith.constant 0 : i32
    %c0_i32_0 = arith.constant 0 : i32
    %c0_i32_1 = arith.constant 0 : i32
    return %c0_i32, %c0_i32_0 : i32, i32
  }
  func.func @transform_2(%arg0: i32) -> (i32, i32) {
    %c0_i32 = arith.constant 0 : i32
    %c0_i32_0 = arith.constant 0 : i32
    %c0_i32_1 = arith.constant 0 : i32
    return %c0_i32, %c0_i32_0 : i32, i32
  }
  func.func @transform_3(%arg0: i32) -> (i32, i32) {
    %c0_i32 = arith.constant 0 : i32
    %c0_i32_0 = arith.constant 0 : i32
    return %arg0, %c0_i32 : i32, i32
  }
}

module attributes {stable_mosaic.version = 11 : i64} {
  func.func @_deconv_mm_stats_kernel(%arg0: i32, %arg1: memref<512x256xf32, #tpu.memory_space<vmem>>, %arg2: memref<256x128xf32, #tpu.memory_space<vmem>>, %arg3: memref<1x128xf32, #tpu.memory_space<vmem>>, %arg4: memref<512x128xf32, #tpu.memory_space<vmem>>, %arg5: memref<8x128xf32, #tpu.memory_space<vmem>>, %arg6: memref<8x128xf32, #tpu.memory_space<vmem>>) attributes {dimension_semantics = [#tpu.dimension_semantics<parallel>], iteration_bounds = array<i64: 1>, scalar_prefetch = 0 : i64, scratch_operands = 0 : i64, tpu.core_type = #tpu.core_type<tc>, window_params = [{transform_indices = @transform_0, window_bounds = array<i64: 512, 256>}, {pipeline_mode = #tpu.pipeline_mode<synchronous>, transform_indices = @transform_1, window_bounds = array<i64: 256, 128>}, {pipeline_mode = #tpu.pipeline_mode<synchronous>, transform_indices = @transform_2, window_bounds = array<i64: 1, 128>}, {transform_indices = @transform_3, window_bounds = array<i64: 512, 128>}, {transform_indices = @transform_4, window_bounds = array<i64: 8, 128>}, {transform_indices = @transform_5, window_bounds = array<i64: 8, 128>}]} {
    %c0 = arith.constant 0 : index
    %c0_0 = arith.constant 0 : index
    %0 = vector.load %arg1[%c0, %c0_0] : memref<512x256xf32, #tpu.memory_space<vmem>>, vector<512x256xf32>
    %c0_1 = arith.constant 0 : index
    %c0_2 = arith.constant 0 : index
    %1 = vector.load %arg2[%c0_1, %c0_2] : memref<256x128xf32, #tpu.memory_space<vmem>>, vector<256x128xf32>
    %cst = arith.constant dense<0.000000e+00> : vector<512x128xf32>
    %2 = tpu.matmul %0, %1, %cst {dimension_numbers = #tpu.dot_dimension_numbers<[1], [0], [0], [1], [0, 0, 1, 1], [], []>} : vector<512x256xf32>, vector<256x128xf32>, vector<512x128xf32> -> vector<512x128xf32>
    %c0_3 = arith.constant 0 : index
    %c0_4 = arith.constant 0 : index
    %3 = vector.load %arg3[%c0_3, %c0_4] : memref<1x128xf32, #tpu.memory_space<vmem>>, vector<1x128xf32>
    %4 = vector.broadcast %3 : vector<1x128xf32> to vector<512x128xf32>
    %5 = arith.addf %2, %4 : vector<512x128xf32>
    %c0_5 = arith.constant 0 : index
    %c0_6 = arith.constant 0 : index
    %6 = vector.load %arg4[%c0_5, %c0_6] : memref<512x128xf32, #tpu.memory_space<vmem>>, vector<512x128xf32>
    tpu.vector_store %arg4[%c0_5, %c0_6], %5 {strides = array<i32>} : memref<512x128xf32, #tpu.memory_space<vmem>>, vector<512x128xf32>,
    %cst_7 = arith.constant dense<0.000000e+00> : vector<128xf32>
    %7 = vector.multi_reduction <add>, %5, %cst_7 [0] : vector<512x128xf32> to vector<128xf32>
    %8 = vector.shape_cast %7 : vector<128xf32> to vector<1x128xf32>
    %9 = vector.shape_cast %8 : vector<1x128xf32> to vector<1x128xf32>
    %10 = vector.broadcast %9 : vector<1x128xf32> to vector<8x128xf32>
    %c0_8 = arith.constant 0 : index
    %c0_9 = arith.constant 0 : index
    %11 = vector.load %arg5[%c0_8, %c0_9] : memref<8x128xf32, #tpu.memory_space<vmem>>, vector<8x128xf32>
    tpu.vector_store %arg5[%c0_8, %c0_9], %10 {strides = array<i32>} : memref<8x128xf32, #tpu.memory_space<vmem>>, vector<8x128xf32>,
    %12 = arith.mulf %5, %5 : vector<512x128xf32>
    %cst_10 = arith.constant dense<0.000000e+00> : vector<128xf32>
    %13 = vector.multi_reduction <add>, %12, %cst_10 [0] : vector<512x128xf32> to vector<128xf32>
    %14 = vector.shape_cast %13 : vector<128xf32> to vector<1x128xf32>
    %15 = vector.shape_cast %14 : vector<1x128xf32> to vector<1x128xf32>
    %16 = vector.broadcast %15 : vector<1x128xf32> to vector<8x128xf32>
    %c0_11 = arith.constant 0 : index
    %c0_12 = arith.constant 0 : index
    %17 = vector.load %arg6[%c0_11, %c0_12] : memref<8x128xf32, #tpu.memory_space<vmem>>, vector<8x128xf32>
    tpu.vector_store %arg6[%c0_11, %c0_12], %16 {strides = array<i32>} : memref<8x128xf32, #tpu.memory_space<vmem>>, vector<8x128xf32>,
    return
  }
  func.func @transform_0(%arg0: i32) -> (i32, i32) {
    %c0_i32 = arith.constant 0 : i32
    %c0_i32_0 = arith.constant 0 : i32
    return %arg0, %c0_i32 : i32, i32
  }
  func.func @transform_1(%arg0: i32) -> (i32, i32) {
    %c0_i32 = arith.constant 0 : i32
    %c0_i32_0 = arith.constant 0 : i32
    %c0_i32_1 = arith.constant 0 : i32
    return %c0_i32, %c0_i32_0 : i32, i32
  }
  func.func @transform_2(%arg0: i32) -> (i32, i32) {
    %c0_i32 = arith.constant 0 : i32
    %c0_i32_0 = arith.constant 0 : i32
    %c0_i32_1 = arith.constant 0 : i32
    return %c0_i32, %c0_i32_0 : i32, i32
  }
  func.func @transform_3(%arg0: i32) -> (i32, i32) {
    %c0_i32 = arith.constant 0 : i32
    %c0_i32_0 = arith.constant 0 : i32
    return %arg0, %c0_i32 : i32, i32
  }
  func.func @transform_4(%arg0: i32) -> (i32, i32) {
    %c0_i32 = arith.constant 0 : i32
    %c0_i32_0 = arith.constant 0 : i32
    return %arg0, %c0_i32 : i32, i32
  }
  func.func @transform_5(%arg0: i32) -> (i32, i32) {
    %c0_i32 = arith.constant 0 : i32
    %c0_i32_0 = arith.constant 0 : i32
    return %arg0, %c0_i32 : i32, i32
  }
}

</mosaic_0001>

<llo_original>
// kernel: decoder_forward.6
$region0: #{decoder_forward.6}
  #allocation0 [shape = 'u32[]', space=smem, size = 0x4, offset = 0x4, fixed_abs, tag = 'smem constant byte address 0x4 - core index']
  #allocation1 [shape = 'u32[72,128]{1,0:T(1,128)}', space=vmem, size = 0x9000, scoped, tag = 'internal scratch']
  %s0 = inlined_call_operand.vmem [shape: f32[8,32], index: 0, kind: input, shape index: {}]
  %s1 = inlined_call_operand.vmem [shape: f32[32,4096], index: 1, kind: input, shape index: {}]
  %s2 = inlined_call_operand.vmem [shape: f32[1,4096], index: 2, kind: input, shape index: {}]
  %s3 = inlined_call_operand.vmem [shape: f32[8,4096], index: 3, kind: output, shape index: {}]
  %s4 = sld [smem:[#allocation0]]
  $region68: #{decoder_forward.6} parent=0
    _
  %s6 = ssub.s32 1, %s4
  %s7 = scalar_select 0, %s6, %s4
  $region1: #{decoder_forward.6} parent=0
    #allocation2 [shape = 'u8[131072]{0}', space=vmem, size = 0x20000, scoped, tag = 'input window, operand 1']
    loop: start=0, step=1, limit=10
    $region2: #{decoder_forward.6} parent=1 // loop_pre_header
      _
    $region3: #{decoder_forward.6} parent=1 // loop_header
      %s9 = sphi 0, %s13
      %p10 = scmp.ge.s32.totalorder %s9, 10
      %s17 = sphi 0, %s17
      %s19 = sphi 0, %s17
      %s20 = sphi 0, %s19
      %s34 = sphi 0, %s20
      %s40 = sphi 0, %s42
      %s43 = sphi 0, %s40
      %s44 = sphi 0, %s43
      %s60 = sphi 0, %s44
      %s66 = sphi 0, %s68
      %s69 = sphi 0, %s66
      %s70 = sphi 0, %s69
      %s86 = sphi 0, %s70
      %s92 = sphi 0, %s94
      %s95 = sphi 0, %s92
      %s96 = sphi 0, %s95
      %s112 = sphi 0, %s96
    $region4: #{decoder_forward.6} parent=1 // loop_header_branch
      %12 = sbr.rel (%p10) target = $region8
    $region5: #{decoder_forward.6} parent=1 // loop_body
      %s14 = ssub.s32 %s9, 1
      %s15 = ssub.s32 %s9, 2
      %s16 = sadd.s32 %s9, 1
      %s18 = sadd.s32 %s17, 1
      %p21 = scmp.eq.s32.totalorder %s9, 7
      %p22 = scmp.ne.s32.totalorder %s17, %s19
      %p23 = scmp.eq.s32.totalorder %s9, 0
      %p24 = por %p22, %p23
      %p25 = scmp.ne.s32.totalorder %s17, %s19
      %p26 = scmp.eq.s32.totalorder %s14, 7
      %p27 = por %p25, %p26
      %p28 = scmp.ne.s32.totalorder %s19, %s20
      %p29 = scmp.eq.s32.totalorder %s14, 0
      %p30 = por %p28, %p29
      %p31 = scmp.ne.s32.totalorder %s19, %s20
      %p32 = scmp.eq.s32.totalorder %s15, 7
      %p33 = por %p31, %p32
      %p35 = scmp.ne.s32.totalorder %s20, %s34
      %p36 = scmp.eq.s32.totalorder %s15, 0
      %p37 = por %p35, %p36
      %s38 = ssub.s32 %s9, %s16
      %p39 = scmp.eq.s32.totalorder %s38, 0
      %s41 = sadd.s32 %s40, 1
      %s42 = scalar_select %p39, %s40, %s41
      %p45 = pneg %p39
      %p46 = scmp.eq.s32.totalorder %s9, 7
      %p47 = por %p45, %p46
      %p48 = scmp.ne.s32.totalorder %s40, %s43
      %p49 = scmp.eq.s32.totalorder %s9, 0
      %p50 = por %p48, %p49
      %p51 = scmp.ne.s32.totalorder %s40, %s43
      %p52 = scmp.eq.s32.totalorder %s14, 7
      %p53 = por %p51, %p52
      %p54 = scmp.ne.s32.totalorder %s43, %s44
      %p55 = scmp.eq.s32.totalorder %s14, 0
      %p56 = por %p54, %p55
      %p57 = scmp.ne.s32.totalorder %s43, %s44
      %p58 = scmp.eq.s32.totalorder %s15, 7
      %p59 = por %p57, %p58
      %p61 = scmp.ne.s32.totalorder %s44, %s60
      %p62 = scmp.eq.s32.totalorder %s15, 0
      %p63 = por %p61, %p62
      %s64 = ssub.s32 %s9, %s16
      %p65 = scmp.eq.s32.totalorder %s64, 0
      %s67 = sadd.s32 %s66, 1
      %s68 = scalar_select %p65, %s66, %s67
      %p71 = pneg %p65
      %p72 = scmp.eq.s32.totalorder %s9, 7
      %p73 = por %p71, %p72
      %p74 = scmp.ne.s32.totalorder %s66, %s69
      %p75 = scmp.eq.s32.totalorder %s9, 0
      %p76 = por %p74, %p75
      %p77 = scmp.ne.s32.totalorder %s66, %s69
      %p78 = scmp.eq.s32.totalorder %s14, 7
      %p79 = por %p77, %p78
      %p80 = scmp.ne.s32.totalorder %s69, %s70
      %p81 = scmp.eq.s32.totalorder %s14, 0
      %p82 = por %p80, %p81
      %p83 = scmp.ne.s32.totalorder %s69, %s70
      %p84 = scmp.eq.s32.totalorder %s15, 7
      %p85 = por %p83, %p84
      %p87 = scmp.ne.s32.totalorder %s70, %s86
      %p88 = scmp.eq.s32.totalorder %s15, 0
      %p89 = por %p87, %p88
      %s90 = ssub.s32 %s9, %s16
      %p91 = scmp.eq.s32.totalorder %s90, 0
      %s93 = sadd.s32 %s92, 1
      %s94 = scalar_select %p91, %s92, %s93
      %p97 = pneg %p91
      %p98 = scmp.eq.s32.totalorder %s9, 7
      %p99 = por %p97, %p98
      %p100 = scmp.ne.s32.totalorder %s92, %s95
      %p101 = scmp.eq.s32.totalorder %s9, 0
      %p102 = por %p100, %p101
      %p103 = scmp.ne.s32.totalorder %s92, %s95
      %p104 = scmp.eq.s32.totalorder %s14, 7
      %p105 = por %p103, %p104
      %p106 = scmp.ne.s32.totalorder %s95, %s96
      %p107 = scmp.eq.s32.totalorder %s14, 0
      %p108 = por %p106, %p107
      %p109 = scmp.ne.s32.totalorder %s95, %s96
      %p110 = scmp.eq.s32.totalorder %s15, 7
      %p111 = por %p109, %p110
      %p113 = scmp.ne.s32.totalorder %s96, %s112
      %p114 = scmp.eq.s32.totalorder %s15, 0
      %p115 = por %p113, %p114
      %p116 = scmp.le.s32.totalorder 1, %s9
      %p117 = scmp.lt.s32.totalorder %s9, 9
      %p118 = pnand %p116, %p117
      %p119 = pneg %p118
      // Predicated region
      $region9: #{decoder_forward.6} parent=5 // pred_check
        _
      $region10: #{decoder_forward.6} parent=5 // pred_check_branch
        %121 = sbr.rel (%p118) target = $region12
      $region11: #{decoder_forward.6} parent=5 // pred_region
        %s122 = ssub.s32 %s9, 1
        // Predicated region
        $region13: #{decoder_forward.6} parent=11 // pred_check
          %p123 = pneg %p30
        $region14: #{decoder_forward.6} parent=11 // pred_check_branch
          %125 = sbr.rel (%p123) target = $region16
        $region15: #{decoder_forward.6} parent=11 // pred_region
          _
        $region16: #{decoder_forward.6} parent=11 // pred_fallthru
          _
      $region12: #{decoder_forward.6} parent=5 // pred_fallthru
        _
      %p126 = scmp.lt.s32.totalorder %s9, 8
      // Predicated region
      $region17: #{decoder_forward.6} parent=5 // pred_check
        %p127 = pneg %p126
      $region18: #{decoder_forward.6} parent=5 // pred_check_branch
        %129 = sbr.rel (%p127) target = $region20
      $region19: #{decoder_forward.6} parent=5 // pred_region
        // Predicated region
        $region21: #{decoder_forward.6} parent=19 // pred_check
          %p130 = pneg %p50
        $region22: #{decoder_forward.6} parent=19 // pred_check_branch
          %132 = sbr.rel (%p130) target = $region24
        $region23: #{decoder_forward.6} parent=19 // pred_region
          %s133 = sand.u32 %s40, 1
          %s134 = sand.u32 %s40, 1
          %s135 = smul.addr %s134, 128
          %s136 = scalar_lea.vmem [#allocation2], %s135
          %s137 = smul.u32 4, %s9
          %s138 = smul.addr %s137, 8
          %s139 = scalar_lea.vmem %s1, %s138
          // Predicated region
          $region25: #{decoder_forward.6} parent=23 // pred_check
            _
          $region26: #{decoder_forward.6} parent=23 // pred_check_branch
            %141 = sbr.rel (0) target = $region28
          $region27: #{decoder_forward.6} parent=23 // pred_region
            // Predicated region
            $region29: #{decoder_forward.6} parent=27 // pred_check
              _
            $region30: #{decoder_forward.6} parent=27 // pred_check_branch
              %143 = sbr.rel (0) target = $region32
            $region31: #{decoder_forward.6} parent=27 // pred_region
              loop: start=0, step=1, limit=1
              $region33: #{decoder_forward.6} parent=31 // loop_pre_header
                _
              $region34: #{decoder_forward.6} parent=31 // loop_header
                %s145 = sphi 0, %s149
                %p146 = scmp.ge.s32.totalorder %s145, 1
                %s150 = sphi %s139, %s139
                %s151 = sphi %s136, %s136
              $region35: #{decoder_forward.6} parent=31 // loop_header_branch
                %148 = sbr.rel (%p146) target = $region39
              $region36: #{decoder_forward.6} parent=31 // loop_body
                %v152 = vld [vmem:[%s150] sm:$0xff]
                %153 = vst [vmem:[%s151] sm:$0xff] %v152
                %v154 = vld [vmem:[%s150 + $0x8] sm:$0xff]
                %155 = vst [vmem:[%s151 + $0x8] sm:$0xff] %v154
                %v156 = vld [vmem:[%s150 + $0x10] sm:$0xff]
                %157 = vst [vmem:[%s151 + $0x10] sm:$0xff] %v156
                %v158 = vld [vmem:[%s150 + $0x18] sm:$0xff]
                %159 = vst [vmem:[%s151 + $0x18] sm:$0xff] %v158
                %v160 = vld [vmem:[%s150 + $0x100] sm:$0xff]
                %161 = vst [vmem:[%s151 + $0x20] sm:$0xff] %v160
                %v162 = vld [vmem:[%s150 + $0x108] sm:$0xff]
                %163 = vst [vmem:[%s151 + $0x28] sm:$0xff] %v162
                %v164 = vld [vmem:[%s150 + $0x110] sm:$0xff]
                %165 = vst [vmem:[%s151 + $0x30] sm:$0xff] %v164
                %v166 = vld [vmem:[%s150 + $0x118] sm:$0xff]
                %167 = vst [vmem:[%s151 + $0x38] sm:$0xff] %v166
                %v168 = vld [vmem:[%s150 + $0x200] sm:$0xff]
                %169 = vst [vmem:[%s151 + $0x40] sm:$0xff] %v168
                %v170 = vld [vmem:[%s150 + $0x208] sm:$0xff]
                %171 = vst [vmem:[%s151 + $0x48] sm:$0xff] %v170
                %v172 = vld [vmem:[%s150 + $0x210] sm:$0xff]
                %173 = vst [vmem:[%s151 + $0x50] sm:$0xff] %v172
                %v174 = vld [vmem:[%s150 + $0x218] sm:$0xff]
                %175 = vst [vmem:[%s151 + $0x58] sm:$0xff] %v174
                %v176 = vld [vmem:[%s150 + $0x300] sm:$0xff]
                %177 = vst [vmem:[%s151 + $0x60] sm:$0xff] %v176
                %v178 = vld [vmem:[%s150 + $0x308] sm:$0xff]
                %179 = vst [vmem:[%s151 + $0x68] sm:$0xff] %v178
                %v180 = vld [vmem:[%s150 + $0x310] sm:$0xff]
                %181 = vst [vmem:[%s151 + $0x70] sm:$0xff] %v180
                %v182 = vld [vmem:[%s150 + $0x318] sm:$0xff]
                %183 = vst [vmem:[%s151 + $0x78] sm:$0xff] %v182
              $region37: #{decoder_forward.6} parent=31 // loop_footer
                %s149 = sadd.s32 1, %s145
              $region38: #{decoder_forward.6} parent=31 // loop_footer_branch
                %144 = sbr.rel target = $region34
              $region39: #{decoder_forward.6} parent=31 // loop_exit
                _
            $region32: #{decoder_forward.6} parent=27 // pred_fallthru
              _
            // Predicated region
            $region40: #{decoder_forward.6} parent=27 // pred_check
              _
            $region41: #{decoder_forward.6} parent=27 // pred_check_branch
              %185 = sbr.rel target = $region43
            $region42: #{decoder_forward.6} parent=27 // pred_region
              _
            $region43: #{decoder_forward.6} parent=27 // pred_fallthru
              _
          $region28: #{decoder_forward.6} parent=23 // pred_fallthru
            _
          %186 = vnop
        $region24: #{decoder_forward.6} parent=19 // pred_fallthru
          _
        // Predicated region
        $region44: #{decoder_forward.6} parent=19 // pred_check
          %p187 = pneg %p76
        $region45: #{decoder_forward.6} parent=19 // pred_check_branch
          %189 = sbr.rel (%p187) target = $region47
        $region46: #{decoder_forward.6} parent=19 // pred_region
          %s190 = smul.u32 4, %s9
          %p191 = scmp.lt.s32.totalorder %s190, 31
          %s192 = scalar_select %p191, %s190, 31
          %s193 = scalar_lea.vmem %s2, %s192
          %s194 = smul.u32 4, %s9
        $region47: #{decoder_forward.6} parent=19 // pred_fallthru
          _
      $region20: #{decoder_forward.6} parent=5 // pred_fallthru
        _
      %p195 = scmp.le.s32.totalorder 1, %s9
      %p196 = scmp.lt.s32.totalorder %s9, 9
      %p197 = pnand %p195, %p196
      %p198 = pneg %p197
      // Predicated region
      $region48: #{decoder_forward.6} parent=5 // pred_check
        _
      $region49: #{decoder_forward.6} parent=5 // pred_check_branch
        %200 = sbr.rel (%p197) target = $region51
      $region50: #{decoder_forward.6} parent=5 // pred_region
        %s201 = ssub.s32 %s9, 1
        %s202 = sand.u32 %s43, 1
        %s203 = sand.u32 %s43, 1
        %s204 = smul.addr %s203, 128
        %s205 = scalar_lea.vmem [#allocation2], %s204
        // Predicated region
        $region52: #{decoder_forward.6} parent=50 // pred_check
          %p206 = pneg %p56
        $region53: #{decoder_forward.6} parent=50 // pred_check_branch
          %208 = sbr.rel (%p206) target = $region55
        $region54: #{decoder_forward.6} parent=50 // pred_region
          _
        $region55: #{decoder_forward.6} parent=50 // pred_fallthru
          _
        %p209 = pneg %p30
        %p210 = pneg %p27
        %s211 = sand.u32 %s43, 1
        %s212 = sand.u32 %s43, 1
        %s213 = smul.addr %s212, 128
        %s214 = scalar_lea.vmem [#allocation2], %s213
        %p215 = pneg %p56
        %p216 = pneg %p53
        %s217 = smul.u32 4, %s14
        %p218 = scmp.lt.s32.totalorder %s217, 31
        %s219 = scalar_select %p218, %s217, 31
        %s220 = scalar_lea.vmem %s2, %s219
        %p221 = pneg %p82
        %p222 = pneg %p79
        %p223 = pneg %p108
        %p224 = pneg %p105
        %s225 = smul.u32 4, %s14
        %p226 = scmp.lt.s32.totalorder %s225, 31
        %s227 = scalar_select %p226, %s225, 31
        %s228 = smul.addr %s227, 8
        %s229 = scalar_lea.vmem %s3, %s228
        %s230 = smul.u32 4, %s14
        %s231 = smul.u32 4, %s14
        %p232 = scmp.lt.s32.totalorder %s231, 31
        %s233 = scalar_select %p232, %s231, 31
        %s234 = scalar_lea.vmem %s2, %s233
        %s235 = smul.u32 4, %s14
        %s236 = smul.u32 4, %s14
        %p237 = scmp.lt.s32.totalorder %s236, 31
        %s238 = scalar_select %p237, %s236, 31
        %s239 = smul.addr %s238, 8
        %s240 = scalar_lea.vmem %s3, %s239
        %s241 = smul.u32 4, %s14
        %v242 = vld [vmem:[%s0] sm:$0xff]
        %v243 = vld [vmem:[%s205] sm:$0xff]
        %v244 = vld [vmem:[%s205 + $0x8] sm:$0xff]
        %v245 = vld [vmem:[%s205 + $0x10] sm:$0xff]
        %v246 = vld [vmem:[%s205 + $0x18] sm:$0xff]
        %v247 = vld [vmem:[%s205 + $0x20] sm:$0xff]
        %v248 = vld [vmem:[%s205 + $0x28] sm:$0xff]
        %v249 = vld [vmem:[%s205 + $0x30] sm:$0xff]
        %v250 = vld [vmem:[%s205 + $0x38] sm:$0xff]
        %v251 = vld [vmem:[%s205 + $0x40] sm:$0xff]
        %v252 = vld [vmem:[%s205 + $0x48] sm:$0xff]
        %v253 = vld [vmem:[%s205 + $0x50] sm:$0xff]
        %v254 = vld [vmem:[%s205 + $0x58] sm:$0xff]
        %v255 = vld [vmem:[%s205 + $0x60] sm:$0xff]
        %v256 = vld [vmem:[%s205 + $0x68] sm:$0xff]
        %v257 = vld [vmem:[%s205 + $0x70] sm:$0xff]
        %v258 = vld [vmem:[%s205 + $0x78] sm:$0xff]
        %v259 = vld [vmem:[%s234] sm:$0xf]
        %v261 = vperm.slane %v259, 0
        %v262 = vperm.slane %v259, 1
        %v263 = vperm.slane %v259, 2
        %v264 = vperm.slane %v259, 3
        %vm269 = vcmask 261120
        %v271 = vsel %vm269, %v242, 0
        %273 = vmatpush.msra.mxu0 0.0
        %274 = vmatpush.msra.mxu0 0.0
        %275 = vmatpush.msra.mxu0 0.0
        %276 = vmatpush.msra.mxu0 0.0
        %277 = vmatpush.msra.mxu0 0.0
        %278 = vmatpush.msra.mxu0 0.0
        %279 = vmatpush.msra.mxu0 0.0
        %280 = vmatpush.msra.mxu0 0.0
        %281 = vmatpush.msra.mxu0 0.0
        %282 = vmatpush.msra.mxu0 0.0
        %283 = vmatpush.msra.mxu0 0.0
        %284 = vmatpush.msra.mxu0 0.0
        %285 = vmatpush.msra.mxu0 %v255
        %286 = vmatpush.msra.mxu0 %v251
        %287 = vmatpush.msra.mxu0 %v247
        %288 = vmatpush.msra.mxu0 %v243
        %289 = vmatmul.f32.gmra.mxu0 %v271
        %v290 = vpop.f32.mrf.mxu0
        %v291 = vadd.f32 %v261, %v290
        %292 = vdwg.mxu0
        %293 = vmatpush.msra.mxu0 0.0
        %294 = vmatpush.msra.mxu0 0.0
        %295 = vmatpush.msra.mxu0 0.0
        %296 = vmatpush.msra.mxu0 0.0
        %297 = vmatpush.msra.mxu0 0.0
        %298 = vmatpush.msra.mxu0 0.0
        %299 = vmatpush.msra.mxu0 0.0
        %300 = vmatpush.msra.mxu0 0.0
        %301 = vmatpush.msra.mxu0 0.0
        %302 = vmatpush.msra.mxu0 0.0
        %303 = vmatpush.msra.mxu0 0.0
        %304 = vmatpush.msra.mxu0 0.0
        %305 = vmatpush.msra.mxu0 %v256
        %306 = vmatpush.msra.mxu0 %v252
        %307 = vmatpush.msra.mxu0 %v248
        %308 = vmatpush.msra.mxu0 %v244
        %309 = vmatmul.f32.gmra.mxu0 %v271
        %v310 = vpop.f32.mrf.mxu0
        %v311 = vadd.f32 %v262, %v310
        %312 = vdwg.mxu0
        %313 = vmatpush.msra.mxu0 0.0
        %314 = vmatpush.msra.mxu0 0.0
        %315 = vmatpush.msra.mxu0 0.0
        %316 = vmatpush.msra.mxu0 0.0
        %317 = vmatpush.msra.mxu0 0.0
        %318 = vmatpush.msra.mxu0 0.0
        %319 = vmatpush.msra.mxu0 0.0
        %320 = vmatpush.msra.mxu0 0.0
        %321 = vmatpush.msra.mxu0 0.0
        %322 = vmatpush.msra.mxu0 0.0
        %323 = vmatpush.msra.mxu0 0.0
        %324 = vmatpush.msra.mxu0 0.0
        %325 = vmatpush.msra.mxu0 %v257
        %326 = vmatpush.msra.mxu0 %v253
        %327 = vmatpush.msra.mxu0 %v249
        %328 = vmatpush.msra.mxu0 %v245
        %329 = vmatmul.f32.gmra.mxu0 %v271
        %v330 = vpop.f32.mrf.mxu0
        %v331 = vadd.f32 %v263, %v330
        %332 = vdwg.mxu0
        %333 = vmatpush.msra.mxu0 0.0
        %334 = vmatpush.msra.mxu0 0.0
        %335 = vmatpush.msra.mxu0 0.0
        %336 = vmatpush.msra.mxu0 0.0
        %337 = vmatpush.msra.mxu0 0.0
        %338 = vmatpush.msra.mxu0 0.0
        %339 = vmatpush.msra.mxu0 0.0
        %340 = vmatpush.msra.mxu0 0.0
        %341 = vmatpush.msra.mxu0 0.0
        %342 = vmatpush.msra.mxu0 0.0
        %343 = vmatpush.msra.mxu0 0.0
        %344 = vmatpush.msra.mxu0 0.0
        %345 = vmatpush.msra.mxu0 %v258
        %346 = vmatpush.msra.mxu0 %v254
        %347 = vmatpush.msra.mxu0 %v250
        %348 = vmatpush.msra.mxu0 %v246
        %349 = vmatmul.f32.gmra.mxu0 %v271
        %v350 = vpop.f32.mrf.mxu0
        %v351 = vadd.f32 %v264, %v350
        %352 = vdwg.mxu0
        %353 = vst [vmem:[%s240] sm:$0xff] %v291
        %354 = vst [vmem:[%s240 + $0x8] sm:$0xff] %v311
        %355 = vst [vmem:[%s240 + $0x10] sm:$0xff] %v331
        %356 = vst [vmem:[%s240 + $0x18] sm:$0xff] %v351
        %s357 = smul.u32 4, %s14
        %p358 = scmp.lt.s32.totalorder %s357, 31
        %s359 = scalar_select %p358, %s357, 31
        %s360 = smul.addr %s359, 8
        %s361 = scalar_lea.vmem %s3, %s360
        // Predicated region
        $region56: #{decoder_forward.6} parent=50 // pred_check
          %p362 = pneg %p105
        $region57: #{decoder_forward.6} parent=50 // pred_check_branch
          %364 = sbr.rel (%p362) target = $region59
        $region58: #{decoder_forward.6} parent=50 // pred_region
          %s365 = smul.u32 4, %s14
        $region59: #{decoder_forward.6} parent=50 // pred_fallthru
          _
      $region51: #{decoder_forward.6} parent=5 // pred_fallthru
        _
      %p366 = scmp.le.s32.totalorder 2, %s9
      // Predicated region
      $region60: #{decoder_forward.6} parent=5 // pred_check
        %p367 = pneg %p366
      $region61: #{decoder_forward.6} parent=5 // pred_check_branch
        %369 = sbr.rel (%p367) target = $region63
      $region62: #{decoder_forward.6} parent=5 // pred_region
        %s370 = ssub.s32 %s9, 2
        // Predicated region
        $region64: #{decoder_forward.6} parent=62 // pred_check
          %p371 = pneg %p111
        $region65: #{decoder_forward.6} parent=62 // pred_check_branch
          %373 = sbr.rel (%p371) target = $region67
        $region66: #{decoder_forward.6} parent=62 // pred_region
          %s374 = smul.u32 4, %s15
          %p375 = scmp.lt.s32.totalorder %s374, 31
          %s376 = scalar_select %p375, %s374, 31
          %s377 = smul.addr %s376, 8
          %s378 = scalar_lea.vmem %s3, %s377
        $region67: #{decoder_forward.6} parent=62 // pred_fallthru
          _
      $region63: #{decoder_forward.6} parent=5 // pred_fallthru
        _
    $region6: #{decoder_forward.6} parent=1 // loop_footer
      %s13 = sadd.s32 1, %s9
    $region7: #{decoder_forward.6} parent=1 // loop_footer_branch
      %8 = sbr.rel target = $region3
    $region8: #{decoder_forward.6} parent=1 // loop_exit
      _

// kernel: tile.38
$region0: #{tile.38}
  #allocation0 [shape = 's32[1]{0}', space=sflag, size = 0x4, scoped, tag = 'scoped memory for tile.38']
  %s0 = inlined_call_operand.vmem [shape: f32[128], index: 0, kind: input, shape index: {}]
  %s1 = inlined_call_operand.vmem [shape: f32[4,128], index: 1, kind: output, shape index: {}]
  // Predicated region
  $region2: #{tile.38} parent=0 // pred_check
    _
  $region3: #{tile.38} parent=0 // pred_check_branch
    %3 = sbr.rel (0) target = $region5
  $region4: #{tile.38} parent=0 // pred_region
    _
  $region5: #{tile.38} parent=0 // pred_fallthru
    _
  %v4 = vld [vmem:[%s0] ss:$0 sm:$0xff]
  %5 = vst [vmem:[%s1] sm:$0xf] %v4

// kernel: decoder_forward.8
$region0: #{decoder_forward.8}
  #allocation0 [shape = 'u32[]', space=smem, size = 0x4, offset = 0x4, fixed_abs, tag = 'smem constant byte address 0x4 - core index']
  #allocation1 [shape = 'u32[72,128]{1,0:T(1,128)}', space=vmem, size = 0x9000, scoped, tag = 'internal scratch']
  %s0 = inlined_call_operand.vmem [shape: f32[32,512], index: 0, kind: input, shape index: {}]
  %s1 = inlined_call_operand.vmem [shape: f32[1,512], index: 1, kind: input, shape index: {}]
  %s2 = inlined_call_operand.vmem [shape: f32[1,512], index: 2, kind: input, shape index: {}]
  %s3 = inlined_call_operand.vmem [shape: f32[32,512], index: 3, kind: output, shape index: {}]
  %s4 = sld [smem:[#allocation0]]
  $region22: #{decoder_forward.8} parent=0
    _
  %s6 = ssub.s32 1, %s4
  %s7 = scalar_select 0, %s6, %s4
  // Predicated region
  $region2: #{decoder_forward.8} parent=0 // pred_check
    _
  $region3: #{decoder_forward.8} parent=0 // pred_check_branch
    %9 = sbr.rel (0) target = $region5
  $region4: #{decoder_forward.8} parent=0 // pred_region
    _
  $region5: #{decoder_forward.8} parent=0 // pred_fallthru
    _
  // Predicated region
  $region6: #{decoder_forward.8} parent=0 // pred_check
    _
  $region7: #{decoder_forward.8} parent=0 // pred_check_branch
    %11 = sbr.rel (0) target = $region9
  $region8: #{decoder_forward.8} parent=0 // pred_region
    _
  $region9: #{decoder_forward.8} parent=0 // pred_fallthru
    _
  // Predicated region
  $region10: #{decoder_forward.8} parent=0 // pred_check
    _
  $region11: #{decoder_forward.8} parent=0 // pred_check_branch
    %13 = sbr.rel (0) target = $region13
  $region12: #{decoder_forward.8} parent=0 // pred_region
    _
  $region13: #{decoder_forward.8} parent=0 // pred_fallthru
    _
  %v14 = vld [vmem:[%s0] sm:$0xff]
  %v15 = vld [vmem:[%s0 + $0x8] sm:$0xff]
  %v16 = vld [vmem:[%s0 + $0x10] sm:$0xff]
  %v17 = vld [vmem:[%s0 + $0x18] sm:$0xff]
  %v18 = vld [vmem:[%s0 + $0x20] sm:$0xff]
  %v19 = vld [vmem:[%s0 + $0x28] sm:$0xff]
  %v20 = vld [vmem:[%s0 + $0x30] sm:$0xff]
  %v21 = vld [vmem:[%s0 + $0x38] sm:$0xff]
  %v22 = vld [vmem:[%s0 + $0x40] sm:$0xff]
  %v23 = vld [vmem:[%s0 + $0x48] sm:$0xff]
  %v24 = vld [vmem:[%s0 + $0x50] sm:$0xff]
  %v25 = vld [vmem:[%s0 + $0x58] sm:$0xff]
  %v26 = vld [vmem:[%s0 + $0x60] sm:$0xff]
  %v27 = vld [vmem:[%s0 + $0x68] sm:$0xff]
  %v28 = vld [vmem:[%s0 + $0x70] sm:$0xff]
  %v29 = vld [vmem:[%s0 + $0x78] sm:$0xff]
  %v30 = vld [vmem:[%s1] sm:$0xf]
  %v32 = vperm.slane %v30, 0
  %v33 = vperm.slane %v30, 1
  %v34 = vperm.slane %v30, 2
  %v35 = vperm.slane %v30, 3
  %v40 = vmul.f32 %v14, %v32
  %v41 = vmul.f32 %v15, %v33
  %v42 = vmul.f32 %v16, %v34
  %v43 = vmul.f32 %v17, %v35
  %v44 = vmul.f32 %v18, %v32
  %v45 = vmul.f32 %v19, %v33
  %v46 = vmul.f32 %v20, %v34
  %v47 = vmul.f32 %v21, %v35
  %v48 = vmul.f32 %v22, %v32
  %v49 = vmul.f32 %v23, %v33
  %v50 = vmul.f32 %v24, %v34
  %v51 = vmul.f32 %v25, %v35
  %v52 = vmul.f32 %v26, %v32
  %v53 = vmul.f32 %v27, %v33
  %v54 = vmul.f32 %v28, %v34
  %v55 = vmul.f32 %v29, %v35
  %v56 = vld [vmem:[%s2] sm:$0xf]
  %v58 = vperm.slane %v56, 0
  %v59 = vperm.slane %v56, 1
  %v60 = vperm.slane %v56, 2
  %v61 = vperm.slane %v56, 3
  %v66 = vadd.f32 %v40, %v58
  %v67 = vadd.f32 %v41, %v59
  %v68 = vadd.f32 %v42, %v60
  %v69 = vadd.f32 %v43, %v61
  %v70 = vadd.f32 %v44, %v58
  %v71 = vadd.f32 %v45, %v59
  %v72 = vadd.f32 %v46, %v60
  %v73 = vadd.f32 %v47, %v61
  %v74 = vadd.f32 %v48, %v58
  %v75 = vadd.f32 %v49, %v59
  %v76 = vadd.f32 %v50, %v60
  %v77 = vadd.f32 %v51, %v61
  %v78 = vadd.f32 %v52, %v58
  %v79 = vadd.f32 %v53, %v59
  %v80 = vadd.f32 %v54, %v60
  %v81 = vadd.f32 %v55, %v61
  %v82 = vmax.f32 %v66, 0.0
  %v83 = vmax.f32 %v67, 0.0
  %v84 = vmax.f32 %v68, 0.0
  %v85 = vmax.f32 %v69, 0.0
  %v86 = vmax.f32 %v70, 0.0
  %v87 = vmax.f32 %v71, 0.0
  %v88 = vmax.f32 %v72, 0.0
  %v89 = vmax.f32 %v73, 0.0
  %v90 = vmax.f32 %v74, 0.0
  %v91 = vmax.f32 %v75, 0.0
  %v92 = vmax.f32 %v76, 0.0
  %v93 = vmax.f32 %v77, 0.0
  %v94 = vmax.f32 %v78, 0.0
  %v95 = vmax.f32 %v79, 0.0
  %v96 = vmax.f32 %v80, 0.0
  %v97 = vmax.f32 %v81, 0.0
  %98 = vst [vmem:[%s3] sm:$0xff] %v82
  %99 = vst [vmem:[%s3 + $0x8] sm:$0xff] %v83
  %100 = vst [vmem:[%s3 + $0x10] sm:$0xff] %v84
  %101 = vst [vmem:[%s3 + $0x18] sm:$0xff] %v85
  %102 = vst [vmem:[%s3 + $0x20] sm:$0xff] %v86
  %103 = vst [vmem:[%s3 + $0x28] sm:$0xff] %v87
  %104 = vst [vmem:[%s3 + $0x30] sm:$0xff] %v88
  %105 = vst [vmem:[%s3 + $0x38] sm:$0xff] %v89
  %106 = vst [vmem:[%s3 + $0x40] sm:$0xff] %v90
  %107 = vst [vmem:[%s3 + $0x48] sm:$0xff] %v91
  %108 = vst [vmem:[%s3 + $0x50] sm:$0xff] %v92
  %109 = vst [vmem:[%s3 + $0x58] sm:$0xff] %v93
  %110 = vst [vmem:[%s3 + $0x60] sm:$0xff] %v94
  %111 = vst [vmem:[%s3 + $0x68] sm:$0xff] %v95
  %112 = vst [vmem:[%s3 + $0x70] sm:$0xff] %v96
  %113 = vst [vmem:[%s3 + $0x78] sm:$0xff] %v97
  // Predicated region
  $region14: #{decoder_forward.8} parent=0 // pred_check
    _
  $region15: #{decoder_forward.8} parent=0 // pred_check_branch
    %115 = sbr.rel (0) target = $region17
  $region16: #{decoder_forward.8} parent=0 // pred_region
    _
  $region17: #{decoder_forward.8} parent=0 // pred_fallthru
    _
  // Predicated region
  $region18: #{decoder_forward.8} parent=0 // pred_check
    _
  $region19: #{decoder_forward.8} parent=0 // pred_check_branch
    %117 = sbr.rel (0) target = $region21
  $region20: #{decoder_forward.8} parent=0 // pred_region
    _
  $region21: #{decoder_forward.8} parent=0 // pred_fallthru
    _

// kernel: tile.53
$region0: #{tile.53}
  #allocation0 [shape = 's32[1]{0}', space=sflag, size = 0x4, scoped, tag = 'scoped memory for tile.53']
  %s0 = inlined_call_operand.vmem [shape: f32[64], index: 0, kind: input, shape index: {}]
  %s1 = inlined_call_operand.vmem [shape: f32[4,64], index: 1, kind: output, shape index: {}]
  // Predicated region
  $region2: #{tile.53} parent=0 // pred_check
    _
  $region3: #{tile.53} parent=0 // pred_check_branch
    %3 = sbr.rel (0) target = $region5
  $region4: #{tile.53} parent=0 // pred_region
    _
  $region5: #{tile.53} parent=0 // pred_fallthru
    _
  %v4 = vld [vmem:[%s0] ss:$0 sm:$0xff]
  %5 = vst [vmem:[%s1] sm:$0xf] %v4

// kernel: tile.54
$region0: #{tile.54}
  %s0 = inlined_call_operand.vmem [shape: f32[4,64], index: 0, kind: input, shape index: {}]
  %s1 = inlined_call_operand.vmem [shape: f32[1,256], index: 1, kind: output, shape index: {}]
  $region1: #{tile.54} parent=0
    #allocation0 [shape = 'u8[8192]{0}', space=vmem, size = 0x2000, scoped, tag = 'scoped mem for output reshape']
    #allocation1 [shape = 'u8[4096]{0}', space=vmem, size = 0x1000, scoped, tag = 'scoped mem for input reshape']
    %s3 = ssub.s32 16, 1
    %v4 = vld [vmem:[%s0] sm:%s3]
    %5 = vst [vmem:[#allocation1] sm:%s3] %v4
    %s6 = smov 3
    %v7 = vld [vmem:[#allocation1] ss:$2 sm:%s6]
    %vm8 = vcmask 523264
    %9 = vst.msk [vmem:[#allocation0] ss:$8 sm:$0x3] %vm8, %v7
    %s10 = scalar_lea.vmem [#allocation1], 1
    %s11 = smov 3
    %v12 = vld [vmem:[%s10] ss:$2 sm:%s11]
    %13 = vrot.lane.b32.xlu0 %v12, 64
    %v14 = vpop.permute.xlu0 %13
    %vm15 = vcmask 1048064
    %16 = vst.msk [vmem:[#allocation0] ss:$8 sm:$0x3] %vm15, %v14
    %s18 = ssub.s32 2, 1
    %v19 = vld [vmem:[#allocation0] sm:%s18]
    %s21 = ssub.s32 2, 1
    %22 = vst [vmem:[%s1] sm:%s21] %v19
    %s23 = scalar_lea.vmem [#allocation0], 8
    %v24 = vld [vmem:[%s23] sm:%s18]
    %s26 = ssub.s32 2, 1
    %s27 = scalar_lea.vmem %s1, 1
    %28 = vst [vmem:[%s27] sm:%s26] %v24

// kernel: decoder_forward.7
$region0: #{decoder_forward.7}
  #allocation0 [shape = 'u32[]', space=smem, size = 0x4, offset = 0x4, fixed_abs, tag = 'smem constant byte address 0x4 - core index']
  #allocation1 [shape = 'u32[72,128]{1,0:T(1,128)}', space=vmem, size = 0x9000, scoped, tag = 'internal scratch']
  %s0 = inlined_call_operand.vmem [shape: f32[32,1024], index: 0, kind: input, shape index: {}]
  %s1 = inlined_call_operand.vmem [shape: f32[1024,512], index: 1, kind: input, shape index: {}]
  %s2 = inlined_call_operand.vmem [shape: f32[1,512], index: 2, kind: input, shape index: {}]
  %s3 = inlined_call_operand.vmem [shape: f32[32,512], index: 3, kind: output, shape index: {0}]
  %s4 = inlined_call_operand.vmem [shape: f32[8,512], index: 4, kind: output, shape index: {1}]
  %s5 = inlined_call_operand.vmem [shape: f32[8,512], index: 5, kind: output, shape index: {2}]
  %6 = xla_tuple %s3, %s4, %s5
  %s7 = sld [smem:[#allocation0]]
  $region38: #{decoder_forward.7} parent=0
    _
  %s9 = ssub.s32 1, %s7
  %s10 = scalar_select 0, %s9, %s7
  // Predicated region
  $region2: #{decoder_forward.7} parent=0 // pred_check
    _
  $region3: #{decoder_forward.7} parent=0 // pred_check_branch
    %12 = sbr.rel (0) target = $region5
  $region4: #{decoder_forward.7} parent=0 // pred_region
    _
  $region5: #{decoder_forward.7} parent=0 // pred_fallthru
    _
  // Predicated region
  $region6: #{decoder_forward.7} parent=0 // pred_check
    _
  $region7: #{decoder_forward.7} parent=0 // pred_check_branch
    %14 = sbr.rel (0) target = $region9
  $region8: #{decoder_forward.7} parent=0 // pred_region
    _
  $region9: #{decoder_forward.7} parent=0 // pred_fallthru
    _
  // Predicated region
  $region10: #{decoder_forward.7} parent=0 // pred_check
    _
  $region11: #{decoder_forward.7} parent=0 // pred_check_branch
    %16 = sbr.rel (0) target = $region13
  $region12: #{decoder_forward.7} parent=0 // pred_region
    _
  $region13: #{decoder_forward.7} parent=0 // pred_fallthru
    _
  %v17 = vld [vmem:[%s0] sm:$0xff]
  %v18 = vld [vmem:[%s0 + $0x8] sm:$0xff]
  %v19 = vld [vmem:[%s0 + $0x10] sm:$0xff]
  %v20 = vld [vmem:[%s0 + $0x18] sm:$0xff]
  %v21 = vld [vmem:[%s0 + $0x20] sm:$0xff]
  %v22 = vld [vmem:[%s0 + $0x28] sm:$0xff]
  %v23 = vld [vmem:[%s0 + $0x30] sm:$0xff]
  %v24 = vld [vmem:[%s0 + $0x38] sm:$0xff]
  %v25 = vld [vmem:[%s0 + $0x40] sm:$0xff]
  %v26 = vld [vmem:[%s0 + $0x48] sm:$0xff]
  %v27 = vld [vmem:[%s0 + $0x50] sm:$0xff]
  %v28 = vld [vmem:[%s0 + $0x58] sm:$0xff]
  %v29 = vld [vmem:[%s0 + $0x60] sm:$0xff]
  %v30 = vld [vmem:[%s0 + $0x68] sm:$0xff]
  %v31 = vld [vmem:[%s0 + $0x70] sm:$0xff]
  %v32 = vld [vmem:[%s0 + $0x78] sm:$0xff]
  %v33 = vld [vmem:[%s0 + $0x80] sm:$0xff]
  %v34 = vld [vmem:[%s0 + $0x88] sm:$0xff]
  %v35 = vld [vmem:[%s0 + $0x90] sm:$0xff]
  %v36 = vld [vmem:[%s0 + $0x98] sm:$0xff]
  %v37 = vld [vmem:[%s0 + $0xa0] sm:$0xff]
  %v38 = vld [vmem:[%s0 + $0xa8] sm:$0xff]
  %v39 = vld [vmem:[%s0 + $0xb0] sm:$0xff]
  %v40 = vld [vmem:[%s0 + $0xb8] sm:$0xff]
  %v41 = vld [vmem:[%s0 + $0xc0] sm:$0xff]
  %v42 = vld [vmem:[%s0 + $0xc8] sm:$0xff]
  %v43 = vld [vmem:[%s0 + $0xd0] sm:$0xff]
  %v44 = vld [vmem:[%s0 + $0xd8] sm:$0xff]
  %v45 = vld [vmem:[%s0 + $0xe0] sm:$0xff]
  %v46 = vld [vmem:[%s0 + $0xe8] sm:$0xff]
  %v47 = vld [vmem:[%s0 + $0xf0] sm:$0xff]
  %v48 = vld [vmem:[%s0 + $0xf8] sm:$0xff]
  %v49 = vld [vmem:[%s1] sm:$0xff]
  %v50 = vld [vmem:[%s1 + $0x8] sm:$0xff]
  %v51 = vld [vmem:[%s1 + $0x10] sm:$0xff]
  %v52 = vld [vmem:[%s1 + $0x18] sm:$0xff]
  %v53 = vld [vmem:[%s1 + $0x20] sm:$0xff]
  %v54 = vld [vmem:[%s1 + $0x28] sm:$0xff]
  %v55 = vld [vmem:[%s1 + $0x30] sm:$0xff]
  %v56 = vld [vmem:[%s1 + $0x38] sm:$0xff]
  %v57 = vld [vmem:[%s1 + $0x40] sm:$0xff]
  %v58 = vld [vmem:[%s1 + $0x48] sm:$0xff]
  %v59 = vld [vmem:[%s1 + $0x50] sm:$0xff]
  %v60 = vld [vmem:[%s1 + $0x58] sm:$0xff]
  %v61 = vld [vmem:[%s1 + $0x60] sm:$0xff]
  %v62 = vld [vmem:[%s1 + $0x68] sm:$0xff]
  %v63 = vld [vmem:[%s1 + $0x70] sm:$0xff]
  %v64 = vld [vmem:[%s1 + $0x78] sm:$0xff]
  %v65 = vld [vmem:[%s1 + $0x80] sm:$0xff]
  %v66 = vld [vmem:[%s1 + $0x88] sm:$0xff]
  %v67 = vld [vmem:[%s1 + $0x90] sm:$0xff]
  %v68 = vld [vmem:[%s1 + $0x98] sm:$0xff]
  %v69 = vld [vmem:[%s1 + $0xa0] sm:$0xff]
  %v70 = vld [vmem:[%s1 + $0xa8] sm:$0xff]
  %v71 = vld [vmem:[%s1 + $0xb0] sm:$0xff]
  %v72 = vld [vmem:[%s1 + $0xb8] sm:$0xff]
  %v73 = vld [vmem:[%s1 + $0xc0] sm:$0xff]
  %v74 = vld [vmem:[%s1 + $0xc8] sm:$0xff]
  %v75 = vld [vmem:[%s1 + $0xd0] sm:$0xff]
  %v76 = vld [vmem:[%s1 + $0xd8] sm:$0xff]
  %v77 = vld [vmem:[%s1 + $0xe0] sm:$0xff]
  %v78 = vld [vmem:[%s1 + $0xe8] sm:$0xff]
  %v79 = vld [vmem:[%s1 + $0xf0] sm:$0xff]
  %v80 = vld [vmem:[%s1 + $0xf8] sm:$0xff]
  %v81 = vld [vmem:[%s1 + $0x100] sm:$0xff]
  %v82 = vld [vmem:[%s1 + $0x108] sm:$0xff]
  %v83 = vld [vmem:[%s1 + $0x110] sm:$0xff]
  %v84 = vld [vmem:[%s1 + $0x118] sm:$0xff]
  %v85 = vld [vmem:[%s1 + $0x120] sm:$0xff]
  %v86 = vld [vmem:[%s1 + $0x128] sm:$0xff]
  %v87 = vld [vmem:[%s1 + $0x130] sm:$0xff]
  %v88 = vld [vmem:[%s1 + $0x138] sm:$0xff]
  %v89 = vld [vmem:[%s1 + $0x140] sm:$0xff]
  %v90 = vld [vmem:[%s1 + $0x148] sm:$0xff]
  %v91 = vld [vmem:[%s1 + $0x150] sm:$0xff]
  %v92 = vld [vmem:[%s1 + $0x158] sm:$0xff]
  %v93 = vld [vmem:[%s1 + $0x160] sm:$0xff]
  %v94 = vld [vmem:[%s1 + $0x168] sm:$0xff]
  %v95 = vld [vmem:[%s1 + $0x170] sm:$0xff]
  %v96 = vld [vmem:[%s1 + $0x178] sm:$0xff]
  %v97 = vld [vmem:[%s1 + $0x180] sm:$0xff]
  %v98 = vld [vmem:[%s1 + $0x188] sm:$0xff]
  %v99 = vld [vmem:[%s1 + $0x190] sm:$0xff]
  %v100 = vld [vmem:[%s1 + $0x198] sm:$0xff]
  %v101 = vld [vmem:[%s1 + $0x1a0] sm:$0xff]
  %v102 = vld [vmem:[%s1 + $0x1a8] sm:$0xff]
  %v103 = vld [vmem:[%s1 + $0x1b0] sm:$0xff]
  %v104 = vld [vmem:[%s1 + $0x1b8] sm:$0xff]
  %v105 = vld [vmem:[%s1 + $0x1c0] sm:$0xff]
  %v106 = vld [vmem:[%s1 + $0x1c8] sm:$0xff]
  %v107 = vld [vmem:[%s1 + $0x1d0] sm:$0xff]
  %v108 = vld [vmem:[%s1 + $0x1d8] sm:$0xff]
  %v109 = vld [vmem:[%s1 + $0x1e0] sm:$0xff]
  %v110 = vld [vmem:[%s1 + $0x1e8] sm:$0xff]
  %v111 = vld [vmem:[%s1 + $0x1f0] sm:$0xff]
  %v112 = vld [vmem:[%s1 + $0x1f8] sm:$0xff]
  %v113 = vld [vmem:[%s1 + $0x200] sm:$0xff]
  %v114 = vld [vmem:[%s1 + $0x208] sm:$0xff]
  %v115 = vld [vmem:[%s1 + $0x210] sm:$0xff]
  %v116 = vld [vmem:[%s1 + $0x218] sm:$0xff]
  %v117 = vld [vmem:[%s1 + $0x220] sm:$0xff]
  %v118 = vld [vmem:[%s1 + $0x228] sm:$0xff]
  %v119 = vld [vmem:[%s1 + $0x230] sm:$0xff]
  %v120 = vld [vmem:[%s1 + $0x238] sm:$0xff]
  %v121 = vld [vmem:[%s1 + $0x240] sm:$0xff]
  %v122 = vld [vmem:[%s1 + $0x248] sm:$0xff]
  %v123 = vld [vmem:[%s1 + $0x250] sm:$0xff]
  %v124 = vld [vmem:[%s1 + $0x258] sm:$0xff]
  %v125 = vld [vmem:[%s1 + $0x260] sm:$0xff]
  %v126 = vld [vmem:[%s1 + $0x268] sm:$0xff]
  %v127 = vld [vmem:[%s1 + $0x270] sm:$0xff]
  %v128 = vld [vmem:[%s1 + $0x278] sm:$0xff]
  %v129 = vld [vmem:[%s1 + $0x280] sm:$0xff]
  %v130 = vld [vmem:[%s1 + $0x288] sm:$0xff]
  %v131 = vld [vmem:[%s1 + $0x290] sm:$0xff]
  %v132 = vld [vmem:[%s1 + $0x298] sm:$0xff]
  %v133 = vld [vmem:[%s1 + $0x2a0] sm:$0xff]
  %v134 = vld [vmem:[%s1 + $0x2a8] sm:$0xff]
  %v135 = vld [vmem:[%s1 + $0x2b0] sm:$0xff]
  %v136 = vld [vmem:[%s1 + $0x2b8] sm:$0xff]
  %v137 = vld [vmem:[%s1 + $0x2c0] sm:$0xff]
  %v138 = vld [vmem:[%s1 + $0x2c8] sm:$0xff]
  %v139 = vld [vmem:[%s1 + $0x2d0] sm:$0xff]
  %v140 = vld [vmem:[%s1 + $0x2d8] sm:$0xff]
  %v141 = vld [vmem:[%s1 + $0x2e0] sm:$0xff]
  %v142 = vld [vmem:[%s1 + $0x2e8] sm:$0xff]
  %v143 = vld [vmem:[%s1 + $0x2f0] sm:$0xff]
  %v144 = vld [vmem:[%s1 + $0x2f8] sm:$0xff]
  %v145 = vld [vmem:[%s1 + $0x300] sm:$0xff]
  %v146 = vld [vmem:[%s1 + $0x308] sm:$0xff]
  %v147 = vld [vmem:[%s1 + $0x310] sm:$0xff]
  %v148 = vld [vmem:[%s1 + $0x318] sm:$0xff]
  %v149 = vld [vmem:[%s1 + $0x320] sm:$0xff]
  %v150 = vld [vmem:[%s1 + $0x328] sm:$0xff]
  %v151 = vld [vmem:[%s1 + $0x330] sm:$0xff]
  %v152 = vld [vmem:[%s1 + $0x338] sm:$0xff]
  %v153 = vld [vmem:[%s1 + $0x340] sm:$0xff]
  %v154 = vld [vmem:[%s1 + $0x348] sm:$0xff]
  %v155 = vld [vmem:[%s1 + $0x350] sm:$0xff]
  %v156 = vld [vmem:[%s1 + $0x358] sm:$0xff]
  %v157 = vld [vmem:[%s1 + $0x360] sm:$0xff]
  %v158 = vld [vmem:[%s1 + $0x368] sm:$0xff]
  %v159 = vld [vmem:[%s1 + $0x370] sm:$0xff]
  %v160 = vld [vmem:[%s1 + $0x378] sm:$0xff]
  %v161 = vld [vmem:[%s1 + $0x380] sm:$0xff]
  %v162 = vld [vmem:[%s1 + $0x388] sm:$0xff]
  %v163 = vld [vmem:[%s1 + $0x390] sm:$0xff]
  %v164 = vld [vmem:[%s1 + $0x398] sm:$0xff]
  %v165 = vld [vmem:[%s1 + $0x3a0] sm:$0xff]
  %v166 = vld [vmem:[%s1 + $0x3a8] sm:$0xff]
  %v167 = vld [vmem:[%s1 + $0x3b0] sm:$0xff]
  %v168 = vld [vmem:[%s1 + $0x3b8] sm:$0xff]
  %v169 = vld [vmem:[%s1 + $0x3c0] sm:$0xff]
  %v170 = vld [vmem:[%s1 + $0x3c8] sm:$0xff]
  %v171 = vld [vmem:[%s1 + $0x3d0] sm:$0xff]
  %v172 = vld [vmem:[%s1 + $0x3d8] sm:$0xff]
  %v173 = vld [vmem:[%s1 + $0x3e0] sm:$0xff]
  %v174 = vld [vmem:[%s1 + $0x3e8] sm:$0xff]
  %v175 = vld [vmem:[%s1 + $0x3f0] sm:$0xff]
  %v176 = vld [vmem:[%s1 + $0x3f8] sm:$0xff]
  %v177 = vld [vmem:[%s1 + $0x400] sm:$0xff]
  %v178 = vld [vmem:[%s1 + $0x408] sm:$0xff]
  %v179 = vld [vmem:[%s1 + $0x410] sm:$0xff]
  %v180 = vld [vmem:[%s1 + $0x418] sm:$0xff]
  %v181 = vld [vmem:[%s1 + $0x420] sm:$0xff]
  %v182 = vld [vmem:[%s1 + $0x428] sm:$0xff]
  %v183 = vld [vmem:[%s1 + $0x430] sm:$0xff]
  %v184 = vld [vmem:[%s1 + $0x438] sm:$0xff]
  %v185 = vld [vmem:[%s1 + $0x440] sm:$0xff]
  %v186 = vld [vmem:[%s1 + $0x448] sm:$0xff]
  %v187 = vld [vmem:[%s1 + $0x450] sm:$0xff]
  %v188 = vld [vmem:[%s1 + $0x458] sm:$0xff]
  %v189 = vld [vmem:[%s1 + $0x460] sm:$0xff]
  %v190 = vld [vmem:[%s1 + $0x468] sm:$0xff]
  %v191 = vld [vmem:[%s1 + $0x470] sm:$0xff]
  %v192 = vld [vmem:[%s1 + $0x478] sm:$0xff]
  %v193 = vld [vmem:[%s1 + $0x480] sm:$0xff]
  %v194 = vld [vmem:[%s1 + $0x488] sm:$0xff]
  %v195 = vld [vmem:[%s1 + $0x490] sm:$0xff]
  %v196 = vld [vmem:[%s1 + $0x498] sm:$0xff]
  %v197 = vld [vmem:[%s1 + $0x4a0] sm:$0xff]
  %v198 = vld [vmem:[%s1 + $0x4a8] sm:$0xff]
  %v199 = vld [vmem:[%s1 + $0x4b0] sm:$0xff]
  %v200 = vld [vmem:[%s1 + $0x4b8] sm:$0xff]
  %v201 = vld [vmem:[%s1 + $0x4c0] sm:$0xff]
  %v202 = vld [vmem:[%s1 + $0x4c8] sm:$0xff]
  %v203 = vld [vmem:[%s1 + $0x4d0] sm:$0xff]
  %v204 = vld [vmem:[%s1 + $0x4d8] sm:$0xff]
  %v205 = vld [vmem:[%s1 + $0x4e0] sm:$0xff]
  %v206 = vld [vmem:[%s1 + $0x4e8] sm:$0xff]
  %v207 = vld [vmem:[%s1 + $0x4f0] sm:$0xff]
  %v208 = vld [vmem:[%s1 + $0x4f8] sm:$0xff]
  %v209 = vld [vmem:[%s1 + $0x500] sm:$0xff]
  %v210 = vld [vmem:[%s1 + $0x508] sm:$0xff]
  %v211 = vld [vmem:[%s1 + $0x510] sm:$0xff]
  %v212 = vld [vmem:[%s1 + $0x518] sm:$0xff]
  %v213 = vld [vmem:[%s1 + $0x520] sm:$0xff]
  %v214 = vld [vmem:[%s1 + $0x528] sm:$0xff]
  %v215 = vld [vmem:[%s1 + $0x530] sm:$0xff]
  %v216 = vld [vmem:[%s1 + $0x538] sm:$0xff]
  %v217 = vld [vmem:[%s1 + $0x540] sm:$0xff]
  %v218 = vld [vmem:[%s1 + $0x548] sm:$0xff]
  %v219 = vld [vmem:[%s1 + $0x550] sm:$0xff]
  %v220 = vld [vmem:[%s1 + $0x558] sm:$0xff]
  %v221 = vld [vmem:[%s1 + $0x560] sm:$0xff]
  %v222 = vld [vmem:[%s1 + $0x568] sm:$0xff]
  %v223 = vld [vmem:[%s1 + $0x570] sm:$0xff]
  %v224 = vld [vmem:[%s1 + $0x578] sm:$0xff]
  %v225 = vld [vmem:[%s1 + $0x580] sm:$0xff]
  %v226 = vld [vmem:[%s1 + $0x588] sm:$0xff]
  %v227 = vld [vmem:[%s1 + $0x590] sm:$0xff]
  %v228 = vld [vmem:[%s1 + $0x598] sm:$0xff]
  %v229 = vld [vmem:[%s1 + $0x5a0] sm:$0xff]
  %v230 = vld [vmem:[%s1 + $0x5a8] sm:$0xff]
  %v231 = vld [vmem:[%s1 + $0x5b0] sm:$0xff]
  %v232 = vld [vmem:[%s1 + $0x5b8] sm:$0xff]
  %v233 = vld [vmem:[%s1 + $0x5c0] sm:$0xff]
  %v234 = vld [vmem:[%s1 + $0x5c8] sm:$0xff]
  %v235 = vld [vmem:[%s1 + $0x5d0] sm:$0xff]
  %v236 = vld [vmem:[%s1 + $0x5d8] sm:$0xff]
  %v237 = vld [vmem:[%s1 + $0x5e0] sm:$0xff]
  %v238 = vld [vmem:[%s1 + $0x5e8] sm:$0xff]
  %v239 = vld [vmem:[%s1 + $0x5f0] sm:$0xff]
  %v240 = vld [vmem:[%s1 + $0x5f8] sm:$0xff]
  %v241 = vld [vmem:[%s1 + $0x600] sm:$0xff]
  %v242 = vld [vmem:[%s1 + $0x608] sm:$0xff]
  %v243 = vld [vmem:[%s1 + $0x610] sm:$0xff]
  %v244 = vld [vmem:[%s1 + $0x618] sm:$0xff]
  %v245 = vld [vmem:[%s1 + $0x620] sm:$0xff]
  %v246 = vld [vmem:[%s1 + $0x628] sm:$0xff]
  %v247 = vld [vmem:[%s1 + $0x630] sm:$0xff]
  %v248 = vld [vmem:[%s1 + $0x638] sm:$0xff]
  %v249 = vld [vmem:[%s1 + $0x640] sm:$0xff]
  %v250 = vld [vmem:[%s1 + $0x648] sm:$0xff]
  %v251 = vld [vmem:[%s1 + $0x650] sm:$0xff]
  %v252 = vld [vmem:[%s1 + $0x658] sm:$0xff]
  %v253 = vld [vmem:[%s1 + $0x660] sm:$0xff]
  %v254 = vld [vmem:[%s1 + $0x668] sm:$0xff]
  %v255 = vld [vmem:[%s1 + $0x670] sm:$0xff]
  %v256 = vld [vmem:[%s1 + $0x678] sm:$0xff]
  %v257 = vld [vmem:[%s1 + $0x680] sm:$0xff]
  %v258 = vld [vmem:[%s1 + $0x688] sm:$0xff]
  %v259 = vld [vmem:[%s1 + $0x690] sm:$0xff]
  %v260 = vld [vmem:[%s1 + $0x698] sm:$0xff]
  %v261 = vld [vmem:[%s1 + $0x6a0] sm:$0xff]
  %v262 = vld [vmem:[%s1 + $0x6a8] sm:$0xff]
  %v263 = vld [vmem:[%s1 + $0x6b0] sm:$0xff]
  %v264 = vld [vmem:[%s1 + $0x6b8] sm:$0xff]
  %v265 = vld [vmem:[%s1 + $0x6c0] sm:$0xff]
  %v266 = vld [vmem:[%s1 + $0x6c8] sm:$0xff]
  %v267 = vld [vmem:[%s1 + $0x6d0] sm:$0xff]
  %v268 = vld [vmem:[%s1 + $0x6d8] sm:$0xff]
  %v269 = vld [vmem:[%s1 + $0x6e0] sm:$0xff]
  %v270 = vld [vmem:[%s1 + $0x6e8] sm:$0xff]
  %v271 = vld [vmem:[%s1 + $0x6f0] sm:$0xff]
  %v272 = vld [vmem:[%s1 + $0x6f8] sm:$0xff]
  %v273 = vld [vmem:[%s1 + $0x700] sm:$0xff]
  %v274 = vld [vmem:[%s1 + $0x708] sm:$0xff]
  %v275 = vld [vmem:[%s1 + $0x710] sm:$0xff]
  %v276 = vld [vmem:[%s1 + $0x718] sm:$0xff]
  %v277 = vld [vmem:[%s1 + $0x720] sm:$0xff]
  %v278 = vld [vmem:[%s1 + $0x728] sm:$0xff]
  %v279 = vld [vmem:[%s1 + $0x730] sm:$0xff]
  %v280 = vld [vmem:[%s1 + $0x738] sm:$0xff]
  %v281 = vld [vmem:[%s1 + $0x740] sm:$0xff]
  %v282 = vld [vmem:[%s1 + $0x748] sm:$0xff]
  %v283 = vld [vmem:[%s1 + $0x750] sm:$0xff]
  %v284 = vld [vmem:[%s1 + $0x758] sm:$0xff]
  %v285 = vld [vmem:[%s1 + $0x760] sm:$0xff]
  %v286 = vld [vmem:[%s1 + $0x768] sm:$0xff]
  %v287 = vld [vmem:[%s1 + $0x770] sm:$0xff]
  %v288 = vld [vmem:[%s1 + $0x778] sm:$0xff]
  %v289 = vld [vmem:[%s1 + $0x780] sm:$0xff]
  %v290 = vld [vmem:[%s1 + $0x788] sm:$0xff]
  %v291 = vld [vmem:[%s1 + $0x790] sm:$0xff]
  %v292 = vld [vmem:[%s1 + $0x798] sm:$0xff]
  %v293 = vld [vmem:[%s1 + $0x7a0] sm:$0xff]
  %v294 = vld [vmem:[%s1 + $0x7a8] sm:$0xff]
  %v295 = vld [vmem:[%s1 + $0x7b0] sm:$0xff]
  %v296 = vld [vmem:[%s1 + $0x7b8] sm:$0xff]
  %v297 = vld [vmem:[%s1 + $0x7c0] sm:$0xff]
  %v298 = vld [vmem:[%s1 + $0x7c8] sm:$0xff]
  %v299 = vld [vmem:[%s1 + $0x7d0] sm:$0xff]
  %v300 = vld [vmem:[%s1 + $0x7d8] sm:$0xff]
  %v301 = vld [vmem:[%s1 + $0x7e0] sm:$0xff]
  %v302 = vld [vmem:[%s1 + $0x7e8] sm:$0xff]
  %v303 = vld [vmem:[%s1 + $0x7f0] sm:$0xff]
  %v304 = vld [vmem:[%s1 + $0x7f8] sm:$0xff]
  %v305 = vld [vmem:[%s1 + $0x800] sm:$0xff]
  %v306 = vld [vmem:[%s1 + $0x808] sm:$0xff]
  %v307 = vld [vmem:[%s1 + $0x810] sm:$0xff]
  %v308 = vld [vmem:[%s1 + $0x818] sm:$0xff]
  %v309 = vld [vmem:[%s1 + $0x820] sm:$0xff]
  %v310 = vld [vmem:[%s1 + $0x828] sm:$0xff]
  %v311 = vld [vmem:[%s1 + $0x830] sm:$0xff]
  %v312 = vld [vmem:[%s1 + $0x838] sm:$0xff]
  %v313 = vld [vmem:[%s1 + $0x840] sm:$0xff]
  %v314 = vld [vmem:[%s1 + $0x848] sm:$0xff]
  %v315 = vld [vmem:[%s1 + $0x850] sm:$0xff]
  %v316 = vld [vmem:[%s1 + $0x858] sm:$0xff]
  %v317 = vld [vmem:[%s1 + $0x860] sm:$0xff]
  %v318 = vld [vmem:[%s1 + $0x868] sm:$0xff]
  %v319 = vld [vmem:[%s1 + $0x870] sm:$0xff]
  %v320 = vld [vmem:[%s1 + $0x878] sm:$0xff]
  %v321 = vld [vmem:[%s1 + $0x880] sm:$0xff]
  %v322 = vld [vmem:[%s1 + $0x888] sm:$0xff]
  %v323 = vld [vmem:[%s1 + $0x890] sm:$0xff]
  %v324 = vld [vmem:[%s1 + $0x898] sm:$0xff]
  %v325 = vld [vmem:[%s1 + $0x8a0] sm:$0xff]
  %v326 = vld [vmem:[%s1 + $0x8a8] sm:$0xff]
  %v327 = vld [vmem:[%s1 + $0x8b0] sm:$0xff]
  %v328 = vld [vmem:[%s1 + $0x8b8] sm:$0xff]
  %v329 = vld [vmem:[%s1 + $0x8c0] sm:$0xff]
  %v330 = vld [vmem:[%s1 + $0x8c8] sm:$0xff]
  %v331 = vld [vmem:[%s1 + $0x8d0] sm:$0xff]
  %v332 = vld [vmem:[%s1 + $0x8d8] sm:$0xff]
  %v333 = vld [vmem:[%s1 + $0x8e0] sm:$0xff]
  %v334 = vld [vmem:[%s1 + $0x8e8] sm:$0xff]
  %v335 = vld [vmem:[%s1 + $0x8f0] sm:$0xff]
  %v336 = vld [vmem:[%s1 + $0x8f8] sm:$0xff]
  %v337 = vld [vmem:[%s1 + $0x900] sm:$0xff]
  %v338 = vld [vmem:[%s1 + $0x908] sm:$0xff]
  %v339 = vld [vmem:[%s1 + $0x910] sm:$0xff]
  %v340 = vld [vmem:[%s1 + $0x918] sm:$0xff]
  %v341 = vld [vmem:[%s1 + $0x920] sm:$0xff]
  %v342 = vld [vmem:[%s1 + $0x928] sm:$0xff]
  %v343 = vld [vmem:[%s1 + $0x930] sm:$0xff]
  %v344 = vld [vmem:[%s1 + $0x938] sm:$0xff]
  %v345 = vld [vmem:[%s1 + $0x940] sm:$0xff]
  %v346 = vld [vmem:[%s1 + $0x948] sm:$0xff]
  %v347 = vld [vmem:[%s1 + $0x950] sm:$0xff]
  %v348 = vld [vmem:[%s1 + $0x958] sm:$0xff]
  %v349 = vld [vmem:[%s1 + $0x960] sm:$0xff]
  %v350 = vld [vmem:[%s1 + $0x968] sm:$0xff]
  %v351 = vld [vmem:[%s1 + $0x970] sm:$0xff]
  %v352 = vld [vmem:[%s1 + $0x978] sm:$0xff]
  %v353 = vld [vmem:[%s1 + $0x980] sm:$0xff]
  %v354 = vld [vmem:[%s1 + $0x988] sm:$0xff]
  %v355 = vld [vmem:[%s1 + $0x990] sm:$0xff]
  %v356 = vld [vmem:[%s1 + $0x998] sm:$0xff]
  %v357 = vld [vmem:[%s1 + $0x9a0] sm:$0xff]
  %v358 = vld [vmem:[%s1 + $0x9a8] sm:$0xff]
  %v359 = vld [vmem:[%s1 + $0x9b0] sm:$0xff]
  %v360 = vld [vmem:[%s1 + $0x9b8] sm:$0xff]
  %v361 = vld [vmem:[%s1 + $0x9c0] sm:$0xff]
  %v362 = vld [vmem:[%s1 + $0x9c8] sm:$0xff]
  %v363 = vld [vmem:[%s1 + $0x9d0] sm:$0xff]
  %v364 = vld [vmem:[%s1 + $0x9d8] sm:$0xff]
  %v365 = vld [vmem:[%s1 + $0x9e0] sm:$0xff]
  %v366 = vld [vmem:[%s1 + $0x9e8] sm:$0xff]
  %v367 = vld [vmem:[%s1 + $0x9f0] sm:$0xff]
  %v368 = vld [vmem:[%s1 + $0x9f8] sm:$0xff]
  %v369 = vld [vmem:[%s1 + $0xa00] sm:$0xff]
  %v370 = vld [vmem:[%s1 + $0xa08] sm:$0xff]
  %v371 = vld [vmem:[%s1 + $0xa10] sm:$0xff]
  %v372 = vld [vmem:[%s1 + $0xa18] sm:$0xff]
  %v373 = vld [vmem:[%s1 + $0xa20] sm:$0xff]
  %v374 = vld [vmem:[%s1 + $0xa28] sm:$0xff]
  %v375 = vld [vmem:[%s1 + $0xa30] sm:$0xff]
  %v376 = vld [vmem:[%s1 + $0xa38] sm:$0xff]
  %v377 = vld [vmem:[%s1 + $0xa40] sm:$0xff]
  %v378 = vld [vmem:[%s1 + $0xa48] sm:$0xff]
  %v379 = vld [vmem:[%s1 + $0xa50] sm:$0xff]
  %v380 = vld [vmem:[%s1 + $0xa58] sm:$0xff]
  %v381 = vld [vmem:[%s1 + $0xa60] sm:$0xff]
  %v382 = vld [vmem:[%s1 + $0xa68] sm:$0xff]
  %v383 = vld [vmem:[%s1 + $0xa70] sm:$0xff]
  %v384 = vld [vmem:[%s1 + $0xa78] sm:$0xff]
  %v385 = vld [vmem:[%s1 + $0xa80] sm:$0xff]
  %v386 = vld [vmem:[%s1 + $0xa88] sm:$0xff]
  %v387 = vld [vmem:[%s1 + $0xa90] sm:$0xff]
  %v388 = vld [vmem:[%s1 + $0xa98] sm:$0xff]
  %v389 = vld [vmem:[%s1 + $0xaa0] sm:$0xff]
  %v390 = vld [vmem:[%s1 + $0xaa8] sm:$0xff]
  %v391 = vld [vmem:[%s1 + $0xab0] sm:$0xff]
  %v392 = vld [vmem:[%s1 + $0xab8] sm:$0xff]
  %v393 = vld [vmem:[%s1 + $0xac0] sm:$0xff]
  %v394 = vld [vmem:[%s1 + $0xac8] sm:$0xff]
  %v395 = vld [vmem:[%s1 + $0xad0] sm:$0xff]
  %v396 = vld [vmem:[%s1 + $0xad8] sm:$0xff]
  %v397 = vld [vmem:[%s1 + $0xae0] sm:$0xff]
  %v398 = vld [vmem:[%s1 + $0xae8] sm:$0xff]
  %v399 = vld [vmem:[%s1 + $0xaf0] sm:$0xff]
  %v400 = vld [vmem:[%s1 + $0xaf8] sm:$0xff]
  %v401 = vld [vmem:[%s1 + $0xb00] sm:$0xff]
  %v402 = vld [vmem:[%s1 + $0xb08] sm:$0xff]
  %v403 = vld [vmem:[%s1 + $0xb10] sm:$0xff]
  %v404 = vld [vmem:[%s1 + $0xb18] sm:$0xff]
  %v405 = vld [vmem:[%s1 + $0xb20] sm:$0xff]
  %v406 = vld [vmem:[%s1 + $0xb28] sm:$0xff]
  %v407 = vld [vmem:[%s1 + $0xb30] sm:$0xff]
  %v408 = vld [vmem:[%s1 + $0xb38] sm:$0xff]
  %v409 = vld [vmem:[%s1 + $0xb40] sm:$0xff]
  %v410 = vld [vmem:[%s1 + $0xb48] sm:$0xff]
  %v411 = vld [vmem:[%s1 + $0xb50] sm:$0xff]
  %v412 = vld [vmem:[%s1 + $0xb58] sm:$0xff]
  %v413 = vld [vmem:[%s1 + $0xb60] sm:$0xff]
  %v414 = vld [vmem:[%s1 + $0xb68] sm:$0xff]
  %v415 = vld [vmem:[%s1 + $0xb70] sm:$0xff]
  %v416 = vld [vmem:[%s1 + $0xb78] sm:$0xff]
  %v417 = vld [vmem:[%s1 + $0xb80] sm:$0xff]
  %v418 = vld [vmem:[%s1 + $0xb88] sm:$0xff]
  %v419 = vld [vmem:[%s1 + $0xb90] sm:$0xff]
  %v420 = vld [vmem:[%s1 + $0xb98] sm:$0xff]
  %v421 = vld [vmem:[%s1 + $0xba0] sm:$0xff]
  %v422 = vld [vmem:[%s1 + $0xba8] sm:$0xff]
  %v423 = vld [vmem:[%s1 + $0xbb0] sm:$0xff]
  %v424 = vld [vmem:[%s1 + $0xbb8] sm:$0xff]
  %v425 = vld [vmem:[%s1 + $0xbc0] sm:$0xff]
  %v426 = vld [vmem:[%s1 + $0xbc8] sm:$0xff]
  %v427 = vld [vmem:[%s1 + $0xbd0] sm:$0xff]
  %v428 = vld [vmem:[%s1 + $0xbd8] sm:$0xff]
  %v429 = vld [vmem:[%s1 + $0xbe0] sm:$0xff]
  %v430 = vld [vmem:[%s1 + $0xbe8] sm:$0xff]
  %v431 = vld [vmem:[%s1 + $0xbf0] sm:$0xff]
  %v432 = vld [vmem:[%s1 + $0xbf8] sm:$0xff]
  %v433 = vld [vmem:[%s1 + $0xc00] sm:$0xff]
  %v434 = vld [vmem:[%s1 + $0xc08] sm:$0xff]
  %v435 = vld [vmem:[%s1 + $0xc10] sm:$0xff]
  %v436 = vld [vmem:[%s1 + $0xc18] sm:$0xff]
  %v437 = vld [vmem:[%s1 + $0xc20] sm:$0xff]
  %v438 = vld [vmem:[%s1 + $0xc28] sm:$0xff]
  %v439 = vld [vmem:[%s1 + $0xc30] sm:$0xff]
  %v440 = vld [vmem:[%s1 + $0xc38] sm:$0xff]
  %v441 = vld [vmem:[%s1 + $0xc40] sm:$0xff]
  %v442 = vld [vmem:[%s1 + $0xc48] sm:$0xff]
  %v443 = vld [vmem:[%s1 + $0xc50] sm:$0xff]
  %v444 = vld [vmem:[%s1 + $0xc58] sm:$0xff]
  %v445 = vld [vmem:[%s1 + $0xc60] sm:$0xff]
  %v446 = vld [vmem:[%s1 + $0xc68] sm:$0xff]
  %v447 = vld [vmem:[%s1 + $0xc70] sm:$0xff]
  %v448 = vld [vmem:[%s1 + $0xc78] sm:$0xff]
  %v449 = vld [vmem:[%s1 + $0xc80] sm:$0xff]
  %v450 = vld [vmem:[%s1 + $0xc88] sm:$0xff]
  %v451 = vld [vmem:[%s1 + $0xc90] sm:$0xff]
  %v452 = vld [vmem:[%s1 + $0xc98] sm:$0xff]
  %v453 = vld [vmem:[%s1 + $0xca0] sm:$0xff]
  %v454 = vld [vmem:[%s1 + $0xca8] sm:$0xff]
  %v455 = vld [vmem:[%s1 + $0xcb0] sm:$0xff]
  %v456 = vld [vmem:[%s1 + $0xcb8] sm:$0xff]
  %v457 = vld [vmem:[%s1 + $0xcc0] sm:$0xff]
  %v458 = vld [vmem:[%s1 + $0xcc8] sm:$0xff]
  %v459 = vld [vmem:[%s1 + $0xcd0] sm:$0xff]
  %v460 = vld [vmem:[%s1 + $0xcd8] sm:$0xff]
  %v461 = vld [vmem:[%s1 + $0xce0] sm:$0xff]
  %v462 = vld [vmem:[%s1 + $0xce8] sm:$0xff]
  %v463 = vld [vmem:[%s1 + $0xcf0] sm:$0xff]
  %v464 = vld [vmem:[%s1 + $0xcf8] sm:$0xff]
  %v465 = vld [vmem:[%s1 + $0xd00] sm:$0xff]
  %v466 = vld [vmem:[%s1 + $0xd08] sm:$0xff]
  %v467 = vld [vmem:[%s1 + $0xd10] sm:$0xff]
  %v468 = vld [vmem:[%s1 + $0xd18] sm:$0xff]
  %v469 = vld [vmem:[%s1 + $0xd20] sm:$0xff]
  %v470 = vld [vmem:[%s1 + $0xd28] sm:$0xff]
  %v471 = vld [vmem:[%s1 + $0xd30] sm:$0xff]
  %v472 = vld [vmem:[%s1 + $0xd38] sm:$0xff]
  %v473 = vld [vmem:[%s1 + $0xd40] sm:$0xff]
  %v474 = vld [vmem:[%s1 + $0xd48] sm:$0xff]
  %v475 = vld [vmem:[%s1 + $0xd50] sm:$0xff]
  %v476 = vld [vmem:[%s1 + $0xd58] sm:$0xff]
  %v477 = vld [vmem:[%s1 + $0xd60] sm:$0xff]
  %v478 = vld [vmem:[%s1 + $0xd68] sm:$0xff]
  %v479 = vld [vmem:[%s1 + $0xd70] sm:$0xff]
  %v480 = vld [vmem:[%s1 + $0xd78] sm:$0xff]
  %v481 = vld [vmem:[%s1 + $0xd80] sm:$0xff]
  %v482 = vld [vmem:[%s1 + $0xd88] sm:$0xff]
  %v483 = vld [vmem:[%s1 + $0xd90] sm:$0xff]
  %v484 = vld [vmem:[%s1 + $0xd98] sm:$0xff]
  %v485 = vld [vmem:[%s1 + $0xda0] sm:$0xff]
  %v486 = vld [vmem:[%s1 + $0xda8] sm:$0xff]
  %v487 = vld [vmem:[%s1 + $0xdb0] sm:$0xff]
  %v488 = vld [vmem:[%s1 + $0xdb8] sm:$0xff]
  %v489 = vld [vmem:[%s1 + $0xdc0] sm:$0xff]
  %v490 = vld [vmem:[%s1 + $0xdc8] sm:$0xff]
  %v491 = vld [vmem:[%s1 + $0xdd0] sm:$0xff]
  %v492 = vld [vmem:[%s1 + $0xdd8] sm:$0xff]
  %v493 = vld [vmem:[%s1 + $0xde0] sm:$0xff]
  %v494 = vld [vmem:[%s1 + $0xde8] sm:$0xff]
  %v495 = vld [vmem:[%s1 + $0xdf0] sm:$0xff]
  %v496 = vld [vmem:[%s1 + $0xdf8] sm:$0xff]
  %v497 = vld [vmem:[%s1 + $0xe00] sm:$0xff]
  %v498 = vld [vmem:[%s1 + $0xe08] sm:$0xff]
  %v499 = vld [vmem:[%s1 + $0xe10] sm:$0xff]
  %v500 = vld [vmem:[%s1 + $0xe18] sm:$0xff]
  %v501 = vld [vmem:[%s1 + $0xe20] sm:$0xff]
  %v502 = vld [vmem:[%s1 + $0xe28] sm:$0xff]
  %v503 = vld [vmem:[%s1 + $0xe30] sm:$0xff]
  %v504 = vld [vmem:[%s1 + $0xe38] sm:$0xff]
  %v505 = vld [vmem:[%s1 + $0xe40] sm:$0xff]
  %v506 = vld [vmem:[%s1 + $0xe48] sm:$0xff]
  %v507 = vld [vmem:[%s1 + $0xe50] sm:$0xff]
  %v508 = vld [vmem:[%s1 + $0xe58] sm:$0xff]
  %v509 = vld [vmem:[%s1 + $0xe60] sm:$0xff]
  %v510 = vld [vmem:[%s1 + $0xe68] sm:$0xff]
  %v511 = vld [vmem:[%s1 + $0xe70] sm:$0xff]
  %v512 = vld [vmem:[%s1 + $0xe78] sm:$0xff]
  %v513 = vld [vmem:[%s1 + $0xe80] sm:$0xff]
  %v514 = vld [vmem:[%s1 + $0xe88] sm:$0xff]
  %v515 = vld [vmem:[%s1 + $0xe90] sm:$0xff]
  %v516 = vld [vmem:[%s1 + $0xe98] sm:$0xff]
  %v517 = vld [vmem:[%s1 + $0xea0] sm:$0xff]
  %v518 = vld [vmem:[%s1 + $0xea8] sm:$0xff]
  %v519 = vld [vmem:[%s1 + $0xeb0] sm:$0xff]
  %v520 = vld [vmem:[%s1 + $0xeb8] sm:$0xff]
  %v521 = vld [vmem:[%s1 + $0xec0] sm:$0xff]
  %v522 = vld [vmem:[%s1 + $0xec8] sm:$0xff]
  %v523 = vld [vmem:[%s1 + $0xed0] sm:$0xff]
  %v524 = vld [vmem:[%s1 + $0xed8] sm:$0xff]
  %v525 = vld [vmem:[%s1 + $0xee0] sm:$0xff]
  %v526 = vld [vmem:[%s1 + $0xee8] sm:$0xff]
  %v527 = vld [vmem:[%s1 + $0xef0] sm:$0xff]
  %v528 = vld [vmem:[%s1 + $0xef8] sm:$0xff]
  %v529 = vld [vmem:[%s1 + $0xf00] sm:$0xff]
  %v530 = vld [vmem:[%s1 + $0xf08] sm:$0xff]
  %v531 = vld [vmem:[%s1 + $0xf10] sm:$0xff]
  %v532 = vld [vmem:[%s1 + $0xf18] sm:$0xff]
  %v533 = vld [vmem:[%s1 + $0xf20] sm:$0xff]
  %v534 = vld [vmem:[%s1 + $0xf28] sm:$0xff]
  %v535 = vld [vmem:[%s1 + $0xf30] sm:$0xff]
  %v536 = vld [vmem:[%s1 + $0xf38] sm:$0xff]
  %v537 = vld [vmem:[%s1 + $0xf40] sm:$0xff]
  %v538 = vld [vmem:[%s1 + $0xf48] sm:$0xff]
  %v539 = vld [vmem:[%s1 + $0xf50] sm:$0xff]
  %v540 = vld [vmem:[%s1 + $0xf58] sm:$0xff]
  %v541 = vld [vmem:[%s1 + $0xf60] sm:$0xff]
  %v542 = vld [vmem:[%s1 + $0xf68] sm:$0xff]
  %v543 = vld [vmem:[%s1 + $0xf70] sm:$0xff]
  %v544 = vld [vmem:[%s1 + $0xf78] sm:$0xff]
  %v545 = vld [vmem:[%s1 + $0xf80] sm:$0xff]
  %v546 = vld [vmem:[%s1 + $0xf88] sm:$0xff]
  %v547 = vld [vmem:[%s1 + $0xf90] sm:$0xff]
  %v548 = vld [vmem:[%s1 + $0xf98] sm:$0xff]
  %v549 = vld [vmem:[%s1 + $0xfa0] sm:$0xff]
  %v550 = vld [vmem:[%s1 + $0xfa8] sm:$0xff]
  %v551 = vld [vmem:[%s1 + $0xfb0] sm:$0xff]
  %v552 = vld [vmem:[%s1 + $0xfb8] sm:$0xff]
  %v553 = vld [vmem:[%s1 + $0xfc0] sm:$0xff]
  %v554 = vld [vmem:[%s1 + $0xfc8] sm:$0xff]
  %v555 = vld [vmem:[%s1 + $0xfd0] sm:$0xff]
  %v556 = vld [vmem:[%s1 + $0xfd8] sm:$0xff]
  %v557 = vld [vmem:[%s1 + $0xfe0] sm:$0xff]
  %v558 = vld [vmem:[%s1 + $0xfe8] sm:$0xff]
  %v559 = vld [vmem:[%s1 + $0xff0] sm:$0xff]
  %v560 = vld [vmem:[%s1 + $0xff8] sm:$0xff]
  %v561 = vld [vmem:[%s2] sm:$0xf]
  %v563 = vperm.slane %v561, 0
  %v564 = vperm.slane %v561, 1
  %v565 = vperm.slane %v561, 2
  %v566 = vperm.slane %v561, 3
  %571 = vmatpush.msra.mxu0 %v109
  %572 = vmatpush.msra.mxu0 %v105
  %573 = vmatpush.msra.mxu0 %v101
  %574 = vmatpush.msra.mxu0 %v97
  %575 = vmatpush.msra.mxu0 %v93
  %576 = vmatpush.msra.mxu0 %v89
  %577 = vmatpush.msra.mxu0 %v85
  %578 = vmatpush.msra.mxu0 %v81
  %579 = vmatpush.msra.mxu0 %v77
  %580 = vmatpush.msra.mxu0 %v73
  %581 = vmatpush.msra.mxu0 %v69
  %582 = vmatpush.msra.mxu0 %v65
  %583 = vmatpush.msra.mxu0 %v61
  %584 = vmatpush.msra.mxu0 %v57
  %585 = vmatpush.msra.mxu0 %v53
  %586 = vmatpush.msra.mxu0 %v49
  %587 = vmatmul.f32.gmra.mxu0 %v17
  %v588 = vpop.f32.mrf.mxu0
  %v589 = vadd.f32 %v563, %v588
  %590 = vmatmul.f32.gmra.mxu0 %v25
  %v591 = vpop.f32.mrf.mxu0
  %v592 = vadd.f32 %v563, %v591
  %593 = vmatmul.f32.gmra.mxu0 %v33
  %v594 = vpop.f32.mrf.mxu0
  %v595 = vadd.f32 %v563, %v594
  %596 = vmatmul.f32.gmra.mxu0 %v41
  %v597 = vpop.f32.mrf.mxu0
  %v598 = vadd.f32 %v563, %v597
  %599 = vdwg.mxu0
  %600 = vmatpush.msra.mxu0 %v173
  %601 = vmatpush.msra.mxu0 %v169
  %602 = vmatpush.msra.mxu0 %v165
  %603 = vmatpush.msra.mxu0 %v161
  %604 = vmatpush.msra.mxu0 %v157
  %605 = vmatpush.msra.mxu0 %v153
  %606 = vmatpush.msra.mxu0 %v149
  %607 = vmatpush.msra.mxu0 %v145
  %608 = vmatpush.msra.mxu0 %v141
  %609 = vmatpush.msra.mxu0 %v137
  %610 = vmatpush.msra.mxu0 %v133
  %611 = vmatpush.msra.mxu0 %v129
  %612 = vmatpush.msra.mxu0 %v125
  %613 = vmatpush.msra.mxu0 %v121
  %614 = vmatpush.msra.mxu0 %v117
  %615 = vmatpush.msra.mxu0 %v113
  %616 = vmatmul.f32.gmra.mxu0 %v18
  %v617 = vpop.f32.mrf.mxu0
  %v618 = vadd.f32 %v589, %v617
  %619 = vmatmul.f32.gmra.mxu0 %v26
  %v620 = vpop.f32.mrf.mxu0
  %v621 = vadd.f32 %v592, %v620
  %622 = vmatmul.f32.gmra.mxu0 %v34
  %v623 = vpop.f32.mrf.mxu0
  %v624 = vadd.f32 %v595, %v623
  %625 = vmatmul.f32.gmra.mxu0 %v42
  %v626 = vpop.f32.mrf.mxu0
  %v627 = vadd.f32 %v598, %v626
  %628 = vdwg.mxu0
  %629 = vmatpush.msra.mxu0 %v237
  %630 = vmatpush.msra.mxu0 %v233
  %631 = vmatpush.msra.mxu0 %v229
  %632 = vmatpush.msra.mxu0 %v225
  %633 = vmatpush.msra.mxu0 %v221
  %634 = vmatpush.msra.mxu0 %v217
  %635 = vmatpush.msra.mxu0 %v213
  %636 = vmatpush.msra.mxu0 %v209
  %637 = vmatpush.msra.mxu0 %v205
  %638 = vmatpush.msra.mxu0 %v201
  %639 = vmatpush.msra.mxu0 %v197
  %640 = vmatpush.msra.mxu0 %v193
  %641 = vmatpush.msra.mxu0 %v189
  %642 = vmatpush.msra.mxu0 %v185
  %643 = vmatpush.msra.mxu0 %v181
  %644 = vmatpush.msra.mxu0 %v177
  %645 = vmatmul.f32.gmra.mxu0 %v19
  %v646 = vpop.f32.mrf.mxu0
  %v647 = vadd.f32 %v618, %v646
  %648 = vmatmul.f32.gmra.mxu0 %v27
  %v649 = vpop.f32.mrf.mxu0
  %v650 = vadd.f32 %v621, %v649
  %651 = vmatmul.f32.gmra.mxu0 %v35
  %v652 = vpop.f32.mrf.mxu0
  %v653 = vadd.f32 %v624, %v652
  %654 = vmatmul.f32.gmra.mxu0 %v43
  %v655 = vpop.f32.mrf.mxu0
  %v656 = vadd.f32 %v627, %v655
  %657 = vdwg.mxu0
  %658 = vmatpush.msra.mxu0 %v301
  %659 = vmatpush.msra.mxu0 %v297
  %660 = vmatpush.msra.mxu0 %v293
  %661 = vmatpush.msra.mxu0 %v289
  %662 = vmatpush.msra.mxu0 %v285
  %663 = vmatpush.msra.mxu0 %v281
  %664 = vmatpush.msra.mxu0 %v277
  %665 = vmatpush.msra.mxu0 %v273
  %666 = vmatpush.msra.mxu0 %v269
  %667 = vmatpush.msra.mxu0 %v265
  %668 = vmatpush.msra.mxu0 %v261
  %669 = vmatpush.msra.mxu0 %v257
  %670 = vmatpush.msra.mxu0 %v253
  %671 = vmatpush.msra.mxu0 %v249
  %672 = vmatpush.msra.mxu0 %v245
  %673 = vmatpush.msra.mxu0 %v241
  %674 = vmatmul.f32.gmra.mxu0 %v20
  %v675 = vpop.f32.mrf.mxu0
  %v676 = vadd.f32 %v647, %v675
  %677 = vmatmul.f32.gmra.mxu0 %v28
  %v678 = vpop.f32.mrf.mxu0
  %v679 = vadd.f32 %v650, %v678
  %680 = vmatmul.f32.gmra.mxu0 %v36
  %v681 = vpop.f32.mrf.mxu0
  %v682 = vadd.f32 %v653, %v681
  %683 = vmatmul.f32.gmra.mxu0 %v44
  %v684 = vpop.f32.mrf.mxu0
  %v685 = vadd.f32 %v656, %v684
  %686 = vdwg.mxu0
  %687 = vmatpush.msra.mxu0 %v365
  %688 = vmatpush.msra.mxu0 %v361
  %689 = vmatpush.msra.mxu0 %v357
  %690 = vmatpush.msra.mxu0 %v353
  %691 = vmatpush.msra.mxu0 %v349
  %692 = vmatpush.msra.mxu0 %v345
  %693 = vmatpush.msra.mxu0 %v341
  %694 = vmatpush.msra.mxu0 %v337
  %695 = vmatpush.msra.mxu0 %v333
  %696 = vmatpush.msra.mxu0 %v329
  %697 = vmatpush.msra.mxu0 %v325
  %698 = vmatpush.msra.mxu0 %v321
  %699 = vmatpush.msra.mxu0 %v317
  %700 = vmatpush.msra.mxu0 %v313
  %701 = vmatpush.msra.mxu0 %v309
  %702 = vmatpush.msra.mxu0 %v305
  %703 = vmatmul.f32.gmra.mxu0 %v21
  %v704 = vpop.f32.mrf.mxu0
  %v705 = vadd.f32 %v676, %v704
  %706 = vmatmul.f32.gmra.mxu0 %v29
  %v707 = vpop.f32.mrf.mxu0
  %v708 = vadd.f32 %v679, %v707
  %709 = vmatmul.f32.gmra.mxu0 %v37
  %v710 = vpop.f32.mrf.mxu0
  %v711 = vadd.f32 %v682, %v710
  %712 = vmatmul.f32.gmra.mxu0 %v45
  %v713 = vpop.f32.mrf.mxu0
  %v714 = vadd.f32 %v685, %v713
  %715 = vdwg.mxu0
  %716 = vmatpush.msra.mxu0 %v429
  %717 = vmatpush.msra.mxu0 %v425
  %718 = vmatpush.msra.mxu0 %v421
  %719 = vmatpush.msra.mxu0 %v417
  %720 = vmatpush.msra.mxu0 %v413
  %721 = vmatpush.msra.mxu0 %v409
  %722 = vmatpush.msra.mxu0 %v405
  %723 = vmatpush.msra.mxu0 %v401
  %724 = vmatpush.msra.mxu0 %v397
  %725 = vmatpush.msra.mxu0 %v393
  %726 = vmatpush.msra.mxu0 %v389
  %727 = vmatpush.msra.mxu0 %v385
  %728 = vmatpush.msra.mxu0 %v381
  %729 = vmatpush.msra.mxu0 %v377
  %730 = vmatpush.msra.mxu0 %v373
  %731 = vmatpush.msra.mxu0 %v369
  %732 = vmatmul.f32.gmra.mxu0 %v22
  %v733 = vpop.f32.mrf.mxu0
  %v734 = vadd.f32 %v705, %v733
  %735 = vmatmul.f32.gmra.mxu0 %v30
  %v736 = vpop.f32.mrf.mxu0
  %v737 = vadd.f32 %v708, %v736
  %738 = vmatmul.f32.gmra.mxu0 %v38
  %v739 = vpop.f32.mrf.mxu0
  %v740 = vadd.f32 %v711, %v739
  %741 = vmatmul.f32.gmra.mxu0 %v46
  %v742 = vpop.f32.mrf.mxu0
  %v743 = vadd.f32 %v714, %v742
  %744 = vdwg.mxu0
  %745 = vmatpush.msra.mxu0 %v493
  %746 = vmatpush.msra.mxu0 %v489
  %747 = vmatpush.msra.mxu0 %v485
  %748 = vmatpush.msra.mxu0 %v481
  %749 = vmatpush.msra.mxu0 %v477
  %750 = vmatpush.msra.mxu0 %v473
  %751 = vmatpush.msra.mxu0 %v469
  %752 = vmatpush.msra.mxu0 %v465
  %753 = vmatpush.msra.mxu0 %v461
  %754 = vmatpush.msra.mxu0 %v457
  %755 = vmatpush.msra.mxu0 %v453
  %756 = vmatpush.msra.mxu0 %v449
  %757 = vmatpush.msra.mxu0 %v445
  %758 = vmatpush.msra.mxu0 %v441
  %759 = vmatpush.msra.mxu0 %v437
  %760 = vmatpush.msra.mxu0 %v433
  %761 = vmatmul.f32.gmra.mxu0 %v23
  %v762 = vpop.f32.mrf.mxu0
  %v763 = vadd.f32 %v734, %v762
  %764 = vmatmul.f32.gmra.mxu0 %v31
  %v765 = vpop.f32.mrf.mxu0
  %v766 = vadd.f32 %v737, %v765
  %767 = vmatmul.f32.gmra.mxu0 %v39
  %v768 = vpop.f32.mrf.mxu0
  %v769 = vadd.f32 %v740, %v768
  %770 = vmatmul.f32.gmra.mxu0 %v47
  %v771 = vpop.f32.mrf.mxu0
  %v772 = vadd.f32 %v743, %v771
  %773 = vdwg.mxu0
  %774 = vmatpush.msra.mxu0 %v557
  %775 = vmatpush.msra.mxu0 %v553
  %776 = vmatpush.msra.mxu0 %v549
  %777 = vmatpush.msra.mxu0 %v545
  %778 = vmatpush.msra.mxu0 %v541
  %779 = vmatpush.msra.mxu0 %v537
  %780 = vmatpush.msra.mxu0 %v533
  %781 = vmatpush.msra.mxu0 %v529
  %782 = vmatpush.msra.mxu0 %v525
  %783 = vmatpush.msra.mxu0 %v521
  %784 = vmatpush.msra.mxu0 %v517
  %785 = vmatpush.msra.mxu0 %v513
  %786 = vmatpush.msra.mxu0 %v509
  %787 = vmatpush.msra.mxu0 %v505
  %788 = vmatpush.msra.mxu0 %v501
  %789 = vmatpush.msra.mxu0 %v497
  %790 = vmatmul.f32.gmra.mxu0 %v24
  %v791 = vpop.f32.mrf.mxu0
  %v792 = vadd.f32 %v763, %v791
  %793 = vmatmul.f32.gmra.mxu0 %v32
  %v794 = vpop.f32.mrf.mxu0
  %v795 = vadd.f32 %v766, %v794
  %796 = vmatmul.f32.gmra.mxu0 %v40
  %v797 = vpop.f32.mrf.mxu0
  %v798 = vadd.f32 %v769, %v797
  %799 = vmatmul.f32.gmra.mxu0 %v48
  %v800 = vpop.f32.mrf.mxu0
  %v801 = vadd.f32 %v772, %v800
  %802 = vdwg.mxu0
  %803 = vmatpush.msra.mxu0 %v110
  %804 = vmatpush.msra.mxu0 %v106
  %805 = vmatpush.msra.mxu0 %v102
  %806 = vmatpush.msra.mxu0 %v98
  %807 = vmatpush.msra.mxu0 %v94
  %808 = vmatpush.msra.mxu0 %v90
  %809 = vmatpush.msra.mxu0 %v86
  %810 = vmatpush.msra.mxu0 %v82
  %811 = vmatpush.msra.mxu0 %v78
  %812 = vmatpush.msra.mxu0 %v74
  %813 = vmatpush.msra.mxu0 %v70
  %814 = vmatpush.msra.mxu0 %v66
  %815 = vmatpush.msra.mxu0 %v62
  %816 = vmatpush.msra.mxu0 %v58
  %817 = vmatpush.msra.mxu0 %v54
  %818 = vmatpush.msra.mxu0 %v50
  %819 = vmatmul.f32.gmra.mxu0 %v17
  %v820 = vpop.f32.mrf.mxu0
  %v821 = vadd.f32 %v564, %v820
  %822 = vmatmul.f32.gmra.mxu0 %v25
  %v823 = vpop.f32.mrf.mxu0
  %v824 = vadd.f32 %v564, %v823
  %825 = vmatmul.f32.gmra.mxu0 %v33
  %v826 = vpop.f32.mrf.mxu0
  %v827 = vadd.f32 %v564, %v826
  %828 = vmatmul.f32.gmra.mxu0 %v41
  %v829 = vpop.f32.mrf.mxu0
  %v830 = vadd.f32 %v564, %v829
  %831 = vdwg.mxu0
  %832 = vmatpush.msra.mxu0 %v174
  %833 = vmatpush.msra.mxu0 %v170
  %834 = vmatpush.msra.mxu0 %v166
  %835 = vmatpush.msra.mxu0 %v162
  %836 = vmatpush.msra.mxu0 %v158
  %837 = vmatpush.msra.mxu0 %v154
  %838 = vmatpush.msra.mxu0 %v150
  %839 = vmatpush.msra.mxu0 %v146
  %840 = vmatpush.msra.mxu0 %v142
  %841 = vmatpush.msra.mxu0 %v138
  %842 = vmatpush.msra.mxu0 %v134
  %843 = vmatpush.msra.mxu0 %v130
  %844 = vmatpush.msra.mxu0 %v126
  %845 = vmatpush.msra.mxu0 %v122
  %846 = vmatpush.msra.mxu0 %v118
  %847 = vmatpush.msra.mxu0 %v114
  %848 = vmatmul.f32.gmra.mxu0 %v18
  %v849 = vpop.f32.mrf.mxu0
  %v850 = vadd.f32 %v821, %v849
  %851 = vmatmul.f32.gmra.mxu0 %v26
  %v852 = vpop.f32.mrf.mxu0
  %v853 = vadd.f32 %v824, %v852
  %854 = vmatmul.f32.gmra.mxu0 %v34
  %v855 = vpop.f32.mrf.mxu0
  %v856 = vadd.f32 %v827, %v855
  %857 = vmatmul.f32.gmra.mxu0 %v42
  %v858 = vpop.f32.mrf.mxu0
  %v859 = vadd.f32 %v830, %v858
  %860 = vdwg.mxu0
  %861 = vmatpush.msra.mxu0 %v238
  %862 = vmatpush.msra.mxu0 %v234
  %863 = vmatpush.msra.mxu0 %v230
  %864 = vmatpush.msra.mxu0 %v226
  %865 = vmatpush.msra.mxu0 %v222
  %866 = vmatpush.msra.mxu0 %v218
  %867 = vmatpush.msra.mxu0 %v214
  %868 = vmatpush.msra.mxu0 %v210
  %869 = vmatpush.msra.mxu0 %v206
  %870 = vmatpush.msra.mxu0 %v202
  %871 = vmatpush.msra.mxu0 %v198
  %872 = vmatpush.msra.mxu0 %v194
  %873 = vmatpush.msra.mxu0 %v190
  %874 = vmatpush.msra.mxu0 %v186
  %875 = vmatpush.msra.mxu0 %v182
  %876 = vmatpush.msra.mxu0 %v178
  %877 = vmatmul.f32.gmra.mxu0 %v19
  %v878 = vpop.f32.mrf.mxu0
  %v879 = vadd.f32 %v850, %v878
  %880 = vmatmul.f32.gmra.mxu0 %v27
  %v881 = vpop.f32.mrf.mxu0
  %v882 = vadd.f32 %v853, %v881
  %883 = vmatmul.f32.gmra.mxu0 %v35
  %v884 = vpop.f32.mrf.mxu0
  %v885 = vadd.f32 %v856, %v884
  %886 = vmatmul.f32.gmra.mxu0 %v43
  %v887 = vpop.f32.mrf.mxu0
  %v888 = vadd.f32 %v859, %v887
  %889 = vdwg.mxu0
  %890 = vmatpush.msra.mxu0 %v302
  %891 = vmatpush.msra.mxu0 %v298
  %892 = vmatpush.msra.mxu0 %v294
  %893 = vmatpush.msra.mxu0 %v290
  %894 = vmatpush.msra.mxu0 %v286
  %895 = vmatpush.msra.mxu0 %v282
  %896 = vmatpush.msra.mxu0 %v278
  %897 = vmatpush.msra.mxu0 %v274
  %898 = vmatpush.msra.mxu0 %v270
  %899 = vmatpush.msra.mxu0 %v266
  %900 = vmatpush.msra.mxu0 %v262
  %901 = vmatpush.msra.mxu0 %v258
  %902 = vmatpush.msra.mxu0 %v254
  %903 = vmatpush.msra.mxu0 %v250
  %904 = vmatpush.msra.mxu0 %v246
  %905 = vmatpush.msra.mxu0 %v242
  %906 = vmatmul.f32.gmra.mxu0 %v20
  %v907 = vpop.f32.mrf.mxu0
  %v908 = vadd.f32 %v879, %v907
  %909 = vmatmul.f32.gmra.mxu0 %v28
  %v910 = vpop.f32.mrf.mxu0
  %v911 = vadd.f32 %v882, %v910
  %912 = vmatmul.f32.gmra.mxu0 %v36
  %v913 = vpop.f32.mrf.mxu0
  %v914 = vadd.f32 %v885, %v913
  %915 = vmatmul.f32.gmra.mxu0 %v44
  %v916 = vpop.f32.mrf.mxu0
  %v917 = vadd.f32 %v888, %v916
  %918 = vdwg.mxu0
  %919 = vmatpush.msra.mxu0 %v366
  %920 = vmatpush.msra.mxu0 %v362
  %921 = vmatpush.msra.mxu0 %v358
  %922 = vmatpush.msra.mxu0 %v354
  %923 = vmatpush.msra.mxu0 %v350
  %924 = vmatpush.msra.mxu0 %v346
  %925 = vmatpush.msra.mxu0 %v342
  %926 = vmatpush.msra.mxu0 %v338
  %927 = vmatpush.msra.mxu0 %v334
  %928 = vmatpush.msra.mxu0 %v330
  %929 = vmatpush.msra.mxu0 %v326
  %930 = vmatpush.msra.mxu0 %v322
  %931 = vmatpush.msra.mxu0 %v318
  %932 = vmatpush.msra.mxu0 %v314
  %933 = vmatpush.msra.mxu0 %v310
  %934 = vmatpush.msra.mxu0 %v306
  %935 = vmatmul.f32.gmra.mxu0 %v21
  %v936 = vpop.f32.mrf.mxu0
  %v937 = vadd.f32 %v908, %v936
  %938 = vmatmul.f32.gmra.mxu0 %v29
  %v939 = vpop.f32.mrf.mxu0
  %v940 = vadd.f32 %v911, %v939
  %941 = vmatmul.f32.gmra.mxu0 %v37
  %v942 = vpop.f32.mrf.mxu0
  %v943 = vadd.f32 %v914, %v942
  %944 = vmatmul.f32.gmra.mxu0 %v45
  %v945 = vpop.f32.mrf.mxu0
  %v946 = vadd.f32 %v917, %v945
  %947 = vdwg.mxu0
  %948 = vmatpush.msra.mxu0 %v430
  %949 = vmatpush.msra.mxu0 %v426
  %950 = vmatpush.msra.mxu0 %v422
  %951 = vmatpush.msra.mxu0 %v418
  %952 = vmatpush.msra.mxu0 %v414
  %953 = vmatpush.msra.mxu0 %v410
  %954 = vmatpush.msra.mxu0 %v406
  %955 = vmatpush.msra.mxu0 %v402
  %956 = vmatpush.msra.mxu0 %v398
  %957 = vmatpush.msra.mxu0 %v394
  %958 = vmatpush.msra.mxu0 %v390
  %959 = vmatpush.msra.mxu0 %v386
  %960 = vmatpush.msra.mxu0 %v382
  %961 = vmatpush.msra.mxu0 %v378
  %962 = vmatpush.msra.mxu0 %v374
  %963 = vmatpush.msra.mxu0 %v370
  %964 = vmatmul.f32.gmra.mxu0 %v22
  %v965 = vpop.f32.mrf.mxu0
  %v966 = vadd.f32 %v937, %v965
  %967 = vmatmul.f32.gmra.mxu0 %v30
  %v968 = vpop.f32.mrf.mxu0
  %v969 = vadd.f32 %v940, %v968
  %970 = vmatmul.f32.gmra.mxu0 %v38
  %v971 = vpop.f32.mrf.mxu0
  %v972 = vadd.f32 %v943, %v971
  %973 = vmatmul.f32.gmra.mxu0 %v46
  %v974 = vpop.f32.mrf.mxu0
  %v975 = vadd.f32 %v946, %v974
  %976 = vdwg.mxu0
  %977 = vmatpush.msra.mxu0 %v494
  %978 = vmatpush.msra.mxu0 %v490
  %979 = vmatpush.msra.mxu0 %v486
  %980 = vmatpush.msra.mxu0 %v482
  %981 = vmatpush.msra.mxu0 %v478
  %982 = vmatpush.msra.mxu0 %v474
  %983 = vmatpush.msra.mxu0 %v470
  %984 = vmatpush.msra.mxu0 %v466
  %985 = vmatpush.msra.mxu0 %v462
  %986 = vmatpush.msra.mxu0 %v458
  %987 = vmatpush.msra.mxu0 %v454
  %988 = vmatpush.msra.mxu0 %v450
  %989 = vmatpush.msra.mxu0 %v446
  %990 = vmatpush.msra.mxu0 %v442
  %991 = vmatpush.msra.mxu0 %v438
  %992 = vmatpush.msra.mxu0 %v434
  %993 = vmatmul.f32.gmra.mxu0 %v23
  %v994 = vpop.f32.mrf.mxu0
  %v995 = vadd.f32 %v966, %v994
  %996 = vmatmul.f32.gmra.mxu0 %v31
  %v997 = vpop.f32.mrf.mxu0
  %v998 = vadd.f32 %v969, %v997
  %999 = vmatmul.f32.gmra.mxu0 %v39
  %v1000 = vpop.f32.mrf.mxu0
  %v1001 = vadd.f32 %v972, %v1000
  %1002 = vmatmul.f32.gmra.mxu0 %v47
  %v1003 = vpop.f32.mrf.mxu0
  %v1004 = vadd.f32 %v975, %v1003
  %1005 = vdwg.mxu0
  %1006 = vmatpush.msra.mxu0 %v558
  %1007 = vmatpush.msra.mxu0 %v554
  %1008 = vmatpush.msra.mxu0 %v550
  %1009 = vmatpush.msra.mxu0 %v546
  %1010 = vmatpush.msra.mxu0 %v542
  %1011 = vmatpush.msra.mxu0 %v538
  %1012 = vmatpush.msra.mxu0 %v534
  %1013 = vmatpush.msra.mxu0 %v530
  %1014 = vmatpush.msra.mxu0 %v526
  %1015 = vmatpush.msra.mxu0 %v522
  %1016 = vmatpush.msra.mxu0 %v518
  %1017 = vmatpush.msra.mxu0 %v514
  %1018 = vmatpush.msra.mxu0 %v510
  %1019 = vmatpush.msra.mxu0 %v506
  %1020 = vmatpush.msra.mxu0 %v502
  %1021 = vmatpush.msra.mxu0 %v498
  %1022 = vmatmul.f32.gmra.mxu0 %v24
  %v1023 = vpop.f32.mrf.mxu0
  %v1024 = vadd.f32 %v995, %v1023
  %1025 = vmatmul.f32.gmra.mxu0 %v32
  %v1026 = vpop.f32.mrf.mxu0
  %v1027 = vadd.f32 %v998, %v1026
  %1028 = vmatmul.f32.gmra.mxu0 %v40
  %v1029 = vpop.f32.mrf.mxu0
  %v1030 = vadd.f32 %v1001, %v1029
  %1031 = vmatmul.f32.gmra.mxu0 %v48
  %v1032 = vpop.f32.mrf.mxu0
  %v1033 = vadd.f32 %v1004, %v1032
  %1034 = vdwg.mxu0
  %1035 = vmatpush.msra.mxu0 %v111
  %1036 = vmatpush.msra.mxu0 %v107
  %1037 = vmatpush.msra.mxu0 %v103
  %1038 = vmatpush.msra.mxu0 %v99
  %1039 = vmatpush.msra.mxu0 %v95
  %1040 = vmatpush.msra.mxu0 %v91
  %1041 = vmatpush.msra.mxu0 %v87
  %1042 = vmatpush.msra.mxu0 %v83
  %1043 = vmatpush.msra.mxu0 %v79
  %1044 = vmatpush.msra.mxu0 %v75
  %1045 = vmatpush.msra.mxu0 %v71
  %1046 = vmatpush.msra.mxu0 %v67
  %1047 = vmatpush.msra.mxu0 %v63
  %1048 = vmatpush.msra.mxu0 %v59
  %1049 = vmatpush.msra.mxu0 %v55
  %1050 = vmatpush.msra.mxu0 %v51
  %1051 = vmatmul.f32.gmra.mxu0 %v17
  %v1052 = vpop.f32.mrf.mxu0
  %v1053 = vadd.f32 %v565, %v1052
  %1054 = vmatmul.f32.gmra.mxu0 %v25
  %v1055 = vpop.f32.mrf.mxu0
  %v1056 = vadd.f32 %v565, %v1055
  %1057 = vmatmul.f32.gmra.mxu0 %v33
  %v1058 = vpop.f32.mrf.mxu0
  %v1059 = vadd.f32 %v565, %v1058
  %1060 = vmatmul.f32.gmra.mxu0 %v41
  %v1061 = vpop.f32.mrf.mxu0
  %v1062 = vadd.f32 %v565, %v1061
  %1063 = vdwg.mxu0
  %1064 = vmatpush.msra.mxu0 %v175
  %1065 = vmatpush.msra.mxu0 %v171
  %1066 = vmatpush.msra.mxu0 %v167
  %1067 = vmatpush.msra.mxu0 %v163
  %1068 = vmatpush.msra.mxu0 %v159
  %1069 = vmatpush.msra.mxu0 %v155
  %1070 = vmatpush.msra.mxu0 %v151
  %1071 = vmatpush.msra.mxu0 %v147
  %1072 = vmatpush.msra.mxu0 %v143
  %1073 = vmatpush.msra.mxu0 %v139
  %1074 = vmatpush.msra.mxu0 %v135
  %1075 = vmatpush.msra.mxu0 %v131
  %1076 = vmatpush.msra.mxu0 %v127
  %1077 = vmatpush.msra.mxu0 %v123
  %1078 = vmatpush.msra.mxu0 %v119
  %1079 = vmatpush.msra.mxu0 %v115
  %1080 = vmatmul.f32.gmra.mxu0 %v18
  %v1081 = vpop.f32.mrf.mxu0
  %v1082 = vadd.f32 %v1053, %v1081
  %1083 = vmatmul.f32.gmra.mxu0 %v26
  %v1084 = vpop.f32.mrf.mxu0
  %v1085 = vadd.f32 %v1056, %v1084
  %1086 = vmatmul.f32.gmra.mxu0 %v34
  %v1087 = vpop.f32.mrf.mxu0
  %v1088 = vadd.f32 %v1059, %v1087
  %1089 = vmatmul.f32.gmra.mxu0 %v42
  %v1090 = vpop.f32.mrf.mxu0
  %v1091 = vadd.f32 %v1062, %v1090
  %1092 = vdwg.mxu0
  %1093 = vmatpush.msra.mxu0 %v239
  %1094 = vmatpush.msra.mxu0 %v235
  %1095 = vmatpush.msra.mxu0 %v231
  %1096 = vmatpush.msra.mxu0 %v227
  %1097 = vmatpush.msra.mxu0 %v223
  %1098 = vmatpush.msra.mxu0 %v219
  %1099 = vmatpush.msra.mxu0 %v215
  %1100 = vmatpush.msra.mxu0 %v211
  %1101 = vmatpush.msra.mxu0 %v207
  %1102 = vmatpush.msra.mxu0 %v203
  %1103 = vmatpush.msra.mxu0 %v199
  %1104 = vmatpush.msra.mxu0 %v195
  %1105 = vmatpush.msra.mxu0 %v191
  %1106 = vmatpush.msra.mxu0 %v187
  %1107 = vmatpush.msra.mxu0 %v183
  %1108 = vmatpush.msra.mxu0 %v179
  %1109 = vmatmul.f32.gmra.mxu0 %v19
  %v1110 = vpop.f32.mrf.mxu0
  %v1111 = vadd.f32 %v1082, %v1110
  %1112 = vmatmul.f32.gmra.mxu0 %v27
  %v1113 = vpop.f32.mrf.mxu0
  %v1114 = vadd.f32 %v1085, %v1113
  %1115 = vmatmul.f32.gmra.mxu0 %v35
  %v1116 = vpop.f32.mrf.mxu0
  %v1117 = vadd.f32 %v1088, %v1116
  %1118 = vmatmul.f32.gmra.mxu0 %v43
  %v1119 = vpop.f32.mrf.mxu0
  %v1120 = vadd.f32 %v1091, %v1119
  %1121 = vdwg.mxu0
  %1122 = vmatpush.msra.mxu0 %v303
  %1123 = vmatpush.msra.mxu0 %v299
  %1124 = vmatpush.msra.mxu0 %v295
  %1125 = vmatpush.msra.mxu0 %v291
  %1126 = vmatpush.msra.mxu0 %v287
  %1127 = vmatpush.msra.mxu0 %v283
  %1128 = vmatpush.msra.mxu0 %v279
  %1129 = vmatpush.msra.mxu0 %v275
  %1130 = vmatpush.msra.mxu0 %v271
  %1131 = vmatpush.msra.mxu0 %v267
  %1132 = vmatpush.msra.mxu0 %v263
  %1133 = vmatpush.msra.mxu0 %v259
  %1134 = vmatpush.msra.mxu0 %v255
  %1135 = vmatpush.msra.mxu0 %v251
  %1136 = vmatpush.msra.mxu0 %v247
  %1137 = vmatpush.msra.mxu0 %v243
  %1138 = vmatmul.f32.gmra.mxu0 %v20
  %v1139 = vpop.f32.mrf.mxu0
  %v1140 = vadd.f32 %v1111, %v1139
  %1141 = vmatmul.f32.gmra.mxu0 %v28
  %v1142 = vpop.f32.mrf.mxu0
  %v1143 = vadd.f32 %v1114, %v1142
  %1144 = vmatmul.f32.gmra.mxu0 %v36
  %v1145 = vpop.f32.mrf.mxu0
  %v1146 = vadd.f32 %v1117, %v1145
  %1147 = vmatmul.f32.gmra.mxu0 %v44
  %v1148 = vpop.f32.mrf.mxu0
  %v1149 = vadd.f32 %v1120, %v1148
  %1150 = vdwg.mxu0
  %1151 = vmatpush.msra.mxu0 %v367
  %1152 = vmatpush.msra.mxu0 %v363
  %1153 = vmatpush.msra.mxu0 %v359
  %1154 = vmatpush.msra.mxu0 %v355
  %1155 = vmatpush.msra.mxu0 %v351
  %1156 = vmatpush.msra.mxu0 %v347
  %1157 = vmatpush.msra.mxu0 %v343
  %1158 = vmatpush.msra.mxu0 %v339
  %1159 = vmatpush.msra.mxu0 %v335
  %1160 = vmatpush.msra.mxu0 %v331
  %1161 = vmatpush.msra.mxu0 %v327
  %1162 = vmatpush.msra.mxu0 %v323
  %1163 = vmatpush.msra.mxu0 %v319
  %1164 = vmatpush.msra.mxu0 %v315
  %1165 = vmatpush.msra.mxu0 %v311
  %1166 = vmatpush.msra.mxu0 %v307
  %1167 = vmatmul.f32.gmra.mxu0 %v21
  %v1168 = vpop.f32.mrf.mxu0
  %v1169 = vadd.f32 %v1140, %v1168
  %1170 = vmatmul.f32.gmra.mxu0 %v29
  %v1171 = vpop.f32.mrf.mxu0
  %v1172 = vadd.f32 %v1143, %v1171
  %1173 = vmatmul.f32.gmra.mxu0 %v37
  %v1174 = vpop.f32.mrf.mxu0
  %v1175 = vadd.f32 %v1146, %v1174
  %1176 = vmatmul.f32.gmra.mxu0 %v45
  %v1177 = vpop.f32.mrf.mxu0
  %v1178 = vadd.f32 %v1149, %v1177
  %1179 = vdwg.mxu0
  %1180 = vmatpush.msra.mxu0 %v431
  %1181 = vmatpush.msra.mxu0 %v427
  %1182 = vmatpush.msra.mxu0 %v423
  %1183 = vmatpush.msra.mxu0 %v419
  %1184 = vmatpush.msra.mxu0 %v415
  %1185 = vmatpush.msra.mxu0 %v411
  %1186 = vmatpush.msra.mxu0 %v407
  %1187 = vmatpush.msra.mxu0 %v403
  %1188 = vmatpush.msra.mxu0 %v399
  %1189 = vmatpush.msra.mxu0 %v395
  %1190 = vmatpush.msra.mxu0 %v391
  %1191 = vmatpush.msra.mxu0 %v387
  %1192 = vmatpush.msra.mxu0 %v383
  %1193 = vmatpush.msra.mxu0 %v379
  %1194 = vmatpush.msra.mxu0 %v375
  %1195 = vmatpush.msra.mxu0 %v371
  %1196 = vmatmul.f32.gmra.mxu0 %v22
  %v1197 = vpop.f32.mrf.mxu0
  %v1198 = vadd.f32 %v1169, %v1197
  %1199 = vmatmul.f32.gmra.mxu0 %v30
  %v1200 = vpop.f32.mrf.mxu0
  %v1201 = vadd.f32 %v1172, %v1200
  %1202 = vmatmul.f32.gmra.mxu0 %v38
  %v1203 = vpop.f32.mrf.mxu0
  %v1204 = vadd.f32 %v1175, %v1203
  %1205 = vmatmul.f32.gmra.mxu0 %v46
  %v1206 = vpop.f32.mrf.mxu0
  %v1207 = vadd.f32 %v1178, %v1206
  %1208 = vdwg.mxu0
  %1209 = vmatpush.msra.mxu0 %v495
  %1210 = vmatpush.msra.mxu0 %v491
  %1211 = vmatpush.msra.mxu0 %v487
  %1212 = vmatpush.msra.mxu0 %v483
  %1213 = vmatpush.msra.mxu0 %v479
  %1214 = vmatpush.msra.mxu0 %v475
  %1215 = vmatpush.msra.mxu0 %v471
  %1216 = vmatpush.msra.mxu0 %v467
  %1217 = vmatpush.msra.mxu0 %v463
  %1218 = vmatpush.msra.mxu0 %v459
  %1219 = vmatpush.msra.mxu0 %v455
  %1220 = vmatpush.msra.mxu0 %v451
  %1221 = vmatpush.msra.mxu0 %v447
  %1222 = vmatpush.msra.mxu0 %v443
  %1223 = vmatpush.msra.mxu0 %v439
  %1224 = vmatpush.msra.mxu0 %v435
  %1225 = vmatmul.f32.gmra.mxu0 %v23
  %v1226 = vpop.f32.mrf.mxu0
  %v1227 = vadd.f32 %v1198, %v1226
  %1228 = vmatmul.f32.gmra.mxu0 %v31
  %v1229 = vpop.f32.mrf.mxu0
  %v1230 = vadd.f32 %v1201, %v1229
  %1231 = vmatmul.f32.gmra.mxu0 %v39
  %v1232 = vpop.f32.mrf.mxu0
  %v1233 = vadd.f32 %v1204, %v1232
  %1234 = vmatmul.f32.gmra.mxu0 %v47
  %v1235 = vpop.f32.mrf.mxu0
  %v1236 = vadd.f32 %v1207, %v1235
  %1237 = vdwg.mxu0
  %1238 = vmatpush.msra.mxu0 %v559
  %1239 = vmatpush.msra.mxu0 %v555
  %1240 = vmatpush.msra.mxu0 %v551
  %1241 = vmatpush.msra.mxu0 %v547
  %1242 = vmatpush.msra.mxu0 %v543
  %1243 = vmatpush.msra.mxu0 %v539
  %1244 = vmatpush.msra.mxu0 %v535
  %1245 = vmatpush.msra.mxu0 %v531
  %1246 = vmatpush.msra.mxu0 %v527
  %1247 = vmatpush.msra.mxu0 %v523
  %1248 = vmatpush.msra.mxu0 %v519
  %1249 = vmatpush.msra.mxu0 %v515
  %1250 = vmatpush.msra.mxu0 %v511
  %1251 = vmatpush.msra.mxu0 %v507
  %1252 = vmatpush.msra.mxu0 %v503
  %1253 = vmatpush.msra.mxu0 %v499
  %1254 = vmatmul.f32.gmra.mxu0 %v24
  %v1255 = vpop.f32.mrf.mxu0
  %v1256 = vadd.f32 %v1227, %v1255
  %1257 = vmatmul.f32.gmra.mxu0 %v32
  %v1258 = vpop.f32.mrf.mxu0
  %v1259 = vadd.f32 %v1230, %v1258
  %1260 = vmatmul.f32.gmra.mxu0 %v40
  %v1261 = vpop.f32.mrf.mxu0
  %v1262 = vadd.f32 %v1233, %v1261
  %1263 = vmatmul.f32.gmra.mxu0 %v48
  %v1264 = vpop.f32.mrf.mxu0
  %v1265 = vadd.f32 %v1236, %v1264
  %1266 = vdwg.mxu0
  %1267 = vmatpush.msra.mxu0 %v112
  %1268 = vmatpush.msra.mxu0 %v108
  %1269 = vmatpush.msra.mxu0 %v104
  %1270 = vmatpush.msra.mxu0 %v100
  %1271 = vmatpush.msra.mxu0 %v96
  %1272 = vmatpush.msra.mxu0 %v92
  %1273 = vmatpush.msra.mxu0 %v88
  %1274 = vmatpush.msra.mxu0 %v84
  %1275 = vmatpush.msra.mxu0 %v80
  %1276 = vmatpush.msra.mxu0 %v76
  %1277 = vmatpush.msra.mxu0 %v72
  %1278 = vmatpush.msra.mxu0 %v68
  %1279 = vmatpush.msra.mxu0 %v64
  %1280 = vmatpush.msra.mxu0 %v60
  %1281 = vmatpush.msra.mxu0 %v56
  %1282 = vmatpush.msra.mxu0 %v52
  %1283 = vmatmul.f32.gmra.mxu0 %v17
  %v1284 = vpop.f32.mrf.mxu0
  %v1285 = vadd.f32 %v566, %v1284
  %1286 = vmatmul.f32.gmra.mxu0 %v25
  %v1287 = vpop.f32.mrf.mxu0
  %v1288 = vadd.f32 %v566, %v1287
  %1289 = vmatmul.f32.gmra.mxu0 %v33
  %v1290 = vpop.f32.mrf.mxu0
  %v1291 = vadd.f32 %v566, %v1290
  %1292 = vmatmul.f32.gmra.mxu0 %v41
  %v1293 = vpop.f32.mrf.mxu0
  %v1294 = vadd.f32 %v566, %v1293
  %1295 = vdwg.mxu0
  %1296 = vmatpush.msra.mxu0 %v176
  %1297 = vmatpush.msra.mxu0 %v172
  %1298 = vmatpush.msra.mxu0 %v168
  %1299 = vmatpush.msra.mxu0 %v164
  %1300 = vmatpush.msra.mxu0 %v160
  %1301 = vmatpush.msra.mxu0 %v156
  %1302 = vmatpush.msra.mxu0 %v152
  %1303 = vmatpush.msra.mxu0 %v148
  %1304 = vmatpush.msra.mxu0 %v144
  %1305 = vmatpush.msra.mxu0 %v140
  %1306 = vmatpush.msra.mxu0 %v136
  %1307 = vmatpush.msra.mxu0 %v132
  %1308 = vmatpush.msra.mxu0 %v128
  %1309 = vmatpush.msra.mxu0 %v124
  %1310 = vmatpush.msra.mxu0 %v120
  %1311 = vmatpush.msra.mxu0 %v116
  %1312 = vmatmul.f32.gmra.mxu0 %v18
  %v1313 = vpop.f32.mrf.mxu0
  %v1314 = vadd.f32 %v1285, %v1313
  %1315 = vmatmul.f32.gmra.mxu0 %v26
  %v1316 = vpop.f32.mrf.mxu0
  %v1317 = vadd.f32 %v1288, %v1316
  %1318 = vmatmul.f32.gmra.mxu0 %v34
  %v1319 = vpop.f32.mrf.mxu0
  %v1320 = vadd.f32 %v1291, %v1319
  %1321 = vmatmul.f32.gmra.mxu0 %v42
  %v1322 = vpop.f32.mrf.mxu0
  %v1323 = vadd.f32 %v1294, %v1322
  %1324 = vdwg.mxu0
  %1325 = vmatpush.msra.mxu0 %v240
  %1326 = vmatpush.msra.mxu0 %v236
  %1327 = vmatpush.msra.mxu0 %v232
  %1328 = vmatpush.msra.mxu0 %v228
  %1329 = vmatpush.msra.mxu0 %v224
  %1330 = vmatpush.msra.mxu0 %v220
  %1331 = vmatpush.msra.mxu0 %v216
  %1332 = vmatpush.msra.mxu0 %v212
  %1333 = vmatpush.msra.mxu0 %v208
  %1334 = vmatpush.msra.mxu0 %v204
  %1335 = vmatpush.msra.mxu0 %v200
  %1336 = vmatpush.msra.mxu0 %v196
  %1337 = vmatpush.msra.mxu0 %v192
  %1338 = vmatpush.msra.mxu0 %v188
  %1339 = vmatpush.msra.mxu0 %v184
  %1340 = vmatpush.msra.mxu0 %v180
  %1341 = vmatmul.f32.gmra.mxu0 %v19
  %v1342 = vpop.f32.mrf.mxu0
  %v1343 = vadd.f32 %v1314, %v1342
  %1344 = vmatmul.f32.gmra.mxu0 %v27
  %v1345 = vpop.f32.mrf.mxu0
  %v1346 = vadd.f32 %v1317, %v1345
  %1347 = vmatmul.f32.gmra.mxu0 %v35
  %v1348 = vpop.f32.mrf.mxu0
  %v1349 = vadd.f32 %v1320, %v1348
  %1350 = vmatmul.f32.gmra.mxu0 %v43
  %v1351 = vpop.f32.mrf.mxu0
  %v1352 = vadd.f32 %v1323, %v1351
  %1353 = vdwg.mxu0
  %1354 = vmatpush.msra.mxu0 %v304
  %1355 = vmatpush.msra.mxu0 %v300
  %1356 = vmatpush.msra.mxu0 %v296
  %1357 = vmatpush.msra.mxu0 %v292
  %1358 = vmatpush.msra.mxu0 %v288
  %1359 = vmatpush.msra.mxu0 %v284
  %1360 = vmatpush.msra.mxu0 %v280
  %1361 = vmatpush.msra.mxu0 %v276
  %1362 = vmatpush.msra.mxu0 %v272
  %1363 = vmatpush.msra.mxu0 %v268
  %1364 = vmatpush.msra.mxu0 %v264
  %1365 = vmatpush.msra.mxu0 %v260
  %1366 = vmatpush.msra.mxu0 %v256
  %1367 = vmatpush.msra.mxu0 %v252
  %1368 = vmatpush.msra.mxu0 %v248
  %1369 = vmatpush.msra.mxu0 %v244
  %1370 = vmatmul.f32.gmra.mxu0 %v20
  %v1371 = vpop.f32.mrf.mxu0
  %v1372 = vadd.f32 %v1343, %v1371
  %1373 = vmatmul.f32.gmra.mxu0 %v28
  %v1374 = vpop.f32.mrf.mxu0
  %v1375 = vadd.f32 %v1346, %v1374
  %1376 = vmatmul.f32.gmra.mxu0 %v36
  %v1377 = vpop.f32.mrf.mxu0
  %v1378 = vadd.f32 %v1349, %v1377
  %1379 = vmatmul.f32.gmra.mxu0 %v44
  %v1380 = vpop.f32.mrf.mxu0
  %v1381 = vadd.f32 %v1352, %v1380
  %1382 = vdwg.mxu0
  %1383 = vmatpush.msra.mxu0 %v368
  %1384 = vmatpush.msra.mxu0 %v364
  %1385 = vmatpush.msra.mxu0 %v360
  %1386 = vmatpush.msra.mxu0 %v356
  %1387 = vmatpush.msra.mxu0 %v352
  %1388 = vmatpush.msra.mxu0 %v348
  %1389 = vmatpush.msra.mxu0 %v344
  %1390 = vmatpush.msra.mxu0 %v340
  %1391 = vmatpush.msra.mxu0 %v336
  %1392 = vmatpush.msra.mxu0 %v332
  %1393 = vmatpush.msra.mxu0 %v328
  %1394 = vmatpush.msra.mxu0 %v324
  %1395 = vmatpush.msra.mxu0 %v320
  %1396 = vmatpush.msra.mxu0 %v316
  %1397 = vmatpush.msra.mxu0 %v312
  %1398 = vmatpush.msra.mxu0 %v308
  %1399 = vmatmul.f32.gmra.mxu0 %v21
  %v1400 = vpop.f32.mrf.mxu0
  %v1401 = vadd.f32 %v1372, %v1400
  %1402 = vmatmul.f32.gmra.mxu0 %v29
  %v1403 = vpop.f32.mrf.mxu0
  %v1404 = vadd.f32 %v1375, %v1403
  %1405 = vmatmul.f32.gmra.mxu0 %v37
  %v1406 = vpop.f32.mrf.mxu0
  %v1407 = vadd.f32 %v1378, %v1406
  %1408 = vmatmul.f32.gmra.mxu0 %v45
  %v1409 = vpop.f32.mrf.mxu0
  %v1410 = vadd.f32 %v1381, %v1409
  %1411 = vdwg.mxu0
  %1412 = vmatpush.msra.mxu0 %v432
  %1413 = vmatpush.msra.mxu0 %v428
  %1414 = vmatpush.msra.mxu0 %v424
  %1415 = vmatpush.msra.mxu0 %v420
  %1416 = vmatpush.msra.mxu0 %v416
  %1417 = vmatpush.msra.mxu0 %v412
  %1418 = vmatpush.msra.mxu0 %v408
  %1419 = vmatpush.msra.mxu0 %v404
  %1420 = vmatpush.msra.mxu0 %v400
  %1421 = vmatpush.msra.mxu0 %v396
  %1422 = vmatpush.msra.mxu0 %v392
  %1423 = vmatpush.msra.mxu0 %v388
  %1424 = vmatpush.msra.mxu0 %v384
  %1425 = vmatpush.msra.mxu0 %v380
  %1426 = vmatpush.msra.mxu0 %v376
  %1427 = vmatpush.msra.mxu0 %v372
  %1428 = vmatmul.f32.gmra.mxu0 %v22
  %v1429 = vpop.f32.mrf.mxu0
  %v1430 = vadd.f32 %v1401, %v1429
  %1431 = vmatmul.f32.gmra.mxu0 %v30
  %v1432 = vpop.f32.mrf.mxu0
  %v1433 = vadd.f32 %v1404, %v1432
  %1434 = vmatmul.f32.gmra.mxu0 %v38
  %v1435 = vpop.f32.mrf.mxu0
  %v1436 = vadd.f32 %v1407, %v1435
  %1437 = vmatmul.f32.gmra.mxu0 %v46
  %v1438 = vpop.f32.mrf.mxu0
  %v1439 = vadd.f32 %v1410, %v1438
  %1440 = vdwg.mxu0
  %1441 = vmatpush.msra.mxu0 %v496
  %1442 = vmatpush.msra.mxu0 %v492
  %1443 = vmatpush.msra.mxu0 %v488
  %1444 = vmatpush.msra.mxu0 %v484
  %1445 = vmatpush.msra.mxu0 %v480
  %1446 = vmatpush.msra.mxu0 %v476
  %1447 = vmatpush.msra.mxu0 %v472
  %1448 = vmatpush.msra.mxu0 %v468
  %1449 = vmatpush.msra.mxu0 %v464
  %1450 = vmatpush.msra.mxu0 %v460
  %1451 = vmatpush.msra.mxu0 %v456
  %1452 = vmatpush.msra.mxu0 %v452
  %1453 = vmatpush.msra.mxu0 %v448
  %1454 = vmatpush.msra.mxu0 %v444
  %1455 = vmatpush.msra.mxu0 %v440
  %1456 = vmatpush.msra.mxu0 %v436
  %1457 = vmatmul.f32.gmra.mxu0 %v23
  %v1458 = vpop.f32.mrf.mxu0
  %v1459 = vadd.f32 %v1430, %v1458
  %1460 = vmatmul.f32.gmra.mxu0 %v31
  %v1461 = vpop.f32.mrf.mxu0
  %v1462 = vadd.f32 %v1433, %v1461
  %1463 = vmatmul.f32.gmra.mxu0 %v39
  %v1464 = vpop.f32.mrf.mxu0
  %v1465 = vadd.f32 %v1436, %v1464
  %1466 = vmatmul.f32.gmra.mxu0 %v47
  %v1467 = vpop.f32.mrf.mxu0
  %v1468 = vadd.f32 %v1439, %v1467
  %1469 = vdwg.mxu0
  %1470 = vmatpush.msra.mxu0 %v560
  %1471 = vmatpush.msra.mxu0 %v556
  %1472 = vmatpush.msra.mxu0 %v552
  %1473 = vmatpush.msra.mxu0 %v548
  %1474 = vmatpush.msra.mxu0 %v544
  %1475 = vmatpush.msra.mxu0 %v540
  %1476 = vmatpush.msra.mxu0 %v536
  %1477 = vmatpush.msra.mxu0 %v532
  %1478 = vmatpush.msra.mxu0 %v528
  %1479 = vmatpush.msra.mxu0 %v524
  %1480 = vmatpush.msra.mxu0 %v520
  %1481 = vmatpush.msra.mxu0 %v516
  %1482 = vmatpush.msra.mxu0 %v512
  %1483 = vmatpush.msra.mxu0 %v508
  %1484 = vmatpush.msra.mxu0 %v504
  %1485 = vmatpush.msra.mxu0 %v500
  %1486 = vmatmul.f32.gmra.mxu0 %v24
  %v1487 = vpop.f32.mrf.mxu0
  %v1488 = vadd.f32 %v1459, %v1487
  %1489 = vmatmul.f32.gmra.mxu0 %v32
  %v1490 = vpop.f32.mrf.mxu0
  %v1491 = vadd.f32 %v1462, %v1490
  %1492 = vmatmul.f32.gmra.mxu0 %v40
  %v1493 = vpop.f32.mrf.mxu0
  %v1494 = vadd.f32 %v1465, %v1493
  %1495 = vmatmul.f32.gmra.mxu0 %v48
  %v1496 = vpop.f32.mrf.mxu0
  %v1497 = vadd.f32 %v1468, %v1496
  %1498 = vdwg.mxu0
  %1499 = vst [vmem:[%s3] sm:$0xff] %v792
  %1500 = vst [vmem:[%s3 + $0x8] sm:$0xff] %v1024
  %1501 = vst [vmem:[%s3 + $0x10] sm:$0xff] %v1256
  %1502 = vst [vmem:[%s3 + $0x18] sm:$0xff] %v1488
  %1503 = vst [vmem:[%s3 + $0x20] sm:$0xff] %v795
  %1504 = vst [vmem:[%s3 + $0x28] sm:$0xff] %v1027
  %1505 = vst [vmem:[%s3 + $0x30] sm:$0xff] %v1259
  %1506 = vst [vmem:[%s3 + $0x38] sm:$0xff] %v1491
  %1507 = vst [vmem:[%s3 + $0x40] sm:$0xff] %v798
  %1508 = vst [vmem:[%s3 + $0x48] sm:$0xff] %v1030
  %1509 = vst [vmem:[%s3 + $0x50] sm:$0xff] %v1262
  %1510 = vst [vmem:[%s3 + $0x58] sm:$0xff] %v1494
  %1511 = vst [vmem:[%s3 + $0x60] sm:$0xff] %v801
  %1512 = vst [vmem:[%s3 + $0x68] sm:$0xff] %v1033
  %1513 = vst [vmem:[%s3 + $0x70] sm:$0xff] %v1265
  %1514 = vst [vmem:[%s3 + $0x78] sm:$0xff] %v1497
  %v1515 = vadd.f32 %v792, %v795
  %v1516 = vadd.f32 %v1515, %v798
  %v1517 = vadd.f32 %v1516, %v801
  %v1518 = vrot.slane %v1517, 4
  %v1519 = vadd.f32 %v1517, %v1518
  %v1520 = vrot.slane %v1519, 2
  %v1521 = vadd.f32 %v1519, %v1520
  %v1522 = vrot.slane %v1521, 1
  %v1523 = vadd.f32 %v1521, %v1522
  %v1524 = vadd.f32 %v1024, %v1027
  %v1525 = vadd.f32 %v1524, %v1030
  %v1526 = vadd.f32 %v1525, %v1033
  %v1527 = vrot.slane %v1526, 4
  %v1528 = vadd.f32 %v1526, %v1527
  %v1529 = vrot.slane %v1528, 2
  %v1530 = vadd.f32 %v1528, %v1529
  %v1531 = vrot.slane %v1530, 1
  %v1532 = vadd.f32 %v1530, %v1531
  %v1533 = vadd.f32 %v1256, %v1259
  %v1534 = vadd.f32 %v1533, %v1262
  %v1535 = vadd.f32 %v1534, %v1265
  %v1536 = vrot.slane %v1535, 4
  %v1537 = vadd.f32 %v1535, %v1536
  %v1538 = vrot.slane %v1537, 2
  %v1539 = vadd.f32 %v1537, %v1538
  %v1540 = vrot.slane %v1539, 1
  %v1541 = vadd.f32 %v1539, %v1540
  %v1542 = vadd.f32 %v1488, %v1491
  %v1543 = vadd.f32 %v1542, %v1494
  %v1544 = vadd.f32 %v1543, %v1497
  %v1545 = vrot.slane %v1544, 4
  %v1546 = vadd.f32 %v1544, %v1545
  %v1547 = vrot.slane %v1546, 2
  %v1548 = vadd.f32 %v1546, %v1547
  %v1549 = vrot.slane %v1548, 1
  %v1550 = vadd.f32 %v1548, %v1549
  %1551 = vst [vmem:[%s4] sm:$0xff] %v1523
  %1552 = vst [vmem:[%s4 + $0x8] sm:$0xff] %v1532
  %1553 = vst [vmem:[%s4 + $0x10] sm:$0xff] %v1541
  %1554 = vst [vmem:[%s4 + $0x18] sm:$0xff] %v1550
  %v1555 = vmul.f32 %v792, %v792
  %v1556 = vmul.f32 %v1024, %v1024
  %v1557 = vmul.f32 %v1256, %v1256
  %v1558 = vmul.f32 %v1488, %v1488
  %v1559 = vmul.f32 %v795, %v795
  %v1560 = vmul.f32 %v1027, %v1027
  %v1561 = vmul.f32 %v1259, %v1259
  %v1562 = vmul.f32 %v1491, %v1491
  %v1563 = vmul.f32 %v798, %v798
  %v1564 = vmul.f32 %v1030, %v1030
  %v1565 = vmul.f32 %v1262, %v1262
  %v1566 = vmul.f32 %v1494, %v1494
  %v1567 = vmul.f32 %v801, %v801
  %v1568 = vmul.f32 %v1033, %v1033
  %v1569 = vmul.f32 %v1265, %v1265
  %v1570 = vmul.f32 %v1497, %v1497
  %v1571 = vadd.f32 %v1555, %v1559
  %v1572 = vadd.f32 %v1571, %v1563
  %v1573 = vadd.f32 %v1572, %v1567
  %v1574 = vrot.slane %v1573, 4
  %v1575 = vadd.f32 %v1573, %v1574
  %v1576 = vrot.slane %v1575, 2
  %v1577 = vadd.f32 %v1575, %v1576
  %v1578 = vrot.slane %v1577, 1
  %v1579 = vadd.f32 %v1577, %v1578
  %v1580 = vadd.f32 %v1556, %v1560
  %v1581 = vadd.f32 %v1580, %v1564
  %v1582 = vadd.f32 %v1581, %v1568
  %v1583 = vrot.slane %v1582, 4
  %v1584 = vadd.f32 %v1582, %v1583
  %v1585 = vrot.slane %v1584, 2
  %v1586 = vadd.f32 %v1584, %v1585
  %v1587 = vrot.slane %v1586, 1
  %v1588 = vadd.f32 %v1586, %v1587
  %v1589 = vadd.f32 %v1557, %v1561
  %v1590 = vadd.f32 %v1589, %v1565
  %v1591 = vadd.f32 %v1590, %v1569
  %v1592 = vrot.slane %v1591, 4
  %v1593 = vadd.f32 %v1591, %v1592
  %v1594 = vrot.slane %v1593, 2
  %v1595 = vadd.f32 %v1593, %v1594
  %v1596 = vrot.slane %v1595, 1
  %v1597 = vadd.f32 %v1595, %v1596
  %v1598 = vadd.f32 %v1558, %v1562
  %v1599 = vadd.f32 %v1598, %v1566
  %v1600 = vadd.f32 %v1599, %v1570
  %v1601 = vrot.slane %v1600, 4
  %v1602 = vadd.f32 %v1600, %v1601
  %v1603 = vrot.slane %v1602, 2
  %v1604 = vadd.f32 %v1602, %v1603
  %v1605 = vrot.slane %v1604, 1
  %v1606 = vadd.f32 %v1604, %v1605
  %1607 = vst [vmem:[%s5] sm:$0xff] %v1579
  %1608 = vst [vmem:[%s5 + $0x8] sm:$0xff] %v1588
  %1609 = vst [vmem:[%s5 + $0x10] sm:$0xff] %v1597
  %1610 = vst [vmem:[%s5 + $0x18] sm:$0xff] %v1606
  // Predicated region
  $region14: #{decoder_forward.7} parent=0 // pred_check
    _
  $region15: #{decoder_forward.7} parent=0 // pred_check_branch
    %1612 = sbr.rel (0) target = $region17
  $region16: #{decoder_forward.7} parent=0 // pred_region
    _
  $region17: #{decoder_forward.7} parent=0 // pred_fallthru
    _
  // Predicated region
  $region18: #{decoder_forward.7} parent=0 // pred_check
    _
  $region19: #{decoder_forward.7} parent=0 // pred_check_branch
    %1614 = sbr.rel (0) target = $region21
  $region20: #{decoder_forward.7} parent=0 // pred_region
    _
  $region21: #{decoder_forward.7} parent=0 // pred_fallthru
    _
  // Predicated region
  $region22: #{decoder_forward.7} parent=0 // pred_check
    _
  $region23: #{decoder_forward.7} parent=0 // pred_check_branch
    %1616 = sbr.rel (0) target = $region25
  $region24: #{decoder_forward.7} parent=0 // pred_region
    _
  $region25: #{decoder_forward.7} parent=0 // pred_fallthru
    _
  // Predicated region
  $region26: #{decoder_forward.7} parent=0 // pred_check
    _
  $region27: #{decoder_forward.7} parent=0 // pred_check_branch
    %1618 = sbr.rel (0) target = $region29
  $region28: #{decoder_forward.7} parent=0 // pred_region
    _
  $region29: #{decoder_forward.7} parent=0 // pred_fallthru
    _
  // Predicated region
  $region30: #{decoder_forward.7} parent=0 // pred_check
    _
  $region31: #{decoder_forward.7} parent=0 // pred_check_branch
    %1620 = sbr.rel (0) target = $region33
  $region32: #{decoder_forward.7} parent=0 // pred_region
    _
  $region33: #{decoder_forward.7} parent=0 // pred_fallthru
    _
  // Predicated region
  $region34: #{decoder_forward.7} parent=0 // pred_check
    _
  $region35: #{decoder_forward.7} parent=0 // pred_check_branch
    %1622 = sbr.rel (0) target = $region37
  $region36: #{decoder_forward.7} parent=0 // pred_region
    _
  $region37: #{decoder_forward.7} parent=0 // pred_fallthru
    _

// kernel: decoder_forward.9
$region0: #{decoder_forward.9}
  #allocation0 [shape = 'u32[]', space=smem, size = 0x4, offset = 0x4, fixed_abs, tag = 'smem constant byte address 0x4 - core index']
  #allocation1 [shape = 'u32[72,128]{1,0:T(1,128)}', space=vmem, size = 0x9000, scoped, tag = 'internal scratch']
  %s0 = inlined_call_operand.vmem [shape: f32[128,512], index: 0, kind: input, shape index: {}]
  %s1 = inlined_call_operand.vmem [shape: f32[512,256], index: 1, kind: input, shape index: {}]
  %s2 = inlined_call_operand.vmem [shape: f32[1,256], index: 2, kind: input, shape index: {}]
  %s3 = inlined_call_operand.vmem [shape: f32[128,256], index: 3, kind: output, shape index: {0}]
  %s4 = inlined_call_operand.vmem [shape: f32[8,256], index: 4, kind: output, shape index: {1}]
  %s5 = inlined_call_operand.vmem [shape: f32[8,256], index: 5, kind: output, shape index: {2}]
  %6 = xla_tuple %s3, %s4, %s5
  %s7 = sld [smem:[#allocation0]]
  $region38: #{decoder_forward.9} parent=0
    _
  %s9 = ssub.s32 1, %s7
  %s10 = scalar_select 0, %s9, %s7
  // Predicated region
  $region2: #{decoder_forward.9} parent=0 // pred_check
    _
  $region3: #{decoder_forward.9} parent=0 // pred_check_branch
    %12 = sbr.rel (0) target = $region5
  $region4: #{decoder_forward.9} parent=0 // pred_region
    _
  $region5: #{decoder_forward.9} parent=0 // pred_fallthru
    _
  // Predicated region
  $region6: #{decoder_forward.9} parent=0 // pred_check
    _
  $region7: #{decoder_forward.9} parent=0 // pred_check_branch
    %14 = sbr.rel (0) target = $region9
  $region8: #{decoder_forward.9} parent=0 // pred_region
    _
  $region9: #{decoder_forward.9} parent=0 // pred_fallthru
    _
  // Predicated region
  $region10: #{decoder_forward.9} parent=0 // pred_check
    _
  $region11: #{decoder_forward.9} parent=0 // pred_check_branch
    %16 = sbr.rel (0) target = $region13
  $region12: #{decoder_forward.9} parent=0 // pred_region
    _
  $region13: #{decoder_forward.9} parent=0 // pred_fallthru
    _
  %v17 = vld [vmem:[%s0] sm:$0xff]
  %v18 = vld [vmem:[%s0 + $0x8] sm:$0xff]
  %v19 = vld [vmem:[%s0 + $0x10] sm:$0xff]
  %v20 = vld [vmem:[%s0 + $0x18] sm:$0xff]
  %v21 = vld [vmem:[%s0 + $0x20] sm:$0xff]
  %v22 = vld [vmem:[%s0 + $0x28] sm:$0xff]
  %v23 = vld [vmem:[%s0 + $0x30] sm:$0xff]
  %v24 = vld [vmem:[%s0 + $0x38] sm:$0xff]
  %v25 = vld [vmem:[%s0 + $0x40] sm:$0xff]
  %v26 = vld [vmem:[%s0 + $0x48] sm:$0xff]
  %v27 = vld [vmem:[%s0 + $0x50] sm:$0xff]
  %v28 = vld [vmem:[%s0 + $0x58] sm:$0xff]
  %v29 = vld [vmem:[%s0 + $0x60] sm:$0xff]
  %v30 = vld [vmem:[%s0 + $0x68] sm:$0xff]
  %v31 = vld [vmem:[%s0 + $0x70] sm:$0xff]
  %v32 = vld [vmem:[%s0 + $0x78] sm:$0xff]
  %v33 = vld [vmem:[%s0 + $0x80] sm:$0xff]
  %v34 = vld [vmem:[%s0 + $0x88] sm:$0xff]
  %v35 = vld [vmem:[%s0 + $0x90] sm:$0xff]
  %v36 = vld [vmem:[%s0 + $0x98] sm:$0xff]
  %v37 = vld [vmem:[%s0 + $0xa0] sm:$0xff]
  %v38 = vld [vmem:[%s0 + $0xa8] sm:$0xff]
  %v39 = vld [vmem:[%s0 + $0xb0] sm:$0xff]
  %v40 = vld [vmem:[%s0 + $0xb8] sm:$0xff]
  %v41 = vld [vmem:[%s0 + $0xc0] sm:$0xff]
  %v42 = vld [vmem:[%s0 + $0xc8] sm:$0xff]
  %v43 = vld [vmem:[%s0 + $0xd0] sm:$0xff]
  %v44 = vld [vmem:[%s0 + $0xd8] sm:$0xff]
  %v45 = vld [vmem:[%s0 + $0xe0] sm:$0xff]
  %v46 = vld [vmem:[%s0 + $0xe8] sm:$0xff]
  %v47 = vld [vmem:[%s0 + $0xf0] sm:$0xff]
  %v48 = vld [vmem:[%s0 + $0xf8] sm:$0xff]
  %v49 = vld [vmem:[%s0 + $0x100] sm:$0xff]
  %v50 = vld [vmem:[%s0 + $0x108] sm:$0xff]
  %v51 = vld [vmem:[%s0 + $0x110] sm:$0xff]
  %v52 = vld [vmem:[%s0 + $0x118] sm:$0xff]
  %v53 = vld [vmem:[%s0 + $0x120] sm:$0xff]
  %v54 = vld [vmem:[%s0 + $0x128] sm:$0xff]
  %v55 = vld [vmem:[%s0 + $0x130] sm:$0xff]
  %v56 = vld [vmem:[%s0 + $0x138] sm:$0xff]
  %v57 = vld [vmem:[%s0 + $0x140] sm:$0xff]
  %v58 = vld [vmem:[%s0 + $0x148] sm:$0xff]
  %v59 = vld [vmem:[%s0 + $0x150] sm:$0xff]
  %v60 = vld [vmem:[%s0 + $0x158] sm:$0xff]
  %v61 = vld [vmem:[%s0 + $0x160] sm:$0xff]
  %v62 = vld [vmem:[%s0 + $0x168] sm:$0xff]
  %v63 = vld [vmem:[%s0 + $0x170] sm:$0xff]
  %v64 = vld [vmem:[%s0 + $0x178] sm:$0xff]
  %v65 = vld [vmem:[%s0 + $0x180] sm:$0xff]
  %v66 = vld [vmem:[%s0 + $0x188] sm:$0xff]
  %v67 = vld [vmem:[%s0 + $0x190] sm:$0xff]
  %v68 = vld [vmem:[%s0 + $0x198] sm:$0xff]
  %v69 = vld [vmem:[%s0 + $0x1a0] sm:$0xff]
  %v70 = vld [vmem:[%s0 + $0x1a8] sm:$0xff]
  %v71 = vld [vmem:[%s0 + $0x1b0] sm:$0xff]
  %v72 = vld [vmem:[%s0 + $0x1b8] sm:$0xff]
  %v73 = vld [vmem:[%s0 + $0x1c0] sm:$0xff]
  %v74 = vld [vmem:[%s0 + $0x1c8] sm:$0xff]
  %v75 = vld [vmem:[%s0 + $0x1d0] sm:$0xff]
  %v76 = vld [vmem:[%s0 + $0x1d8] sm:$0xff]
  %v77 = vld [vmem:[%s0 + $0x1e0] sm:$0xff]
  %v78 = vld [vmem:[%s0 + $0x1e8] sm:$0xff]
  %v79 = vld [vmem:[%s0 + $0x1f0] sm:$0xff]
  %v80 = vld [vmem:[%s0 + $0x1f8] sm:$0xff]
  %v81 = vld [vmem:[%s1] sm:$0xff]
  %v82 = vld [vmem:[%s1 + $0x8] sm:$0xff]
  %v83 = vld [vmem:[%s1 + $0x10] sm:$0xff]
  %v84 = vld [vmem:[%s1 + $0x18] sm:$0xff]
  %v85 = vld [vmem:[%s1 + $0x20] sm:$0xff]
  %v86 = vld [vmem:[%s1 + $0x28] sm:$0xff]
  %v87 = vld [vmem:[%s1 + $0x30] sm:$0xff]
  %v88 = vld [vmem:[%s1 + $0x38] sm:$0xff]
  %v89 = vld [vmem:[%s1 + $0x40] sm:$0xff]
  %v90 = vld [vmem:[%s1 + $0x48] sm:$0xff]
  %v91 = vld [vmem:[%s1 + $0x50] sm:$0xff]
  %v92 = vld [vmem:[%s1 + $0x58] sm:$0xff]
  %v93 = vld [vmem:[%s1 + $0x60] sm:$0xff]
  %v94 = vld [vmem:[%s1 + $0x68] sm:$0xff]
  %v95 = vld [vmem:[%s1 + $0x70] sm:$0xff]
  %v96 = vld [vmem:[%s1 + $0x78] sm:$0xff]
  %v97 = vld [vmem:[%s1 + $0x80] sm:$0xff]
  %v98 = vld [vmem:[%s1 + $0x88] sm:$0xff]
  %v99 = vld [vmem:[%s1 + $0x90] sm:$0xff]
  %v100 = vld [vmem:[%s1 + $0x98] sm:$0xff]
  %v101 = vld [vmem:[%s1 + $0xa0] sm:$0xff]
  %v102 = vld [vmem:[%s1 + $0xa8] sm:$0xff]
  %v103 = vld [vmem:[%s1 + $0xb0] sm:$0xff]
  %v104 = vld [vmem:[%s1 + $0xb8] sm:$0xff]
  %v105 = vld [vmem:[%s1 + $0xc0] sm:$0xff]
  %v106 = vld [vmem:[%s1 + $0xc8] sm:$0xff]
  %v107 = vld [vmem:[%s1 + $0xd0] sm:$0xff]
  %v108 = vld [vmem:[%s1 + $0xd8] sm:$0xff]
  %v109 = vld [vmem:[%s1 + $0xe0] sm:$0xff]
  %v110 = vld [vmem:[%s1 + $0xe8] sm:$0xff]
  %v111 = vld [vmem:[%s1 + $0xf0] sm:$0xff]
  %v112 = vld [vmem:[%s1 + $0xf8] sm:$0xff]
  %v113 = vld [vmem:[%s1 + $0x100] sm:$0xff]
  %v114 = vld [vmem:[%s1 + $0x108] sm:$0xff]
  %v115 = vld [vmem:[%s1 + $0x110] sm:$0xff]
  %v116 = vld [vmem:[%s1 + $0x118] sm:$0xff]
  %v117 = vld [vmem:[%s1 + $0x120] sm:$0xff]
  %v118 = vld [vmem:[%s1 + $0x128] sm:$0xff]
  %v119 = vld [vmem:[%s1 + $0x130] sm:$0xff]
  %v120 = vld [vmem:[%s1 + $0x138] sm:$0xff]
  %v121 = vld [vmem:[%s1 + $0x140] sm:$0xff]
  %v122 = vld [vmem:[%s1 + $0x148] sm:$0xff]
  %v123 = vld [vmem:[%s1 + $0x150] sm:$0xff]
  %v124 = vld [vmem:[%s1 + $0x158] sm:$0xff]
  %v125 = vld [vmem:[%s1 + $0x160] sm:$0xff]
  %v126 = vld [vmem:[%s1 + $0x168] sm:$0xff]
  %v127 = vld [vmem:[%s1 + $0x170] sm:$0xff]
  %v128 = vld [vmem:[%s1 + $0x178] sm:$0xff]
  %v129 = vld [vmem:[%s1 + $0x180] sm:$0xff]
  %v130 = vld [vmem:[%s1 + $0x188] sm:$0xff]
  %v131 = vld [vmem:[%s1 + $0x190] sm:$0xff]
  %v132 = vld [vmem:[%s1 + $0x198] sm:$0xff]
  %v133 = vld [vmem:[%s1 + $0x1a0] sm:$0xff]
  %v134 = vld [vmem:[%s1 + $0x1a8] sm:$0xff]
  %v135 = vld [vmem:[%s1 + $0x1b0] sm:$0xff]
  %v136 = vld [vmem:[%s1 + $0x1b8] sm:$0xff]
  %v137 = vld [vmem:[%s1 + $0x1c0] sm:$0xff]
  %v138 = vld [vmem:[%s1 + $0x1c8] sm:$0xff]
  %v139 = vld [vmem:[%s1 + $0x1d0] sm:$0xff]
  %v140 = vld [vmem:[%s1 + $0x1d8] sm:$0xff]
  %v141 = vld [vmem:[%s1 + $0x1e0] sm:$0xff]
  %v142 = vld [vmem:[%s1 + $0x1e8] sm:$0xff]
  %v143 = vld [vmem:[%s1 + $0x1f0] sm:$0xff]
  %v144 = vld [vmem:[%s1 + $0x1f8] sm:$0xff]
  %v145 = vld [vmem:[%s1 + $0x200] sm:$0xff]
  %v146 = vld [vmem:[%s1 + $0x208] sm:$0xff]
  %v147 = vld [vmem:[%s1 + $0x210] sm:$0xff]
  %v148 = vld [vmem:[%s1 + $0x218] sm:$0xff]
  %v149 = vld [vmem:[%s1 + $0x220] sm:$0xff]
  %v150 = vld [vmem:[%s1 + $0x228] sm:$0xff]
  %v151 = vld [vmem:[%s1 + $0x230] sm:$0xff]
  %v152 = vld [vmem:[%s1 + $0x238] sm:$0xff]
  %v153 = vld [vmem:[%s1 + $0x240] sm:$0xff]
  %v154 = vld [vmem:[%s1 + $0x248] sm:$0xff]
  %v155 = vld [vmem:[%s1 + $0x250] sm:$0xff]
  %v156 = vld [vmem:[%s1 + $0x258] sm:$0xff]
  %v157 = vld [vmem:[%s1 + $0x260] sm:$0xff]
  %v158 = vld [vmem:[%s1 + $0x268] sm:$0xff]
  %v159 = vld [vmem:[%s1 + $0x270] sm:$0xff]
  %v160 = vld [vmem:[%s1 + $0x278] sm:$0xff]
  %v161 = vld [vmem:[%s1 + $0x280] sm:$0xff]
  %v162 = vld [vmem:[%s1 + $0x288] sm:$0xff]
  %v163 = vld [vmem:[%s1 + $0x290] sm:$0xff]
  %v164 = vld [vmem:[%s1 + $0x298] sm:$0xff]
  %v165 = vld [vmem:[%s1 + $0x2a0] sm:$0xff]
  %v166 = vld [vmem:[%s1 + $0x2a8] sm:$0xff]
  %v167 = vld [vmem:[%s1 + $0x2b0] sm:$0xff]
  %v168 = vld [vmem:[%s1 + $0x2b8] sm:$0xff]
  %v169 = vld [vmem:[%s1 + $0x2c0] sm:$0xff]
  %v170 = vld [vmem:[%s1 + $0x2c8] sm:$0xff]
  %v171 = vld [vmem:[%s1 + $0x2d0] sm:$0xff]
  %v172 = vld [vmem:[%s1 + $0x2d8] sm:$0xff]
  %v173 = vld [vmem:[%s1 + $0x2e0] sm:$0xff]
  %v174 = vld [vmem:[%s1 + $0x2e8] sm:$0xff]
  %v175 = vld [vmem:[%s1 + $0x2f0] sm:$0xff]
  %v176 = vld [vmem:[%s1 + $0x2f8] sm:$0xff]
  %v177 = vld [vmem:[%s1 + $0x300] sm:$0xff]
  %v178 = vld [vmem:[%s1 + $0x308] sm:$0xff]
  %v179 = vld [vmem:[%s1 + $0x310] sm:$0xff]
  %v180 = vld [vmem:[%s1 + $0x318] sm:$0xff]
  %v181 = vld [vmem:[%s1 + $0x320] sm:$0xff]
  %v182 = vld [vmem:[%s1 + $0x328] sm:$0xff]
  %v183 = vld [vmem:[%s1 + $0x330] sm:$0xff]
  %v184 = vld [vmem:[%s1 + $0x338] sm:$0xff]
  %v185 = vld [vmem:[%s1 + $0x340] sm:$0xff]
  %v186 = vld [vmem:[%s1 + $0x348] sm:$0xff]
  %v187 = vld [vmem:[%s1 + $0x350] sm:$0xff]
  %v188 = vld [vmem:[%s1 + $0x358] sm:$0xff]
  %v189 = vld [vmem:[%s1 + $0x360] sm:$0xff]
  %v190 = vld [vmem:[%s1 + $0x368] sm:$0xff]
  %v191 = vld [vmem:[%s1 + $0x370] sm:$0xff]
  %v192 = vld [vmem:[%s1 + $0x378] sm:$0xff]
  %v193 = vld [vmem:[%s1 + $0x380] sm:$0xff]
  %v194 = vld [vmem:[%s1 + $0x388] sm:$0xff]
  %v195 = vld [vmem:[%s1 + $0x390] sm:$0xff]
  %v196 = vld [vmem:[%s1 + $0x398] sm:$0xff]
  %v197 = vld [vmem:[%s1 + $0x3a0] sm:$0xff]
  %v198 = vld [vmem:[%s1 + $0x3a8] sm:$0xff]
  %v199 = vld [vmem:[%s1 + $0x3b0] sm:$0xff]
  %v200 = vld [vmem:[%s1 + $0x3b8] sm:$0xff]
  %v201 = vld [vmem:[%s1 + $0x3c0] sm:$0xff]
  %v202 = vld [vmem:[%s1 + $0x3c8] sm:$0xff]
  %v203 = vld [vmem:[%s1 + $0x3d0] sm:$0xff]
  %v204 = vld [vmem:[%s1 + $0x3d8] sm:$0xff]
  %v205 = vld [vmem:[%s1 + $0x3e0] sm:$0xff]
  %v206 = vld [vmem:[%s1 + $0x3e8] sm:$0xff]
  %v207 = vld [vmem:[%s1 + $0x3f0] sm:$0xff]
  %v208 = vld [vmem:[%s1 + $0x3f8] sm:$0xff]
  %v209 = vld [vmem:[%s2] sm:$0x3]
  %v211 = vperm.slane %v209, 0
  %v212 = vperm.slane %v209, 1
  %215 = vmatpush.msra.mxu0 %v111
  %216 = vmatpush.msra.mxu0 %v109
  %217 = vmatpush.msra.mxu0 %v107
  %218 = vmatpush.msra.mxu0 %v105
  %219 = vmatpush.msra.mxu0 %v103
  %220 = vmatpush.msra.mxu0 %v101
  %221 = vmatpush.msra.mxu0 %v99
  %222 = vmatpush.msra.mxu0 %v97
  %223 = vmatpush.msra.mxu0 %v95
  %224 = vmatpush.msra.mxu0 %v93
  %225 = vmatpush.msra.mxu0 %v91
  %226 = vmatpush.msra.mxu0 %v89
  %227 = vmatpush.msra.mxu0 %v87
  %228 = vmatpush.msra.mxu0 %v85
  %229 = vmatpush.msra.mxu0 %v83
  %230 = vmatpush.msra.mxu0 %v81
  %231 = vmatmul.f32.gmra.mxu0 %v17
  %v232 = vpop.f32.mrf.mxu0
  %v233 = vadd.f32 %v211, %v232
  %234 = vmatmul.f32.gmra.mxu0 %v21
  %v235 = vpop.f32.mrf.mxu0
  %v236 = vadd.f32 %v211, %v235
  %237 = vmatmul.f32.gmra.mxu0 %v25
  %v238 = vpop.f32.mrf.mxu0
  %v239 = vadd.f32 %v211, %v238
  %240 = vmatmul.f32.gmra.mxu0 %v29
  %v241 = vpop.f32.mrf.mxu0
  %v242 = vadd.f32 %v211, %v241
  %243 = vmatmul.f32.gmra.mxu0 %v33
  %v244 = vpop.f32.mrf.mxu0
  %v245 = vadd.f32 %v211, %v244
  %246 = vmatmul.f32.gmra.mxu0 %v37
  %v247 = vpop.f32.mrf.mxu0
  %v248 = vadd.f32 %v211, %v247
  %249 = vmatmul.f32.gmra.mxu0 %v41
  %v250 = vpop.f32.mrf.mxu0
  %v251 = vadd.f32 %v211, %v250
  %252 = vmatmul.f32.gmra.mxu0 %v45
  %v253 = vpop.f32.mrf.mxu0
  %v254 = vadd.f32 %v211, %v253
  %255 = vmatmul.f32.gmra.mxu0 %v49
  %v256 = vpop.f32.mrf.mxu0
  %v257 = vadd.f32 %v211, %v256
  %258 = vmatmul.f32.gmra.mxu0 %v53
  %v259 = vpop.f32.mrf.mxu0
  %v260 = vadd.f32 %v211, %v259
  %261 = vmatmul.f32.gmra.mxu0 %v57
  %v262 = vpop.f32.mrf.mxu0
  %v263 = vadd.f32 %v211, %v262
  %264 = vmatmul.f32.gmra.mxu0 %v61
  %v265 = vpop.f32.mrf.mxu0
  %v266 = vadd.f32 %v211, %v265
  %267 = vmatmul.f32.gmra.mxu0 %v65
  %v268 = vpop.f32.mrf.mxu0
  %v269 = vadd.f32 %v211, %v268
  %270 = vmatmul.f32.gmra.mxu0 %v69
  %v271 = vpop.f32.mrf.mxu0
  %v272 = vadd.f32 %v211, %v271
  %273 = vmatmul.f32.gmra.mxu0 %v73
  %v274 = vpop.f32.mrf.mxu0
  %v275 = vadd.f32 %v211, %v274
  %276 = vmatmul.f32.gmra.mxu0 %v77
  %v277 = vpop.f32.mrf.mxu0
  %v278 = vadd.f32 %v211, %v277
  %279 = vdwg.mxu0
  %280 = vmatpush.msra.mxu0 %v143
  %281 = vmatpush.msra.mxu0 %v141
  %282 = vmatpush.msra.mxu0 %v139
  %283 = vmatpush.msra.mxu0 %v137
  %284 = vmatpush.msra.mxu0 %v135
  %285 = vmatpush.msra.mxu0 %v133
  %286 = vmatpush.msra.mxu0 %v131
  %287 = vmatpush.msra.mxu0 %v129
  %288 = vmatpush.msra.mxu0 %v127
  %289 = vmatpush.msra.mxu0 %v125
  %290 = vmatpush.msra.mxu0 %v123
  %291 = vmatpush.msra.mxu0 %v121
  %292 = vmatpush.msra.mxu0 %v119
  %293 = vmatpush.msra.mxu0 %v117
  %294 = vmatpush.msra.mxu0 %v115
  %295 = vmatpush.msra.mxu0 %v113
  %296 = vmatmul.f32.gmra.mxu0 %v18
  %v297 = vpop.f32.mrf.mxu0
  %v298 = vadd.f32 %v233, %v297
  %299 = vmatmul.f32.gmra.mxu0 %v22
  %v300 = vpop.f32.mrf.mxu0
  %v301 = vadd.f32 %v236, %v300
  %302 = vmatmul.f32.gmra.mxu0 %v26
  %v303 = vpop.f32.mrf.mxu0
  %v304 = vadd.f32 %v239, %v303
  %305 = vmatmul.f32.gmra.mxu0 %v30
  %v306 = vpop.f32.mrf.mxu0
  %v307 = vadd.f32 %v242, %v306
  %308 = vmatmul.f32.gmra.mxu0 %v34
  %v309 = vpop.f32.mrf.mxu0
  %v310 = vadd.f32 %v245, %v309
  %311 = vmatmul.f32.gmra.mxu0 %v38
  %v312 = vpop.f32.mrf.mxu0
  %v313 = vadd.f32 %v248, %v312
  %314 = vmatmul.f32.gmra.mxu0 %v42
  %v315 = vpop.f32.mrf.mxu0
  %v316 = vadd.f32 %v251, %v315
  %317 = vmatmul.f32.gmra.mxu0 %v46
  %v318 = vpop.f32.mrf.mxu0
  %v319 = vadd.f32 %v254, %v318
  %320 = vmatmul.f32.gmra.mxu0 %v50
  %v321 = vpop.f32.mrf.mxu0
  %v322 = vadd.f32 %v257, %v321
  %323 = vmatmul.f32.gmra.mxu0 %v54
  %v324 = vpop.f32.mrf.mxu0
  %v325 = vadd.f32 %v260, %v324
  %326 = vmatmul.f32.gmra.mxu0 %v58
  %v327 = vpop.f32.mrf.mxu0
  %v328 = vadd.f32 %v263, %v327
  %329 = vmatmul.f32.gmra.mxu0 %v62
  %v330 = vpop.f32.mrf.mxu0
  %v331 = vadd.f32 %v266, %v330
  %332 = vmatmul.f32.gmra.mxu0 %v66
  %v333 = vpop.f32.mrf.mxu0
  %v334 = vadd.f32 %v269, %v333
  %335 = vmatmul.f32.gmra.mxu0 %v70
  %v336 = vpop.f32.mrf.mxu0
  %v337 = vadd.f32 %v272, %v336
  %338 = vmatmul.f32.gmra.mxu0 %v74
  %v339 = vpop.f32.mrf.mxu0
  %v340 = vadd.f32 %v275, %v339
  %341 = vmatmul.f32.gmra.mxu0 %v78
  %v342 = vpop.f32.mrf.mxu0
  %v343 = vadd.f32 %v278, %v342
  %344 = vdwg.mxu0
  %345 = vmatpush.msra.mxu0 %v175
  %346 = vmatpush.msra.mxu0 %v173
  %347 = vmatpush.msra.mxu0 %v171
  %348 = vmatpush.msra.mxu0 %v169
  %349 = vmatpush.msra.mxu0 %v167
  %350 = vmatpush.msra.mxu0 %v165
  %351 = vmatpush.msra.mxu0 %v163
  %352 = vmatpush.msra.mxu0 %v161
  %353 = vmatpush.msra.mxu0 %v159
  %354 = vmatpush.msra.mxu0 %v157
  %355 = vmatpush.msra.mxu0 %v155
  %356 = vmatpush.msra.mxu0 %v153
  %357 = vmatpush.msra.mxu0 %v151
  %358 = vmatpush.msra.mxu0 %v149
  %359 = vmatpush.msra.mxu0 %v147
  %360 = vmatpush.msra.mxu0 %v145
  %361 = vmatmul.f32.gmra.mxu0 %v19
  %v362 = vpop.f32.mrf.mxu0
  %v363 = vadd.f32 %v298, %v362
  %364 = vmatmul.f32.gmra.mxu0 %v23
  %v365 = vpop.f32.mrf.mxu0
  %v366 = vadd.f32 %v301, %v365
  %367 = vmatmul.f32.gmra.mxu0 %v27
  %v368 = vpop.f32.mrf.mxu0
  %v369 = vadd.f32 %v304, %v368
  %370 = vmatmul.f32.gmra.mxu0 %v31
  %v371 = vpop.f32.mrf.mxu0
  %v372 = vadd.f32 %v307, %v371
  %373 = vmatmul.f32.gmra.mxu0 %v35
  %v374 = vpop.f32.mrf.mxu0
  %v375 = vadd.f32 %v310, %v374
  %376 = vmatmul.f32.gmra.mxu0 %v39
  %v377 = vpop.f32.mrf.mxu0
  %v378 = vadd.f32 %v313, %v377
  %379 = vmatmul.f32.gmra.mxu0 %v43
  %v380 = vpop.f32.mrf.mxu0
  %v381 = vadd.f32 %v316, %v380
  %382 = vmatmul.f32.gmra.mxu0 %v47
  %v383 = vpop.f32.mrf.mxu0
  %v384 = vadd.f32 %v319, %v383
  %385 = vmatmul.f32.gmra.mxu0 %v51
  %v386 = vpop.f32.mrf.mxu0
  %v387 = vadd.f32 %v322, %v386
  %388 = vmatmul.f32.gmra.mxu0 %v55
  %v389 = vpop.f32.mrf.mxu0
  %v390 = vadd.f32 %v325, %v389
  %391 = vmatmul.f32.gmra.mxu0 %v59
  %v392 = vpop.f32.mrf.mxu0
  %v393 = vadd.f32 %v328, %v392
  %394 = vmatmul.f32.gmra.mxu0 %v63
  %v395 = vpop.f32.mrf.mxu0
  %v396 = vadd.f32 %v331, %v395
  %397 = vmatmul.f32.gmra.mxu0 %v67
  %v398 = vpop.f32.mrf.mxu0
  %v399 = vadd.f32 %v334, %v398
  %400 = vmatmul.f32.gmra.mxu0 %v71
  %v401 = vpop.f32.mrf.mxu0
  %v402 = vadd.f32 %v337, %v401
  %403 = vmatmul.f32.gmra.mxu0 %v75
  %v404 = vpop.f32.mrf.mxu0
  %v405 = vadd.f32 %v340, %v404
  %406 = vmatmul.f32.gmra.mxu0 %v79
  %v407 = vpop.f32.mrf.mxu0
  %v408 = vadd.f32 %v343, %v407
  %409 = vdwg.mxu0
  %410 = vmatpush.msra.mxu0 %v207
  %411 = vmatpush.msra.mxu0 %v205
  %412 = vmatpush.msra.mxu0 %v203
  %413 = vmatpush.msra.mxu0 %v201
  %414 = vmatpush.msra.mxu0 %v199
  %415 = vmatpush.msra.mxu0 %v197
  %416 = vmatpush.msra.mxu0 %v195
  %417 = vmatpush.msra.mxu0 %v193
  %418 = vmatpush.msra.mxu0 %v191
  %419 = vmatpush.msra.mxu0 %v189
  %420 = vmatpush.msra.mxu0 %v187
  %421 = vmatpush.msra.mxu0 %v185
  %422 = vmatpush.msra.mxu0 %v183
  %423 = vmatpush.msra.mxu0 %v181
  %424 = vmatpush.msra.mxu0 %v179
  %425 = vmatpush.msra.mxu0 %v177
  %426 = vmatmul.f32.gmra.mxu0 %v20
  %v427 = vpop.f32.mrf.mxu0
  %v428 = vadd.f32 %v363, %v427
  %429 = vmatmul.f32.gmra.mxu0 %v24
  %v430 = vpop.f32.mrf.mxu0
  %v431 = vadd.f32 %v366, %v430
  %432 = vmatmul.f32.gmra.mxu0 %v28
  %v433 = vpop.f32.mrf.mxu0
  %v434 = vadd.f32 %v369, %v433
  %435 = vmatmul.f32.gmra.mxu0 %v32
  %v436 = vpop.f32.mrf.mxu0
  %v437 = vadd.f32 %v372, %v436
  %438 = vmatmul.f32.gmra.mxu0 %v36
  %v439 = vpop.f32.mrf.mxu0
  %v440 = vadd.f32 %v375, %v439
  %441 = vmatmul.f32.gmra.mxu0 %v40
  %v442 = vpop.f32.mrf.mxu0
  %v443 = vadd.f32 %v378, %v442
  %444 = vmatmul.f32.gmra.mxu0 %v44
  %v445 = vpop.f32.mrf.mxu0
  %v446 = vadd.f32 %v381, %v445
  %447 = vmatmul.f32.gmra.mxu0 %v48
  %v448 = vpop.f32.mrf.mxu0
  %v449 = vadd.f32 %v384, %v448
  %450 = vmatmul.f32.gmra.mxu0 %v52
  %v451 = vpop.f32.mrf.mxu0
  %v452 = vadd.f32 %v387, %v451
  %453 = vmatmul.f32.gmra.mxu0 %v56
  %v454 = vpop.f32.mrf.mxu0
  %v455 = vadd.f32 %v390, %v454
  %456 = vmatmul.f32.gmra.mxu0 %v60
  %v457 = vpop.f32.mrf.mxu0
  %v458 = vadd.f32 %v393, %v457
  %459 = vmatmul.f32.gmra.mxu0 %v64
  %v460 = vpop.f32.mrf.mxu0
  %v461 = vadd.f32 %v396, %v460
  %462 = vmatmul.f32.gmra.mxu0 %v68
  %v463 = vpop.f32.mrf.mxu0
  %v464 = vadd.f32 %v399, %v463
  %465 = vmatmul.f32.gmra.mxu0 %v72
  %v466 = vpop.f32.mrf.mxu0
  %v467 = vadd.f32 %v402, %v466
  %468 = vmatmul.f32.gmra.mxu0 %v76
  %v469 = vpop.f32.mrf.mxu0
  %v470 = vadd.f32 %v405, %v469
  %471 = vmatmul.f32.gmra.mxu0 %v80
  %v472 = vpop.f32.mrf.mxu0
  %v473 = vadd.f32 %v408, %v472
  %474 = vdwg.mxu0
  %475 = vmatpush.msra.mxu0 %v112
  %476 = vmatpush.msra.mxu0 %v110
  %477 = vmatpush.msra.mxu0 %v108
  %478 = vmatpush.msra.mxu0 %v106
  %479 = vmatpush.msra.mxu0 %v104
  %480 = vmatpush.msra.mxu0 %v102
  %481 = vmatpush.msra.mxu0 %v100
  %482 = vmatpush.msra.mxu0 %v98
  %483 = vmatpush.msra.mxu0 %v96
  %484 = vmatpush.msra.mxu0 %v94
  %485 = vmatpush.msra.mxu0 %v92
  %486 = vmatpush.msra.mxu0 %v90
  %487 = vmatpush.msra.mxu0 %v88
  %488 = vmatpush.msra.mxu0 %v86
  %489 = vmatpush.msra.mxu0 %v84
  %490 = vmatpush.msra.mxu0 %v82
  %491 = vmatmul.f32.gmra.mxu0 %v17
  %v492 = vpop.f32.mrf.mxu0
  %v493 = vadd.f32 %v212, %v492
  %494 = vmatmul.f32.gmra.mxu0 %v21
  %v495 = vpop.f32.mrf.mxu0
  %v496 = vadd.f32 %v212, %v495
  %497 = vmatmul.f32.gmra.mxu0 %v25
  %v498 = vpop.f32.mrf.mxu0
  %v499 = vadd.f32 %v212, %v498
  %500 = vmatmul.f32.gmra.mxu0 %v29
  %v501 = vpop.f32.mrf.mxu0
  %v502 = vadd.f32 %v212, %v501
  %503 = vmatmul.f32.gmra.mxu0 %v33
  %v504 = vpop.f32.mrf.mxu0
  %v505 = vadd.f32 %v212, %v504
  %506 = vmatmul.f32.gmra.mxu0 %v37
  %v507 = vpop.f32.mrf.mxu0
  %v508 = vadd.f32 %v212, %v507
  %509 = vmatmul.f32.gmra.mxu0 %v41
  %v510 = vpop.f32.mrf.mxu0
  %v511 = vadd.f32 %v212, %v510
  %512 = vmatmul.f32.gmra.mxu0 %v45
  %v513 = vpop.f32.mrf.mxu0
  %v514 = vadd.f32 %v212, %v513
  %515 = vmatmul.f32.gmra.mxu0 %v49
  %v516 = vpop.f32.mrf.mxu0
  %v517 = vadd.f32 %v212, %v516
  %518 = vmatmul.f32.gmra.mxu0 %v53
  %v519 = vpop.f32.mrf.mxu0
  %v520 = vadd.f32 %v212, %v519
  %521 = vmatmul.f32.gmra.mxu0 %v57
  %v522 = vpop.f32.mrf.mxu0
  %v523 = vadd.f32 %v212, %v522
  %524 = vmatmul.f32.gmra.mxu0 %v61
  %v525 = vpop.f32.mrf.mxu0
  %v526 = vadd.f32 %v212, %v525
  %527 = vmatmul.f32.gmra.mxu0 %v65
  %v528 = vpop.f32.mrf.mxu0
  %v529 = vadd.f32 %v212, %v528
  %530 = vmatmul.f32.gmra.mxu0 %v69
  %v531 = vpop.f32.mrf.mxu0
  %v532 = vadd.f32 %v212, %v531
  %533 = vmatmul.f32.gmra.mxu0 %v73
  %v534 = vpop.f32.mrf.mxu0
  %v535 = vadd.f32 %v212, %v534
  %536 = vmatmul.f32.gmra.mxu0 %v77
  %v537 = vpop.f32.mrf.mxu0
  %v538 = vadd.f32 %v212, %v537
  %539 = vdwg.mxu0
  %540 = vmatpush.msra.mxu0 %v144
  %541 = vmatpush.msra.mxu0 %v142
  %542 = vmatpush.msra.mxu0 %v140
  %543 = vmatpush.msra.mxu0 %v138
  %544 = vmatpush.msra.mxu0 %v136
  %545 = vmatpush.msra.mxu0 %v134
  %546 = vmatpush.msra.mxu0 %v132
  %547 = vmatpush.msra.mxu0 %v130
  %548 = vmatpush.msra.mxu0 %v128
  %549 = vmatpush.msra.mxu0 %v126
  %550 = vmatpush.msra.mxu0 %v124
  %551 = vmatpush.msra.mxu0 %v122
  %552 = vmatpush.msra.mxu0 %v120
  %553 = vmatpush.msra.mxu0 %v118
  %554 = vmatpush.msra.mxu0 %v116
  %555 = vmatpush.msra.mxu0 %v114
  %556 = vmatmul.f32.gmra.mxu0 %v18
  %v557 = vpop.f32.mrf.mxu0
  %v558 = vadd.f32 %v493, %v557
  %559 = vmatmul.f32.gmra.mxu0 %v22
  %v560 = vpop.f32.mrf.mxu0
  %v561 = vadd.f32 %v496, %v560
  %562 = vmatmul.f32.gmra.mxu0 %v26
  %v563 = vpop.f32.mrf.mxu0
  %v564 = vadd.f32 %v499, %v563
  %565 = vmatmul.f32.gmra.mxu0 %v30
  %v566 = vpop.f32.mrf.mxu0
  %v567 = vadd.f32 %v502, %v566
  %568 = vmatmul.f32.gmra.mxu0 %v34
  %v569 = vpop.f32.mrf.mxu0
  %v570 = vadd.f32 %v505, %v569
  %571 = vmatmul.f32.gmra.mxu0 %v38
  %v572 = vpop.f32.mrf.mxu0
  %v573 = vadd.f32 %v508, %v572
  %574 = vmatmul.f32.gmra.mxu0 %v42
  %v575 = vpop.f32.mrf.mxu0
  %v576 = vadd.f32 %v511, %v575
  %577 = vmatmul.f32.gmra.mxu0 %v46
  %v578 = vpop.f32.mrf.mxu0
  %v579 = vadd.f32 %v514, %v578
  %580 = vmatmul.f32.gmra.mxu0 %v50
  %v581 = vpop.f32.mrf.mxu0
  %v582 = vadd.f32 %v517, %v581
  %583 = vmatmul.f32.gmra.mxu0 %v54
  %v584 = vpop.f32.mrf.mxu0
  %v585 = vadd.f32 %v520, %v584
  %586 = vmatmul.f32.gmra.mxu0 %v58
  %v587 = vpop.f32.mrf.mxu0
  %v588 = vadd.f32 %v523, %v587
  %589 = vmatmul.f32.gmra.mxu0 %v62
  %v590 = vpop.f32.mrf.mxu0
  %v591 = vadd.f32 %v526, %v590
  %592 = vmatmul.f32.gmra.mxu0 %v66
  %v593 = vpop.f32.mrf.mxu0
  %v594 = vadd.f32 %v529, %v593
  %595 = vmatmul.f32.gmra.mxu0 %v70
  %v596 = vpop.f32.mrf.mxu0
  %v597 = vadd.f32 %v532, %v596
  %598 = vmatmul.f32.gmra.mxu0 %v74
  %v599 = vpop.f32.mrf.mxu0
  %v600 = vadd.f32 %v535, %v599
  %601 = vmatmul.f32.gmra.mxu0 %v78
  %v602 = vpop.f32.mrf.mxu0
  %v603 = vadd.f32 %v538, %v602
  %604 = vdwg.mxu0
  %605 = vmatpush.msra.mxu0 %v176
  %606 = vmatpush.msra.mxu0 %v174
  %607 = vmatpush.msra.mxu0 %v172
  %608 = vmatpush.msra.mxu0 %v170
  %609 = vmatpush.msra.mxu0 %v168
  %610 = vmatpush.msra.mxu0 %v166
  %611 = vmatpush.msra.mxu0 %v164
  %612 = vmatpush.msra.mxu0 %v162
  %613 = vmatpush.msra.mxu0 %v160
  %614 = vmatpush.msra.mxu0 %v158
  %615 = vmatpush.msra.mxu0 %v156
  %616 = vmatpush.msra.mxu0 %v154
  %617 = vmatpush.msra.mxu0 %v152
  %618 = vmatpush.msra.mxu0 %v150
  %619 = vmatpush.msra.mxu0 %v148
  %620 = vmatpush.msra.mxu0 %v146
  %621 = vmatmul.f32.gmra.mxu0 %v19
  %v622 = vpop.f32.mrf.mxu0
  %v623 = vadd.f32 %v558, %v622
  %624 = vmatmul.f32.gmra.mxu0 %v23
  %v625 = vpop.f32.mrf.mxu0
  %v626 = vadd.f32 %v561, %v625
  %627 = vmatmul.f32.gmra.mxu0 %v27
  %v628 = vpop.f32.mrf.mxu0
  %v629 = vadd.f32 %v564, %v628
  %630 = vmatmul.f32.gmra.mxu0 %v31
  %v631 = vpop.f32.mrf.mxu0
  %v632 = vadd.f32 %v567, %v631
  %633 = vmatmul.f32.gmra.mxu0 %v35
  %v634 = vpop.f32.mrf.mxu0
  %v635 = vadd.f32 %v570, %v634
  %636 = vmatmul.f32.gmra.mxu0 %v39
  %v637 = vpop.f32.mrf.mxu0
  %v638 = vadd.f32 %v573, %v637
  %639 = vmatmul.f32.gmra.mxu0 %v43
  %v640 = vpop.f32.mrf.mxu0
  %v641 = vadd.f32 %v576, %v640
  %642 = vmatmul.f32.gmra.mxu0 %v47
  %v643 = vpop.f32.mrf.mxu0
  %v644 = vadd.f32 %v579, %v643
  %645 = vmatmul.f32.gmra.mxu0 %v51
  %v646 = vpop.f32.mrf.mxu0
  %v647 = vadd.f32 %v582, %v646
  %648 = vmatmul.f32.gmra.mxu0 %v55
  %v649 = vpop.f32.mrf.mxu0
  %v650 = vadd.f32 %v585, %v649
  %651 = vmatmul.f32.gmra.mxu0 %v59
  %v652 = vpop.f32.mrf.mxu0
  %v653 = vadd.f32 %v588, %v652
  %654 = vmatmul.f32.gmra.mxu0 %v63
  %v655 = vpop.f32.mrf.mxu0
  %v656 = vadd.f32 %v591, %v655
  %657 = vmatmul.f32.gmra.mxu0 %v67
  %v658 = vpop.f32.mrf.mxu0
  %v659 = vadd.f32 %v594, %v658
  %660 = vmatmul.f32.gmra.mxu0 %v71
  %v661 = vpop.f32.mrf.mxu0
  %v662 = vadd.f32 %v597, %v661
  %663 = vmatmul.f32.gmra.mxu0 %v75
  %v664 = vpop.f32.mrf.mxu0
  %v665 = vadd.f32 %v600, %v664
  %666 = vmatmul.f32.gmra.mxu0 %v79
  %v667 = vpop.f32.mrf.mxu0
  %v668 = vadd.f32 %v603, %v667
  %669 = vdwg.mxu0
  %670 = vmatpush.msra.mxu0 %v208
  %671 = vmatpush.msra.mxu0 %v206
  %672 = vmatpush.msra.mxu0 %v204
  %673 = vmatpush.msra.mxu0 %v202
  %674 = vmatpush.msra.mxu0 %v200
  %675 = vmatpush.msra.mxu0 %v198
  %676 = vmatpush.msra.mxu0 %v196
  %677 = vmatpush.msra.mxu0 %v194
  %678 = vmatpush.msra.mxu0 %v192
  %679 = vmatpush.msra.mxu0 %v190
  %680 = vmatpush.msra.mxu0 %v188
  %681 = vmatpush.msra.mxu0 %v186
  %682 = vmatpush.msra.mxu0 %v184
  %683 = vmatpush.msra.mxu0 %v182
  %684 = vmatpush.msra.mxu0 %v180
  %685 = vmatpush.msra.mxu0 %v178
  %686 = vmatmul.f32.gmra.mxu0 %v20
  %v687 = vpop.f32.mrf.mxu0
  %v688 = vadd.f32 %v623, %v687
  %689 = vmatmul.f32.gmra.mxu0 %v24
  %v690 = vpop.f32.mrf.mxu0
  %v691 = vadd.f32 %v626, %v690
  %692 = vmatmul.f32.gmra.mxu0 %v28
  %v693 = vpop.f32.mrf.mxu0
  %v694 = vadd.f32 %v629, %v693
  %695 = vmatmul.f32.gmra.mxu0 %v32
  %v696 = vpop.f32.mrf.mxu0
  %v697 = vadd.f32 %v632, %v696
  %698 = vmatmul.f32.gmra.mxu0 %v36
  %v699 = vpop.f32.mrf.mxu0
  %v700 = vadd.f32 %v635, %v699
  %701 = vmatmul.f32.gmra.mxu0 %v40
  %v702 = vpop.f32.mrf.mxu0
  %v703 = vadd.f32 %v638, %v702
  %704 = vmatmul.f32.gmra.mxu0 %v44
  %v705 = vpop.f32.mrf.mxu0
  %v706 = vadd.f32 %v641, %v705
  %707 = vmatmul.f32.gmra.mxu0 %v48
  %v708 = vpop.f32.mrf.mxu0
  %v709 = vadd.f32 %v644, %v708
  %710 = vmatmul.f32.gmra.mxu0 %v52
  %v711 = vpop.f32.mrf.mxu0
  %v712 = vadd.f32 %v647, %v711
  %713 = vmatmul.f32.gmra.mxu0 %v56
  %v714 = vpop.f32.mrf.mxu0
  %v715 = vadd.f32 %v650, %v714
  %716 = vmatmul.f32.gmra.mxu0 %v60
  %v717 = vpop.f32.mrf.mxu0
  %v718 = vadd.f32 %v653, %v717
  %719 = vmatmul.f32.gmra.mxu0 %v64
  %v720 = vpop.f32.mrf.mxu0
  %v721 = vadd.f32 %v656, %v720
  %722 = vmatmul.f32.gmra.mxu0 %v68
  %v723 = vpop.f32.mrf.mxu0
  %v724 = vadd.f32 %v659, %v723
  %725 = vmatmul.f32.gmra.mxu0 %v72
  %v726 = vpop.f32.mrf.mxu0
  %v727 = vadd.f32 %v662, %v726
  %728 = vmatmul.f32.gmra.mxu0 %v76
  %v729 = vpop.f32.mrf.mxu0
  %v730 = vadd.f32 %v665, %v729
  %731 = vmatmul.f32.gmra.mxu0 %v80
  %v732 = vpop.f32.mrf.mxu0
  %v733 = vadd.f32 %v668, %v732
  %734 = vdwg.mxu0
  %735 = vst [vmem:[%s3] sm:$0xff] %v428
  %736 = vst [vmem:[%s3 + $0x8] sm:$0xff] %v688
  %737 = vst [vmem:[%s3 + $0x10] sm:$0xff] %v431
  %738 = vst [vmem:[%s3 + $0x18] sm:$0xff] %v691
  %739 = vst [vmem:[%s3 + $0x20] sm:$0xff] %v434
  %740 = vst [vmem:[%s3 + $0x28] sm:$0xff] %v694
  %741 = vst [vmem:[%s3 + $0x30] sm:$0xff] %v437
  %742 = vst [vmem:[%s3 + $0x38] sm:$0xff] %v697
  %743 = vst [vmem:[%s3 + $0x40] sm:$0xff] %v440
  %744 = vst [vmem:[%s3 + $0x48] sm:$0xff] %v700
  %745 = vst [vmem:[%s3 + $0x50] sm:$0xff] %v443
  %746 = vst [vmem:[%s3 + $0x58] sm:$0xff] %v703
  %747 = vst [vmem:[%s3 + $0x60] sm:$0xff] %v446
  %748 = vst [vmem:[%s3 + $0x68] sm:$0xff] %v706
  %749 = vst [vmem:[%s3 + $0x70] sm:$0xff] %v449
  %750 = vst [vmem:[%s3 + $0x78] sm:$0xff] %v709
  %751 = vst [vmem:[%s3 + $0x80] sm:$0xff] %v452
  %752 = vst [vmem:[%s3 + $0x88] sm:$0xff] %v712
  %753 = vst [vmem:[%s3 + $0x90] sm:$0xff] %v455
  %754 = vst [vmem:[%s3 + $0x98] sm:$0xff] %v715
  %755 = vst [vmem:[%s3 + $0xa0] sm:$0xff] %v458
  %756 = vst [vmem:[%s3 + $0xa8] sm:$0xff] %v718
  %757 = vst [vmem:[%s3 + $0xb0] sm:$0xff] %v461
  %758 = vst [vmem:[%s3 + $0xb8] sm:$0xff] %v721
  %759 = vst [vmem:[%s3 + $0xc0] sm:$0xff] %v464
  %760 = vst [vmem:[%s3 + $0xc8] sm:$0xff] %v724
  %761 = vst [vmem:[%s3 + $0xd0] sm:$0xff] %v467
  %762 = vst [vmem:[%s3 + $0xd8] sm:$0xff] %v727
  %763 = vst [vmem:[%s3 + $0xe0] sm:$0xff] %v470
  %764 = vst [vmem:[%s3 + $0xe8] sm:$0xff] %v730
  %765 = vst [vmem:[%s3 + $0xf0] sm:$0xff] %v473
  %766 = vst [vmem:[%s3 + $0xf8] sm:$0xff] %v733
  %v767 = vadd.f32 %v428, %v431
  %v768 = vadd.f32 %v767, %v434
  %v769 = vadd.f32 %v768, %v437
  %v770 = vadd.f32 %v769, %v440
  %v771 = vadd.f32 %v770, %v443
  %v772 = vadd.f32 %v771, %v446
  %v773 = vadd.f32 %v772, %v449
  %v774 = vadd.f32 %v773, %v452
  %v775 = vadd.f32 %v774, %v455
  %v776 = vadd.f32 %v775, %v458
  %v777 = vadd.f32 %v776, %v461
  %v778 = vadd.f32 %v777, %v464
  %v779 = vadd.f32 %v778, %v467
  %v780 = vadd.f32 %v779, %v470
  %v781 = vadd.f32 %v780, %v473
  %v782 = vrot.slane %v781, 4
  %v783 = vadd.f32 %v781, %v782
  %v784 = vrot.slane %v783, 2
  %v785 = vadd.f32 %v783, %v784
  %v786 = vrot.slane %v785, 1
  %v787 = vadd.f32 %v785, %v786
  %v788 = vadd.f32 %v688, %v691
  %v789 = vadd.f32 %v788, %v694
  %v790 = vadd.f32 %v789, %v697
  %v791 = vadd.f32 %v790, %v700
  %v792 = vadd.f32 %v791, %v703
  %v793 = vadd.f32 %v792, %v706
  %v794 = vadd.f32 %v793, %v709
  %v795 = vadd.f32 %v794, %v712
  %v796 = vadd.f32 %v795, %v715
  %v797 = vadd.f32 %v796, %v718
  %v798 = vadd.f32 %v797, %v721
  %v799 = vadd.f32 %v798, %v724
  %v800 = vadd.f32 %v799, %v727
  %v801 = vadd.f32 %v800, %v730
  %v802 = vadd.f32 %v801, %v733
  %v803 = vrot.slane %v802, 4
  %v804 = vadd.f32 %v802, %v803
  %v805 = vrot.slane %v804, 2
  %v806 = vadd.f32 %v804, %v805
  %v807 = vrot.slane %v806, 1
  %v808 = vadd.f32 %v806, %v807
  %809 = vst [vmem:[%s4] sm:$0xff] %v787
  %810 = vst [vmem:[%s4 + $0x8] sm:$0xff] %v808
  %v811 = vmul.f32 %v428, %v428
  %v812 = vmul.f32 %v688, %v688
  %v813 = vmul.f32 %v431, %v431
  %v814 = vmul.f32 %v691, %v691
  %v815 = vmul.f32 %v434, %v434
  %v816 = vmul.f32 %v694, %v694
  %v817 = vmul.f32 %v437, %v437
  %v818 = vmul.f32 %v697, %v697
  %v819 = vmul.f32 %v440, %v440
  %v820 = vmul.f32 %v700, %v700
  %v821 = vmul.f32 %v443, %v443
  %v822 = vmul.f32 %v703, %v703
  %v823 = vmul.f32 %v446, %v446
  %v824 = vmul.f32 %v706, %v706
  %v825 = vmul.f32 %v449, %v449
  %v826 = vmul.f32 %v709, %v709
  %v827 = vmul.f32 %v452, %v452
  %v828 = vmul.f32 %v712, %v712
  %v829 = vmul.f32 %v455, %v455
  %v830 = vmul.f32 %v715, %v715
  %v831 = vmul.f32 %v458, %v458
  %v832 = vmul.f32 %v718, %v718
  %v833 = vmul.f32 %v461, %v461
  %v834 = vmul.f32 %v721, %v721
  %v835 = vmul.f32 %v464, %v464
  %v836 = vmul.f32 %v724, %v724
  %v837 = vmul.f32 %v467, %v467
  %v838 = vmul.f32 %v727, %v727
  %v839 = vmul.f32 %v470, %v470
  %v840 = vmul.f32 %v730, %v730
  %v841 = vmul.f32 %v473, %v473
  %v842 = vmul.f32 %v733, %v733
  %v843 = vadd.f32 %v811, %v813
  %v844 = vadd.f32 %v843, %v815
  %v845 = vadd.f32 %v844, %v817
  %v846 = vadd.f32 %v845, %v819
  %v847 = vadd.f32 %v846, %v821
  %v848 = vadd.f32 %v847, %v823
  %v849 = vadd.f32 %v848, %v825
  %v850 = vadd.f32 %v849, %v827
  %v851 = vadd.f32 %v850, %v829
  %v852 = vadd.f32 %v851, %v831
  %v853 = vadd.f32 %v852, %v833
  %v854 = vadd.f32 %v853, %v835
  %v855 = vadd.f32 %v854, %v837
  %v856 = vadd.f32 %v855, %v839
  %v857 = vadd.f32 %v856, %v841
  %v858 = vrot.slane %v857, 4
  %v859 = vadd.f32 %v857, %v858
  %v860 = vrot.slane %v859, 2
  %v861 = vadd.f32 %v859, %v860
  %v862 = vrot.slane %v861, 1
  %v863 = vadd.f32 %v861, %v862
  %v864 = vadd.f32 %v812, %v814
  %v865 = vadd.f32 %v864, %v816
  %v866 = vadd.f32 %v865, %v818
  %v867 = vadd.f32 %v866, %v820
  %v868 = vadd.f32 %v867, %v822
  %v869 = vadd.f32 %v868, %v824
  %v870 = vadd.f32 %v869, %v826
  %v871 = vadd.f32 %v870, %v828
  %v872 = vadd.f32 %v871, %v830
  %v873 = vadd.f32 %v872, %v832
  %v874 = vadd.f32 %v873, %v834
  %v875 = vadd.f32 %v874, %v836
  %v876 = vadd.f32 %v875, %v838
  %v877 = vadd.f32 %v876, %v840
  %v878 = vadd.f32 %v877, %v842
  %v879 = vrot.slane %v878, 4
  %v880 = vadd.f32 %v878, %v879
  %v881 = vrot.slane %v880, 2
  %v882 = vadd.f32 %v880, %v881
  %v883 = vrot.slane %v882, 1
  %v884 = vadd.f32 %v882, %v883
  %885 = vst [vmem:[%s5] sm:$0xff] %v863
  %886 = vst [vmem:[%s5 + $0x8] sm:$0xff] %v884
  // Predicated region
  $region14: #{decoder_forward.9} parent=0 // pred_check
    _
  $region15: #{decoder_forward.9} parent=0 // pred_check_branch
    %888 = sbr.rel (0) target = $region17
  $region16: #{decoder_forward.9} parent=0 // pred_region
    _
  $region17: #{decoder_forward.9} parent=0 // pred_fallthru
    _
  // Predicated region
  $region18: #{decoder_forward.9} parent=0 // pred_check
    _
  $region19: #{decoder_forward.9} parent=0 // pred_check_branch
    %890 = sbr.rel (0) target = $region21
  $region20: #{decoder_forward.9} parent=0 // pred_region
    _
  $region21: #{decoder_forward.9} parent=0 // pred_fallthru
    _
  // Predicated region
  $region22: #{decoder_forward.9} parent=0 // pred_check
    _
  $region23: #{decoder_forward.9} parent=0 // pred_check_branch
    %892 = sbr.rel (0) target = $region25
  $region24: #{decoder_forward.9} parent=0 // pred_region
    _
  $region25: #{decoder_forward.9} parent=0 // pred_fallthru
    _
  // Predicated region
  $region26: #{decoder_forward.9} parent=0 // pred_check
    _
  $region27: #{decoder_forward.9} parent=0 // pred_check_branch
    %894 = sbr.rel (0) target = $region29
  $region28: #{decoder_forward.9} parent=0 // pred_region
    _
  $region29: #{decoder_forward.9} parent=0 // pred_fallthru
    _
  // Predicated region
  $region30: #{decoder_forward.9} parent=0 // pred_check
    _
  $region31: #{decoder_forward.9} parent=0 // pred_check_branch
    %896 = sbr.rel (0) target = $region33
  $region32: #{decoder_forward.9} parent=0 // pred_region
    _
  $region33: #{decoder_forward.9} parent=0 // pred_fallthru
    _
  // Predicated region
  $region34: #{decoder_forward.9} parent=0 // pred_check
    _
  $region35: #{decoder_forward.9} parent=0 // pred_check_branch
    %898 = sbr.rel (0) target = $region37
  $region36: #{decoder_forward.9} parent=0 // pred_region
    _
  $region37: #{decoder_forward.9} parent=0 // pred_fallthru
    _

// kernel: decoder_forward.10
$region0: #{decoder_forward.10}
  #allocation0 [shape = 'u32[]', space=smem, size = 0x4, offset = 0x4, fixed_abs, tag = 'smem constant byte address 0x4 - core index']
  #allocation1 [shape = 'u32[72,128]{1,0:T(1,128)}', space=vmem, size = 0x9000, scoped, tag = 'internal scratch']
  %s0 = inlined_call_operand.vmem [shape: f32[128,256], index: 0, kind: input, shape index: {}]
  %s1 = inlined_call_operand.vmem [shape: f32[1,256], index: 1, kind: input, shape index: {}]
  %s2 = inlined_call_operand.vmem [shape: f32[1,256], index: 2, kind: input, shape index: {}]
  %s3 = inlined_call_operand.vmem [shape: f32[128,256], index: 3, kind: output, shape index: {}]
  %s4 = sld [smem:[#allocation0]]
  $region22: #{decoder_forward.10} parent=0
    _
  %s6 = ssub.s32 1, %s4
  %s7 = scalar_select 0, %s6, %s4
  // Predicated region
  $region2: #{decoder_forward.10} parent=0 // pred_check
    _
  $region3: #{decoder_forward.10} parent=0 // pred_check_branch
    %9 = sbr.rel (0) target = $region5
  $region4: #{decoder_forward.10} parent=0 // pred_region
    _
  $region5: #{decoder_forward.10} parent=0 // pred_fallthru
    _
  // Predicated region
  $region6: #{decoder_forward.10} parent=0 // pred_check
    _
  $region7: #{decoder_forward.10} parent=0 // pred_check_branch
    %11 = sbr.rel (0) target = $region9
  $region8: #{decoder_forward.10} parent=0 // pred_region
    _
  $region9: #{decoder_forward.10} parent=0 // pred_fallthru
    _
  // Predicated region
  $region10: #{decoder_forward.10} parent=0 // pred_check
    _
  $region11: #{decoder_forward.10} parent=0 // pred_check_branch
    %13 = sbr.rel (0) target = $region13
  $region12: #{decoder_forward.10} parent=0 // pred_region
    _
  $region13: #{decoder_forward.10} parent=0 // pred_fallthru
    _
  %v14 = vld [vmem:[%s0] sm:$0xff]
  %v15 = vld [vmem:[%s0 + $0x8] sm:$0xff]
  %v16 = vld [vmem:[%s0 + $0x10] sm:$0xff]
  %v17 = vld [vmem:[%s0 + $0x18] sm:$0xff]
  %v18 = vld [vmem:[%s0 + $0x20] sm:$0xff]
  %v19 = vld [vmem:[%s0 + $0x28] sm:$0xff]
  %v20 = vld [vmem:[%s0 + $0x30] sm:$0xff]
  %v21 = vld [vmem:[%s0 + $0x38] sm:$0xff]
  %v22 = vld [vmem:[%s0 + $0x40] sm:$0xff]
  %v23 = vld [vmem:[%s0 + $0x48] sm:$0xff]
  %v24 = vld [vmem:[%s0 + $0x50] sm:$0xff]
  %v25 = vld [vmem:[%s0 + $0x58] sm:$0xff]
  %v26 = vld [vmem:[%s0 + $0x60] sm:$0xff]
  %v27 = vld [vmem:[%s0 + $0x68] sm:$0xff]
  %v28 = vld [vmem:[%s0 + $0x70] sm:$0xff]
  %v29 = vld [vmem:[%s0 + $0x78] sm:$0xff]
  %v30 = vld [vmem:[%s0 + $0x80] sm:$0xff]
  %v31 = vld [vmem:[%s0 + $0x88] sm:$0xff]
  %v32 = vld [vmem:[%s0 + $0x90] sm:$0xff]
  %v33 = vld [vmem:[%s0 + $0x98] sm:$0xff]
  %v34 = vld [vmem:[%s0 + $0xa0] sm:$0xff]
  %v35 = vld [vmem:[%s0 + $0xa8] sm:$0xff]
  %v36 = vld [vmem:[%s0 + $0xb0] sm:$0xff]
  %v37 = vld [vmem:[%s0 + $0xb8] sm:$0xff]
  %v38 = vld [vmem:[%s0 + $0xc0] sm:$0xff]
  %v39 = vld [vmem:[%s0 + $0xc8] sm:$0xff]
  %v40 = vld [vmem:[%s0 + $0xd0] sm:$0xff]
  %v41 = vld [vmem:[%s0 + $0xd8] sm:$0xff]
  %v42 = vld [vmem:[%s0 + $0xe0] sm:$0xff]
  %v43 = vld [vmem:[%s0 + $0xe8] sm:$0xff]
  %v44 = vld [vmem:[%s0 + $0xf0] sm:$0xff]
  %v45 = vld [vmem:[%s0 + $0xf8] sm:$0xff]
  %v46 = vld [vmem:[%s1] sm:$0x3]
  %v48 = vperm.slane %v46, 0
  %v49 = vperm.slane %v46, 1
  %v52 = vmul.f32 %v14, %v48
  %v53 = vmul.f32 %v15, %v49
  %v54 = vmul.f32 %v16, %v48
  %v55 = vmul.f32 %v17, %v49
  %v56 = vmul.f32 %v18, %v48
  %v57 = vmul.f32 %v19, %v49
  %v58 = vmul.f32 %v20, %v48
  %v59 = vmul.f32 %v21, %v49
  %v60 = vmul.f32 %v22, %v48
  %v61 = vmul.f32 %v23, %v49
  %v62 = vmul.f32 %v24, %v48
  %v63 = vmul.f32 %v25, %v49
  %v64 = vmul.f32 %v26, %v48
  %v65 = vmul.f32 %v27, %v49
  %v66 = vmul.f32 %v28, %v48
  %v67 = vmul.f32 %v29, %v49
  %v68 = vmul.f32 %v30, %v48
  %v69 = vmul.f32 %v31, %v49
  %v70 = vmul.f32 %v32, %v48
  %v71 = vmul.f32 %v33, %v49
  %v72 = vmul.f32 %v34, %v48
  %v73 = vmul.f32 %v35, %v49
  %v74 = vmul.f32 %v36, %v48
  %v75 = vmul.f32 %v37, %v49
  %v76 = vmul.f32 %v38, %v48
  %v77 = vmul.f32 %v39, %v49
  %v78 = vmul.f32 %v40, %v48
  %v79 = vmul.f32 %v41, %v49
  %v80 = vmul.f32 %v42, %v48
  %v81 = vmul.f32 %v43, %v49
  %v82 = vmul.f32 %v44, %v48
  %v83 = vmul.f32 %v45, %v49
  %v84 = vld [vmem:[%s2] sm:$0x3]
  %v86 = vperm.slane %v84, 0
  %v87 = vperm.slane %v84, 1
  %v90 = vadd.f32 %v52, %v86
  %v91 = vadd.f32 %v53, %v87
  %v92 = vadd.f32 %v54, %v86
  %v93 = vadd.f32 %v55, %v87
  %v94 = vadd.f32 %v56, %v86
  %v95 = vadd.f32 %v57, %v87
  %v96 = vadd.f32 %v58, %v86
  %v97 = vadd.f32 %v59, %v87
  %v98 = vadd.f32 %v60, %v86
  %v99 = vadd.f32 %v61, %v87
  %v100 = vadd.f32 %v62, %v86
  %v101 = vadd.f32 %v63, %v87
  %v102 = vadd.f32 %v64, %v86
  %v103 = vadd.f32 %v65, %v87
  %v104 = vadd.f32 %v66, %v86
  %v105 = vadd.f32 %v67, %v87
  %v106 = vadd.f32 %v68, %v86
  %v107 = vadd.f32 %v69, %v87
  %v108 = vadd.f32 %v70, %v86
  %v109 = vadd.f32 %v71, %v87
  %v110 = vadd.f32 %v72, %v86
  %v111 = vadd.f32 %v73, %v87
  %v112 = vadd.f32 %v74, %v86
  %v113 = vadd.f32 %v75, %v87
  %v114 = vadd.f32 %v76, %v86
  %v115 = vadd.f32 %v77, %v87
  %v116 = vadd.f32 %v78, %v86
  %v117 = vadd.f32 %v79, %v87
  %v118 = vadd.f32 %v80, %v86
  %v119 = vadd.f32 %v81, %v87
  %v120 = vadd.f32 %v82, %v86
  %v121 = vadd.f32 %v83, %v87
  %v122 = vmax.f32 %v90, 0.0
  %v123 = vmax.f32 %v91, 0.0
  %v124 = vmax.f32 %v92, 0.0
  %v125 = vmax.f32 %v93, 0.0
  %v126 = vmax.f32 %v94, 0.0
  %v127 = vmax.f32 %v95, 0.0
  %v128 = vmax.f32 %v96, 0.0
  %v129 = vmax.f32 %v97, 0.0
  %v130 = vmax.f32 %v98, 0.0
  %v131 = vmax.f32 %v99, 0.0
  %v132 = vmax.f32 %v100, 0.0
  %v133 = vmax.f32 %v101, 0.0
  %v134 = vmax.f32 %v102, 0.0
  %v135 = vmax.f32 %v103, 0.0
  %v136 = vmax.f32 %v104, 0.0
  %v137 = vmax.f32 %v105, 0.0
  %v138 = vmax.f32 %v106, 0.0
  %v139 = vmax.f32 %v107, 0.0
  %v140 = vmax.f32 %v108, 0.0
  %v141 = vmax.f32 %v109, 0.0
  %v142 = vmax.f32 %v110, 0.0
  %v143 = vmax.f32 %v111, 0.0
  %v144 = vmax.f32 %v112, 0.0
  %v145 = vmax.f32 %v113, 0.0
  %v146 = vmax.f32 %v114, 0.0
  %v147 = vmax.f32 %v115, 0.0
  %v148 = vmax.f32 %v116, 0.0
  %v149 = vmax.f32 %v117, 0.0
  %v150 = vmax.f32 %v118, 0.0
  %v151 = vmax.f32 %v119, 0.0
  %v152 = vmax.f32 %v120, 0.0
  %v153 = vmax.f32 %v121, 0.0
  %154 = vst [vmem:[%s3] sm:$0xff] %v122
  %155 = vst [vmem:[%s3 + $0x8] sm:$0xff] %v123
  %156 = vst [vmem:[%s3 + $0x10] sm:$0xff] %v124
  %157 = vst [vmem:[%s3 + $0x18] sm:$0xff] %v125
  %158 = vst [vmem:[%s3 + $0x20] sm:$0xff] %v126
  %159 = vst [vmem:[%s3 + $0x28] sm:$0xff] %v127
  %160 = vst [vmem:[%s3 + $0x30] sm:$0xff] %v128
  %161 = vst [vmem:[%s3 + $0x38] sm:$0xff] %v129
  %162 = vst [vmem:[%s3 + $0x40] sm:$0xff] %v130
  %163 = vst [vmem:[%s3 + $0x48] sm:$0xff] %v131
  %164 = vst [vmem:[%s3 + $0x50] sm:$0xff] %v132
  %165 = vst [vmem:[%s3 + $0x58] sm:$0xff] %v133
  %166 = vst [vmem:[%s3 + $0x60] sm:$0xff] %v134
  %167 = vst [vmem:[%s3 + $0x68] sm:$0xff] %v135
  %168 = vst [vmem:[%s3 + $0x70] sm:$0xff] %v136
  %169 = vst [vmem:[%s3 + $0x78] sm:$0xff] %v137
  %170 = vst [vmem:[%s3 + $0x80] sm:$0xff] %v138
  %171 = vst [vmem:[%s3 + $0x88] sm:$0xff] %v139
  %172 = vst [vmem:[%s3 + $0x90] sm:$0xff] %v140
  %173 = vst [vmem:[%s3 + $0x98] sm:$0xff] %v141
  %174 = vst [vmem:[%s3 + $0xa0] sm:$0xff] %v142
  %175 = vst [vmem:[%s3 + $0xa8] sm:$0xff] %v143
  %176 = vst [vmem:[%s3 + $0xb0] sm:$0xff] %v144
  %177 = vst [vmem:[%s3 + $0xb8] sm:$0xff] %v145
  %178 = vst [vmem:[%s3 + $0xc0] sm:$0xff] %v146
  %179 = vst [vmem:[%s3 + $0xc8] sm:$0xff] %v147
  %180 = vst [vmem:[%s3 + $0xd0] sm:$0xff] %v148
  %181 = vst [vmem:[%s3 + $0xd8] sm:$0xff] %v149
  %182 = vst [vmem:[%s3 + $0xe0] sm:$0xff] %v150
  %183 = vst [vmem:[%s3 + $0xe8] sm:$0xff] %v151
  %184 = vst [vmem:[%s3 + $0xf0] sm:$0xff] %v152
  %185 = vst [vmem:[%s3 + $0xf8] sm:$0xff] %v153
  // Predicated region
  $region14: #{decoder_forward.10} parent=0 // pred_check
    _
  $region15: #{decoder_forward.10} parent=0 // pred_check_branch
    %187 = sbr.rel (0) target = $region17
  $region16: #{decoder_forward.10} parent=0 // pred_region
    _
  $region17: #{decoder_forward.10} parent=0 // pred_fallthru
    _
  // Predicated region
  $region18: #{decoder_forward.10} parent=0 // pred_check
    _
  $region19: #{decoder_forward.10} parent=0 // pred_check_branch
    %189 = sbr.rel (0) target = $region21
  $region20: #{decoder_forward.10} parent=0 // pred_region
    _
  $region21: #{decoder_forward.10} parent=0 // pred_fallthru
    _

// kernel: tile.68
$region0: #{tile.68}
  #allocation0 [shape = 's32[1]{0}', space=sflag, size = 0x4, scoped, tag = 'scoped memory for tile.68']
  %s0 = inlined_call_operand.vmem [shape: f32[3], index: 0, kind: input, shape index: {}]
  %s1 = inlined_call_operand.vmem [shape: f32[4,3], index: 1, kind: output, shape index: {}]
  // Predicated region
  $region2: #{tile.68} parent=0 // pred_check
    _
  $region3: #{tile.68} parent=0 // pred_check_branch
    %3 = sbr.rel (0) target = $region5
  $region4: #{tile.68} parent=0 // pred_region
    _
  $region5: #{tile.68} parent=0 // pred_fallthru
    _
  %v4 = vld [vmem:[%s0] ss:$0 sm:$0xff]
  %5 = vst [vmem:[%s1] sm:$0xf] %v4

// kernel: tile.69
$region0: #{tile.69}
  %s0 = inlined_call_operand.vmem [shape: f32[4,3], index: 0, kind: input, shape index: {}]
  %s1 = inlined_call_operand.vmem [shape: f32[12], index: 1, kind: output, shape index: {}]
  $region1: #{tile.69} parent=0
    #allocation0 [shape = 'u8[4096]{0}', space=vmem, size = 0x1000, scoped, tag = 'scoped mem for output reshape']
    #allocation1 [shape = 'u8[4096]{0}', space=vmem, size = 0x1000, scoped, tag = 'scoped mem for input reshape']
    %s3 = ssub.s32 16, 1
    %v4 = vld [vmem:[%s0] sm:%s3]
    %5 = vst [vmem:[#allocation1] sm:%s3] %v4
    %v6 = vld [vmem:[#allocation1] sm:$0x1]
    %vm7 = vcmask 23552
    %8 = vst.msk [vmem:[#allocation0] sm:$0x1] %vm7, %v6
    %s9 = scalar_lea.vmem [#allocation1], 3
    %v10 = vld [vmem:[%s9] sm:$0x1]
    %11 = vrot.lane.b32.xlu0 %v10, 9
    %v12 = vpop.permute.xlu0 %11
    %vm13 = vcmask 97352
    %14 = vst.msk [vmem:[#allocation0] sm:$0x1] %vm13, %v12
    %s15 = scalar_lea.vmem [#allocation1], 2
    %v16 = vld [vmem:[%s15] sm:$0x1]
    %17 = vrot.lane.b32.xlu0 %v16, 6
    %v18 = vpop.permute.xlu0 %17
    %vm19 = vcmask 72752
    %20 = vst.msk [vmem:[#allocation0] sm:$0x1] %vm19, %v18
    %s21 = scalar_lea.vmem [#allocation1], 1
    %v22 = vld [vmem:[%s21] sm:$0x1]
    %23 = vrot.lane.b32.xlu0 %v22, 3
    %v24 = vpop.permute.xlu0 %23
    %vm25 = vcmask 48152
    %26 = vst.msk [vmem:[#allocation0] sm:$0x1] %vm25, %v24
    %s28 = ssub.s32 2, 1
    %v29 = vld [vmem:[#allocation0] sm:%s28]
    %s31 = ssub.s32 2, 1
    %32 = vst [vmem:[%s1] sm:%s31] %v29

// kernel: decoder_forward.11
$region0: #{decoder_forward.11}
  #allocation0 [shape = 'u32[]', space=smem, size = 0x4, offset = 0x4, fixed_abs, tag = 'smem constant byte address 0x4 - core index']
  #allocation1 [shape = 'u32[72,128]{1,0:T(1,128)}', space=vmem, size = 0x9000, scoped, tag = 'internal scratch']
  %s0 = inlined_call_operand.vmem [shape: f32[512,256], index: 0, kind: input, shape index: {}]
  %s1 = inlined_call_operand.vmem [shape: f32[256,128], index: 1, kind: input, shape index: {}]
  %s2 = inlined_call_operand.vmem [shape: f32[1,128], index: 2, kind: input, shape index: {}]
  %s3 = inlined_call_operand.vmem [shape: f32[512,128], index: 3, kind: output, shape index: {0}]
  %s4 = inlined_call_operand.hbm [shape: f32[8,128], index: 4, kind: output, shape index: {1}]
  %s5 = inlined_call_operand.hbm [shape: f32[8,128], index: 5, kind: output, shape index: {2}]
  %6 = xla_tuple %s3, %s4, %s5
  %s7 = sld [smem:[#allocation0]]
  $region38: #{decoder_forward.11} parent=0
    _
  %s9 = ssub.s32 1, %s7
  %s10 = scalar_select 0, %s9, %s7
  $region1: #{decoder_forward.11} parent=0
    #allocation2 [shape = 'u8[4096]{0}', space=vmem, size = 0x1000, scoped, tag = 'output window, operand 1, single buffered']
    #allocation3 [shape = 's32[1]{0}', space=sflag, size = 0x4, scoped, tag = 'scoped memory for decoder_forward.11']
    #allocation4 [shape = 'u8[4096]{0}', space=vmem, size = 0x1000, scoped, tag = 'output window, operand 2, single buffered']
    #allocation5 [shape = 's32[1]{0}', space=sflag, size = 0x4, scoped, tag = 'scoped memory for decoder_forward.11']
    %11 = vsyncpa [#allocation3], 0
    %12 = vsyncpa [#allocation5], 0
    // Predicated region
    $region2: #{decoder_forward.11} parent=1 // pred_check
      _
    $region3: #{decoder_forward.11} parent=1 // pred_check_branch
      %14 = sbr.rel (0) target = $region5
    $region4: #{decoder_forward.11} parent=1 // pred_region
      _
    $region5: #{decoder_forward.11} parent=1 // pred_fallthru
      _
    // Predicated region
    $region6: #{decoder_forward.11} parent=1 // pred_check
      _
    $region7: #{decoder_forward.11} parent=1 // pred_check_branch
      %16 = sbr.rel (0) target = $region9
    $region8: #{decoder_forward.11} parent=1 // pred_region
      _
    $region9: #{decoder_forward.11} parent=1 // pred_fallthru
      _
    // Predicated region
    $region10: #{decoder_forward.11} parent=1 // pred_check
      _
    $region11: #{decoder_forward.11} parent=1 // pred_check_branch
      %18 = sbr.rel (0) target = $region13
    $region12: #{decoder_forward.11} parent=1 // pred_region
      _
    $region13: #{decoder_forward.11} parent=1 // pred_fallthru
      _
    %v19 = vld [vmem:[%s0] sm:$0xff]
    %v20 = vld [vmem:[%s0 + $0x8] sm:$0xff]
    %v21 = vld [vmem:[%s0 + $0x10] sm:$0xff]
    %v22 = vld [vmem:[%s0 + $0x18] sm:$0xff]
    %v23 = vld [vmem:[%s0 + $0x20] sm:$0xff]
    %v24 = vld [vmem:[%s0 + $0x28] sm:$0xff]
    %v25 = vld [vmem:[%s0 + $0x30] sm:$0xff]
    %v26 = vld [vmem:[%s0 + $0x38] sm:$0xff]
    %v27 = vld [vmem:[%s0 + $0x40] sm:$0xff]
    %v28 = vld [vmem:[%s0 + $0x48] sm:$0xff]
    %v29 = vld [vmem:[%s0 + $0x50] sm:$0xff]
    %v30 = vld [vmem:[%s0 + $0x58] sm:$0xff]
    %v31 = vld [vmem:[%s0 + $0x60] sm:$0xff]
    %v32 = vld [vmem:[%s0 + $0x68] sm:$0xff]
    %v33 = vld [vmem:[%s0 + $0x70] sm:$0xff]
    %v34 = vld [vmem:[%s0 + $0x78] sm:$0xff]
    %v35 = vld [vmem:[%s0 + $0x80] sm:$0xff]
    %v36 = vld [vmem:[%s0 + $0x88] sm:$0xff]
    %v37 = vld [vmem:[%s0 + $0x90] sm:$0xff]
    %v38 = vld [vmem:[%s0 + $0x98] sm:$0xff]
    %v39 = vld [vmem:[%s0 + $0xa0] sm:$0xff]
    %v40 = vld [vmem:[%s0 + $0xa8] sm:$0xff]
    %v41 = vld [vmem:[%s0 + $0xb0] sm:$0xff]
    %v42 = vld [vmem:[%s0 + $0xb8] sm:$0xff]
    %v43 = vld [vmem:[%s0 + $0xc0] sm:$0xff]
    %v44 = vld [vmem:[%s0 + $0xc8] sm:$0xff]
    %v45 = vld [vmem:[%s0 + $0xd0] sm:$0xff]
    %v46 = vld [vmem:[%s0 + $0xd8] sm:$0xff]
    %v47 = vld [vmem:[%s0 + $0xe0] sm:$0xff]
    %v48 = vld [vmem:[%s0 + $0xe8] sm:$0xff]
    %v49 = vld [vmem:[%s0 + $0xf0] sm:$0xff]
    %v50 = vld [vmem:[%s0 + $0xf8] sm:$0xff]
    %v51 = vld [vmem:[%s0 + $0x100] sm:$0xff]
    %v52 = vld [vmem:[%s0 + $0x108] sm:$0xff]
    %v53 = vld [vmem:[%s0 + $0x110] sm:$0xff]
    %v54 = vld [vmem:[%s0 + $0x118] sm:$0xff]
    %v55 = vld [vmem:[%s0 + $0x120] sm:$0xff]
    %v56 = vld [vmem:[%s0 + $0x128] sm:$0xff]
    %v57 = vld [vmem:[%s0 + $0x130] sm:$0xff]
    %v58 = vld [vmem:[%s0 + $0x138] sm:$0xff]
    %v59 = vld [vmem:[%s0 + $0x140] sm:$0xff]
    %v60 = vld [vmem:[%s0 + $0x148] sm:$0xff]
    %v61 = vld [vmem:[%s0 + $0x150] sm:$0xff]
    %v62 = vld [vmem:[%s0 + $0x158] sm:$0xff]
    %v63 = vld [vmem:[%s0 + $0x160] sm:$0xff]
    %v64 = vld [vmem:[%s0 + $0x168] sm:$0xff]
    %v65 = vld [vmem:[%s0 + $0x170] sm:$0xff]
    %v66 = vld [vmem:[%s0 + $0x178] sm:$0xff]
    %v67 = vld [vmem:[%s0 + $0x180] sm:$0xff]
    %v68 = vld [vmem:[%s0 + $0x188] sm:$0xff]
    %v69 = vld [vmem:[%s0 + $0x190] sm:$0xff]
    %v70 = vld [vmem:[%s0 + $0x198] sm:$0xff]
    %v71 = vld [vmem:[%s0 + $0x1a0] sm:$0xff]
    %v72 = vld [vmem:[%s0 + $0x1a8] sm:$0xff]
    %v73 = vld [vmem:[%s0 + $0x1b0] sm:$0xff]
    %v74 = vld [vmem:[%s0 + $0x1b8] sm:$0xff]
    %v75 = vld [vmem:[%s0 + $0x1c0] sm:$0xff]
    %v76 = vld [vmem:[%s0 + $0x1c8] sm:$0xff]
    %v77 = vld [vmem:[%s0 + $0x1d0] sm:$0xff]
    %v78 = vld [vmem:[%s0 + $0x1d8] sm:$0xff]
    %v79 = vld [vmem:[%s0 + $0x1e0] sm:$0xff]
    %v80 = vld [vmem:[%s0 + $0x1e8] sm:$0xff]
    %v81 = vld [vmem:[%s0 + $0x1f0] sm:$0xff]
    %v82 = vld [vmem:[%s0 + $0x1f8] sm:$0xff]
    %v83 = vld [vmem:[%s0 + $0x200] sm:$0xff]
    %v84 = vld [vmem:[%s0 + $0x208] sm:$0xff]
    %v85 = vld [vmem:[%s0 + $0x210] sm:$0xff]
    %v86 = vld [vmem:[%s0 + $0x218] sm:$0xff]
    %v87 = vld [vmem:[%s0 + $0x220] sm:$0xff]
    %v88 = vld [vmem:[%s0 + $0x228] sm:$0xff]
    %v89 = vld [vmem:[%s0 + $0x230] sm:$0xff]
    %v90 = vld [vmem:[%s0 + $0x238] sm:$0xff]
    %v91 = vld [vmem:[%s0 + $0x240] sm:$0xff]
    %v92 = vld [vmem:[%s0 + $0x248] sm:$0xff]
    %v93 = vld [vmem:[%s0 + $0x250] sm:$0xff]
    %v94 = vld [vmem:[%s0 + $0x258] sm:$0xff]
    %v95 = vld [vmem:[%s0 + $0x260] sm:$0xff]
    %v96 = vld [vmem:[%s0 + $0x268] sm:$0xff]
    %v97 = vld [vmem:[%s0 + $0x270] sm:$0xff]
    %v98 = vld [vmem:[%s0 + $0x278] sm:$0xff]
    %v99 = vld [vmem:[%s0 + $0x280] sm:$0xff]
    %v100 = vld [vmem:[%s0 + $0x288] sm:$0xff]
    %v101 = vld [vmem:[%s0 + $0x290] sm:$0xff]
    %v102 = vld [vmem:[%s0 + $0x298] sm:$0xff]
    %v103 = vld [vmem:[%s0 + $0x2a0] sm:$0xff]
    %v104 = vld [vmem:[%s0 + $0x2a8] sm:$0xff]
    %v105 = vld [vmem:[%s0 + $0x2b0] sm:$0xff]
    %v106 = vld [vmem:[%s0 + $0x2b8] sm:$0xff]
    %v107 = vld [vmem:[%s0 + $0x2c0] sm:$0xff]
    %v108 = vld [vmem:[%s0 + $0x2c8] sm:$0xff]
    %v109 = vld [vmem:[%s0 + $0x2d0] sm:$0xff]
    %v110 = vld [vmem:[%s0 + $0x2d8] sm:$0xff]
    %v111 = vld [vmem:[%s0 + $0x2e0] sm:$0xff]
    %v112 = vld [vmem:[%s0 + $0x2e8] sm:$0xff]
    %v113 = vld [vmem:[%s0 + $0x2f0] sm:$0xff]
    %v114 = vld [vmem:[%s0 + $0x2f8] sm:$0xff]
    %v115 = vld [vmem:[%s0 + $0x300] sm:$0xff]
    %v116 = vld [vmem:[%s0 + $0x308] sm:$0xff]
    %v117 = vld [vmem:[%s0 + $0x310] sm:$0xff]
    %v118 = vld [vmem:[%s0 + $0x318] sm:$0xff]
    %v119 = vld [vmem:[%s0 + $0x320] sm:$0xff]
    %v120 = vld [vmem:[%s0 + $0x328] sm:$0xff]
    %v121 = vld [vmem:[%s0 + $0x330] sm:$0xff]
    %v122 = vld [vmem:[%s0 + $0x338] sm:$0xff]
    %v123 = vld [vmem:[%s0 + $0x340] sm:$0xff]
    %v124 = vld [vmem:[%s0 + $0x348] sm:$0xff]
    %v125 = vld [vmem:[%s0 + $0x350] sm:$0xff]
    %v126 = vld [vmem:[%s0 + $0x358] sm:$0xff]
    %v127 = vld [vmem:[%s0 + $0x360] sm:$0xff]
    %v128 = vld [vmem:[%s0 + $0x368] sm:$0xff]
    %v129 = vld [vmem:[%s0 + $0x370] sm:$0xff]
    %v130 = vld [vmem:[%s0 + $0x378] sm:$0xff]
    %v131 = vld [vmem:[%s0 + $0x380] sm:$0xff]
    %v132 = vld [vmem:[%s0 + $0x388] sm:$0xff]
    %v133 = vld [vmem:[%s0 + $0x390] sm:$0xff]
    %v134 = vld [vmem:[%s0 + $0x398] sm:$0xff]
    %v135 = vld [vmem:[%s0 + $0x3a0] sm:$0xff]
    %v136 = vld [vmem:[%s0 + $0x3a8] sm:$0xff]
    %v137 = vld [vmem:[%s0 + $0x3b0] sm:$0xff]
    %v138 = vld [vmem:[%s0 + $0x3b8] sm:$0xff]
    %v139 = vld [vmem:[%s0 + $0x3c0] sm:$0xff]
    %v140 = vld [vmem:[%s0 + $0x3c8] sm:$0xff]
    %v141 = vld [vmem:[%s0 + $0x3d0] sm:$0xff]
    %v142 = vld [vmem:[%s0 + $0x3d8] sm:$0xff]
    %v143 = vld [vmem:[%s0 + $0x3e0] sm:$0xff]
    %v144 = vld [vmem:[%s0 + $0x3e8] sm:$0xff]
    %v145 = vld [vmem:[%s0 + $0x3f0] sm:$0xff]
    %v146 = vld [vmem:[%s0 + $0x3f8] sm:$0xff]
    %v147 = vld [vmem:[%s1] sm:$0xff]
    %v148 = vld [vmem:[%s1 + $0x8] sm:$0xff]
    %v149 = vld [vmem:[%s1 + $0x10] sm:$0xff]
    %v150 = vld [vmem:[%s1 + $0x18] sm:$0xff]
    %v151 = vld [vmem:[%s1 + $0x20] sm:$0xff]
    %v152 = vld [vmem:[%s1 + $0x28] sm:$0xff]
    %v153 = vld [vmem:[%s1 + $0x30] sm:$0xff]
    %v154 = vld [vmem:[%s1 + $0x38] sm:$0xff]
    %v155 = vld [vmem:[%s1 + $0x40] sm:$0xff]
    %v156 = vld [vmem:[%s1 + $0x48] sm:$0xff]
    %v157 = vld [vmem:[%s1 + $0x50] sm:$0xff]
    %v158 = vld [vmem:[%s1 + $0x58] sm:$0xff]
    %v159 = vld [vmem:[%s1 + $0x60] sm:$0xff]
    %v160 = vld [vmem:[%s1 + $0x68] sm:$0xff]
    %v161 = vld [vmem:[%s1 + $0x70] sm:$0xff]
    %v162 = vld [vmem:[%s1 + $0x78] sm:$0xff]
    %v163 = vld [vmem:[%s1 + $0x80] sm:$0xff]
    %v164 = vld [vmem:[%s1 + $0x88] sm:$0xff]
    %v165 = vld [vmem:[%s1 + $0x90] sm:$0xff]
    %v166 = vld [vmem:[%s1 + $0x98] sm:$0xff]
    %v167 = vld [vmem:[%s1 + $0xa0] sm:$0xff]
    %v168 = vld [vmem:[%s1 + $0xa8] sm:$0xff]
    %v169 = vld [vmem:[%s1 + $0xb0] sm:$0xff]
    %v170 = vld [vmem:[%s1 + $0xb8] sm:$0xff]
    %v171 = vld [vmem:[%s1 + $0xc0] sm:$0xff]
    %v172 = vld [vmem:[%s1 + $0xc8] sm:$0xff]
    %v173 = vld [vmem:[%s1 + $0xd0] sm:$0xff]
    %v174 = vld [vmem:[%s1 + $0xd8] sm:$0xff]
    %v175 = vld [vmem:[%s1 + $0xe0] sm:$0xff]
    %v176 = vld [vmem:[%s1 + $0xe8] sm:$0xff]
    %v177 = vld [vmem:[%s1 + $0xf0] sm:$0xff]
    %v178 = vld [vmem:[%s1 + $0xf8] sm:$0xff]
    %v179 = vld [vmem:[%s2] sm:$0x1]
    %v181 = vperm.slane %v179, 0
    %183 = vmatpush.msra.mxu0 %v162
    %184 = vmatpush.msra.mxu0 %v161
    %185 = vmatpush.msra.mxu0 %v160
    %186 = vmatpush.msra.mxu0 %v159
    %187 = vmatpush.msra.mxu0 %v158
    %188 = vmatpush.msra.mxu0 %v157
    %189 = vmatpush.msra.mxu0 %v156
    %190 = vmatpush.msra.mxu0 %v155
    %191 = vmatpush.msra.mxu0 %v154
    %192 = vmatpush.msra.mxu0 %v153
    %193 = vmatpush.msra.mxu0 %v152
    %194 = vmatpush.msra.mxu0 %v151
    %195 = vmatpush.msra.mxu0 %v150
    %196 = vmatpush.msra.mxu0 %v149
    %197 = vmatpush.msra.mxu0 %v148
    %198 = vmatpush.msra.mxu0 %v147
    %199 = vmatmul.f32.gmra.mxu0 %v19
    %v200 = vpop.f32.mrf.mxu0
    %v201 = vadd.f32 %v181, %v200
    %202 = vmatmul.f32.gmra.mxu0 %v21
    %v203 = vpop.f32.mrf.mxu0
    %v204 = vadd.f32 %v181, %v203
    %205 = vmatmul.f32.gmra.mxu0 %v23
    %v206 = vpop.f32.mrf.mxu0
    %v207 = vadd.f32 %v181, %v206
    %208 = vmatmul.f32.gmra.mxu0 %v25
    %v209 = vpop.f32.mrf.mxu0
    %v210 = vadd.f32 %v181, %v209
    %211 = vmatmul.f32.gmra.mxu0 %v27
    %v212 = vpop.f32.mrf.mxu0
    %v213 = vadd.f32 %v181, %v212
    %214 = vmatmul.f32.gmra.mxu0 %v29
    %v215 = vpop.f32.mrf.mxu0
    %v216 = vadd.f32 %v181, %v215
    %217 = vmatmul.f32.gmra.mxu0 %v31
    %v218 = vpop.f32.mrf.mxu0
    %v219 = vadd.f32 %v181, %v218
    %220 = vmatmul.f32.gmra.mxu0 %v33
    %v221 = vpop.f32.mrf.mxu0
    %v222 = vadd.f32 %v181, %v221
    %223 = vmatmul.f32.gmra.mxu0 %v35
    %v224 = vpop.f32.mrf.mxu0
    %v225 = vadd.f32 %v181, %v224
    %226 = vmatmul.f32.gmra.mxu0 %v37
    %v227 = vpop.f32.mrf.mxu0
    %v228 = vadd.f32 %v181, %v227
    %229 = vmatmul.f32.gmra.mxu0 %v39
    %v230 = vpop.f32.mrf.mxu0
    %v231 = vadd.f32 %v181, %v230
    %232 = vmatmul.f32.gmra.mxu0 %v41
    %v233 = vpop.f32.mrf.mxu0
    %v234 = vadd.f32 %v181, %v233
    %235 = vmatmul.f32.gmra.mxu0 %v43
    %v236 = vpop.f32.mrf.mxu0
    %v237 = vadd.f32 %v181, %v236
    %238 = vmatmul.f32.gmra.mxu0 %v45
    %v239 = vpop.f32.mrf.mxu0
    %v240 = vadd.f32 %v181, %v239
    %241 = vmatmul.f32.gmra.mxu0 %v47
    %v242 = vpop.f32.mrf.mxu0
    %v243 = vadd.f32 %v181, %v242
    %244 = vmatmul.f32.gmra.mxu0 %v49
    %v245 = vpop.f32.mrf.mxu0
    %v246 = vadd.f32 %v181, %v245
    %247 = vmatmul.f32.gmra.mxu0 %v51
    %v248 = vpop.f32.mrf.mxu0
    %v249 = vadd.f32 %v181, %v248
    %250 = vmatmul.f32.gmra.mxu0 %v53
    %v251 = vpop.f32.mrf.mxu0
    %v252 = vadd.f32 %v181, %v251
    %253 = vmatmul.f32.gmra.mxu0 %v55
    %v254 = vpop.f32.mrf.mxu0
    %v255 = vadd.f32 %v181, %v254
    %256 = vmatmul.f32.gmra.mxu0 %v57
    %v257 = vpop.f32.mrf.mxu0
    %v258 = vadd.f32 %v181, %v257
    %259 = vmatmul.f32.gmra.mxu0 %v59
    %v260 = vpop.f32.mrf.mxu0
    %v261 = vadd.f32 %v181, %v260
    %262 = vmatmul.f32.gmra.mxu0 %v61
    %v263 = vpop.f32.mrf.mxu0
    %v264 = vadd.f32 %v181, %v263
    %265 = vmatmul.f32.gmra.mxu0 %v63
    %v266 = vpop.f32.mrf.mxu0
    %v267 = vadd.f32 %v181, %v266
    %268 = vmatmul.f32.gmra.mxu0 %v65
    %v269 = vpop.f32.mrf.mxu0
    %v270 = vadd.f32 %v181, %v269
    %271 = vmatmul.f32.gmra.mxu0 %v67
    %v272 = vpop.f32.mrf.mxu0
    %v273 = vadd.f32 %v181, %v272
    %274 = vmatmul.f32.gmra.mxu0 %v69
    %v275 = vpop.f32.mrf.mxu0
    %v276 = vadd.f32 %v181, %v275
    %277 = vmatmul.f32.gmra.mxu0 %v71
    %v278 = vpop.f32.mrf.mxu0
    %v279 = vadd.f32 %v181, %v278
    %280 = vmatmul.f32.gmra.mxu0 %v73
    %v281 = vpop.f32.mrf.mxu0
    %v282 = vadd.f32 %v181, %v281
    %283 = vmatmul.f32.gmra.mxu0 %v75
    %v284 = vpop.f32.mrf.mxu0
    %v285 = vadd.f32 %v181, %v284
    %286 = vmatmul.f32.gmra.mxu0 %v77
    %v287 = vpop.f32.mrf.mxu0
    %v288 = vadd.f32 %v181, %v287
    %289 = vmatmul.f32.gmra.mxu0 %v79
    %v290 = vpop.f32.mrf.mxu0
    %v291 = vadd.f32 %v181, %v290
    %292 = vmatmul.f32.gmra.mxu0 %v81
    %v293 = vpop.f32.mrf.mxu0
    %v294 = vadd.f32 %v181, %v293
    %295 = vmatmul.f32.gmra.mxu0 %v83
    %v296 = vpop.f32.mrf.mxu0
    %v297 = vadd.f32 %v181, %v296
    %298 = vmatmul.f32.gmra.mxu0 %v85
    %v299 = vpop.f32.mrf.mxu0
    %v300 = vadd.f32 %v181, %v299
    %301 = vmatmul.f32.gmra.mxu0 %v87
    %v302 = vpop.f32.mrf.mxu0
    %v303 = vadd.f32 %v181, %v302
    %304 = vmatmul.f32.gmra.mxu0 %v89
    %v305 = vpop.f32.mrf.mxu0
    %v306 = vadd.f32 %v181, %v305
    %307 = vmatmul.f32.gmra.mxu0 %v91
    %v308 = vpop.f32.mrf.mxu0
    %v309 = vadd.f32 %v181, %v308
    %310 = vmatmul.f32.gmra.mxu0 %v93
    %v311 = vpop.f32.mrf.mxu0
    %v312 = vadd.f32 %v181, %v311
    %313 = vmatmul.f32.gmra.mxu0 %v95
    %v314 = vpop.f32.mrf.mxu0
    %v315 = vadd.f32 %v181, %v314
    %316 = vmatmul.f32.gmra.mxu0 %v97
    %v317 = vpop.f32.mrf.mxu0
    %v318 = vadd.f32 %v181, %v317
    %319 = vmatmul.f32.gmra.mxu0 %v99
    %v320 = vpop.f32.mrf.mxu0
    %v321 = vadd.f32 %v181, %v320
    %322 = vmatmul.f32.gmra.mxu0 %v101
    %v323 = vpop.f32.mrf.mxu0
    %v324 = vadd.f32 %v181, %v323
    %325 = vmatmul.f32.gmra.mxu0 %v103
    %v326 = vpop.f32.mrf.mxu0
    %v327 = vadd.f32 %v181, %v326
    %328 = vmatmul.f32.gmra.mxu0 %v105
    %v329 = vpop.f32.mrf.mxu0
    %v330 = vadd.f32 %v181, %v329
    %331 = vmatmul.f32.gmra.mxu0 %v107
    %v332 = vpop.f32.mrf.mxu0
    %v333 = vadd.f32 %v181, %v332
    %334 = vmatmul.f32.gmra.mxu0 %v109
    %v335 = vpop.f32.mrf.mxu0
    %v336 = vadd.f32 %v181, %v335
    %337 = vmatmul.f32.gmra.mxu0 %v111
    %v338 = vpop.f32.mrf.mxu0
    %v339 = vadd.f32 %v181, %v338
    %340 = vmatmul.f32.gmra.mxu0 %v113
    %v341 = vpop.f32.mrf.mxu0
    %v342 = vadd.f32 %v181, %v341
    %343 = vmatmul.f32.gmra.mxu0 %v115
    %v344 = vpop.f32.mrf.mxu0
    %v345 = vadd.f32 %v181, %v344
    %346 = vmatmul.f32.gmra.mxu0 %v117
    %v347 = vpop.f32.mrf.mxu0
    %v348 = vadd.f32 %v181, %v347
    %349 = vmatmul.f32.gmra.mxu0 %v119
    %v350 = vpop.f32.mrf.mxu0
    %v351 = vadd.f32 %v181, %v350
    %352 = vmatmul.f32.gmra.mxu0 %v121
    %v353 = vpop.f32.mrf.mxu0
    %v354 = vadd.f32 %v181, %v353
    %355 = vmatmul.f32.gmra.mxu0 %v123
    %v356 = vpop.f32.mrf.mxu0
    %v357 = vadd.f32 %v181, %v356
    %358 = vmatmul.f32.gmra.mxu0 %v125
    %v359 = vpop.f32.mrf.mxu0
    %v360 = vadd.f32 %v181, %v359
    %361 = vmatmul.f32.gmra.mxu0 %v127
    %v362 = vpop.f32.mrf.mxu0
    %v363 = vadd.f32 %v181, %v362
    %364 = vmatmul.f32.gmra.mxu0 %v129
    %v365 = vpop.f32.mrf.mxu0
    %v366 = vadd.f32 %v181, %v365
    %367 = vmatmul.f32.gmra.mxu0 %v131
    %v368 = vpop.f32.mrf.mxu0
    %v369 = vadd.f32 %v181, %v368
    %370 = vmatmul.f32.gmra.mxu0 %v133
    %v371 = vpop.f32.mrf.mxu0
    %v372 = vadd.f32 %v181, %v371
    %373 = vmatmul.f32.gmra.mxu0 %v135
    %v374 = vpop.f32.mrf.mxu0
    %v375 = vadd.f32 %v181, %v374
    %376 = vmatmul.f32.gmra.mxu0 %v137
    %v377 = vpop.f32.mrf.mxu0
    %v378 = vadd.f32 %v181, %v377
    %379 = vmatmul.f32.gmra.mxu0 %v139
    %v380 = vpop.f32.mrf.mxu0
    %v381 = vadd.f32 %v181, %v380
    %382 = vmatmul.f32.gmra.mxu0 %v141
    %v383 = vpop.f32.mrf.mxu0
    %v384 = vadd.f32 %v181, %v383
    %385 = vmatmul.f32.gmra.mxu0 %v143
    %v386 = vpop.f32.mrf.mxu0
    %v387 = vadd.f32 %v181, %v386
    %388 = vmatmul.f32.gmra.mxu0 %v145
    %v389 = vpop.f32.mrf.mxu0
    %v390 = vadd.f32 %v181, %v389
    %391 = vdwg.mxu0
    %392 = vmatpush.msra.mxu0 %v178
    %393 = vmatpush.msra.mxu0 %v177
    %394 = vmatpush.msra.mxu0 %v176
    %395 = vmatpush.msra.mxu0 %v175
    %396 = vmatpush.msra.mxu0 %v174
    %397 = vmatpush.msra.mxu0 %v173
    %398 = vmatpush.msra.mxu0 %v172
    %399 = vmatpush.msra.mxu0 %v171
    %400 = vmatpush.msra.mxu0 %v170
    %401 = vmatpush.msra.mxu0 %v169
    %402 = vmatpush.msra.mxu0 %v168
    %403 = vmatpush.msra.mxu0 %v167
    %404 = vmatpush.msra.mxu0 %v166
    %405 = vmatpush.msra.mxu0 %v165
    %406 = vmatpush.msra.mxu0 %v164
    %407 = vmatpush.msra.mxu0 %v163
    %408 = vmatmul.f32.gmra.mxu0 %v20
    %v409 = vpop.f32.mrf.mxu0
    %v410 = vadd.f32 %v201, %v409
    %411 = vmatmul.f32.gmra.mxu0 %v22
    %v412 = vpop.f32.mrf.mxu0
    %v413 = vadd.f32 %v204, %v412
    %414 = vmatmul.f32.gmra.mxu0 %v24
    %v415 = vpop.f32.mrf.mxu0
    %v416 = vadd.f32 %v207, %v415
    %417 = vmatmul.f32.gmra.mxu0 %v26
    %v418 = vpop.f32.mrf.mxu0
    %v419 = vadd.f32 %v210, %v418
    %420 = vmatmul.f32.gmra.mxu0 %v28
    %v421 = vpop.f32.mrf.mxu0
    %v422 = vadd.f32 %v213, %v421
    %423 = vmatmul.f32.gmra.mxu0 %v30
    %v424 = vpop.f32.mrf.mxu0
    %v425 = vadd.f32 %v216, %v424
    %426 = vmatmul.f32.gmra.mxu0 %v32
    %v427 = vpop.f32.mrf.mxu0
    %v428 = vadd.f32 %v219, %v427
    %429 = vmatmul.f32.gmra.mxu0 %v34
    %v430 = vpop.f32.mrf.mxu0
    %v431 = vadd.f32 %v222, %v430
    %432 = vmatmul.f32.gmra.mxu0 %v36
    %v433 = vpop.f32.mrf.mxu0
    %v434 = vadd.f32 %v225, %v433
    %435 = vmatmul.f32.gmra.mxu0 %v38
    %v436 = vpop.f32.mrf.mxu0
    %v437 = vadd.f32 %v228, %v436
    %438 = vmatmul.f32.gmra.mxu0 %v40
    %v439 = vpop.f32.mrf.mxu0
    %v440 = vadd.f32 %v231, %v439
    %441 = vmatmul.f32.gmra.mxu0 %v42
    %v442 = vpop.f32.mrf.mxu0
    %v443 = vadd.f32 %v234, %v442
    %444 = vmatmul.f32.gmra.mxu0 %v44
    %v445 = vpop.f32.mrf.mxu0
    %v446 = vadd.f32 %v237, %v445
    %447 = vmatmul.f32.gmra.mxu0 %v46
    %v448 = vpop.f32.mrf.mxu0
    %v449 = vadd.f32 %v240, %v448
    %450 = vmatmul.f32.gmra.mxu0 %v48
    %v451 = vpop.f32.mrf.mxu0
    %v452 = vadd.f32 %v243, %v451
    %453 = vmatmul.f32.gmra.mxu0 %v50
    %v454 = vpop.f32.mrf.mxu0
    %v455 = vadd.f32 %v246, %v454
    %456 = vmatmul.f32.gmra.mxu0 %v52
    %v457 = vpop.f32.mrf.mxu0
    %v458 = vadd.f32 %v249, %v457
    %459 = vmatmul.f32.gmra.mxu0 %v54
    %v460 = vpop.f32.mrf.mxu0
    %v461 = vadd.f32 %v252, %v460
    %462 = vmatmul.f32.gmra.mxu0 %v56
    %v463 = vpop.f32.mrf.mxu0
    %v464 = vadd.f32 %v255, %v463
    %465 = vmatmul.f32.gmra.mxu0 %v58
    %v466 = vpop.f32.mrf.mxu0
    %v467 = vadd.f32 %v258, %v466
    %468 = vmatmul.f32.gmra.mxu0 %v60
    %v469 = vpop.f32.mrf.mxu0
    %v470 = vadd.f32 %v261, %v469
    %471 = vmatmul.f32.gmra.mxu0 %v62
    %v472 = vpop.f32.mrf.mxu0
    %v473 = vadd.f32 %v264, %v472
    %474 = vmatmul.f32.gmra.mxu0 %v64
    %v475 = vpop.f32.mrf.mxu0
    %v476 = vadd.f32 %v267, %v475
    %477 = vmatmul.f32.gmra.mxu0 %v66
    %v478 = vpop.f32.mrf.mxu0
    %v479 = vadd.f32 %v270, %v478
    %480 = vmatmul.f32.gmra.mxu0 %v68
    %v481 = vpop.f32.mrf.mxu0
    %v482 = vadd.f32 %v273, %v481
    %483 = vmatmul.f32.gmra.mxu0 %v70
    %v484 = vpop.f32.mrf.mxu0
    %v485 = vadd.f32 %v276, %v484
    %486 = vmatmul.f32.gmra.mxu0 %v72
    %v487 = vpop.f32.mrf.mxu0
    %v488 = vadd.f32 %v279, %v487
    %489 = vmatmul.f32.gmra.mxu0 %v74
    %v490 = vpop.f32.mrf.mxu0
    %v491 = vadd.f32 %v282, %v490
    %492 = vmatmul.f32.gmra.mxu0 %v76
    %v493 = vpop.f32.mrf.mxu0
    %v494 = vadd.f32 %v285, %v493
    %495 = vmatmul.f32.gmra.mxu0 %v78
    %v496 = vpop.f32.mrf.mxu0
    %v497 = vadd.f32 %v288, %v496
    %498 = vmatmul.f32.gmra.mxu0 %v80
    %v499 = vpop.f32.mrf.mxu0
    %v500 = vadd.f32 %v291, %v499
    %501 = vmatmul.f32.gmra.mxu0 %v82
    %v502 = vpop.f32.mrf.mxu0
    %v503 = vadd.f32 %v294, %v502
    %504 = vmatmul.f32.gmra.mxu0 %v84
    %v505 = vpop.f32.mrf.mxu0
    %v506 = vadd.f32 %v297, %v505
    %507 = vmatmul.f32.gmra.mxu0 %v86
    %v508 = vpop.f32.mrf.mxu0
    %v509 = vadd.f32 %v300, %v508
    %510 = vmatmul.f32.gmra.mxu0 %v88
    %v511 = vpop.f32.mrf.mxu0
    %v512 = vadd.f32 %v303, %v511
    %513 = vmatmul.f32.gmra.mxu0 %v90
    %v514 = vpop.f32.mrf.mxu0
    %v515 = vadd.f32 %v306, %v514
    %516 = vmatmul.f32.gmra.mxu0 %v92
    %v517 = vpop.f32.mrf.mxu0
    %v518 = vadd.f32 %v309, %v517
    %519 = vmatmul.f32.gmra.mxu0 %v94
    %v520 = vpop.f32.mrf.mxu0
    %v521 = vadd.f32 %v312, %v520
    %522 = vmatmul.f32.gmra.mxu0 %v96
    %v523 = vpop.f32.mrf.mxu0
    %v524 = vadd.f32 %v315, %v523
    %525 = vmatmul.f32.gmra.mxu0 %v98
    %v526 = vpop.f32.mrf.mxu0
    %v527 = vadd.f32 %v318, %v526
    %528 = vmatmul.f32.gmra.mxu0 %v100
    %v529 = vpop.f32.mrf.mxu0
    %v530 = vadd.f32 %v321, %v529
    %531 = vmatmul.f32.gmra.mxu0 %v102
    %v532 = vpop.f32.mrf.mxu0
    %v533 = vadd.f32 %v324, %v532
    %534 = vmatmul.f32.gmra.mxu0 %v104
    %v535 = vpop.f32.mrf.mxu0
    %v536 = vadd.f32 %v327, %v535
    %537 = vmatmul.f32.gmra.mxu0 %v106
    %v538 = vpop.f32.mrf.mxu0
    %v539 = vadd.f32 %v330, %v538
    %540 = vmatmul.f32.gmra.mxu0 %v108
    %v541 = vpop.f32.mrf.mxu0
    %v542 = vadd.f32 %v333, %v541
    %543 = vmatmul.f32.gmra.mxu0 %v110
    %v544 = vpop.f32.mrf.mxu0
    %v545 = vadd.f32 %v336, %v544
    %546 = vmatmul.f32.gmra.mxu0 %v112
    %v547 = vpop.f32.mrf.mxu0
    %v548 = vadd.f32 %v339, %v547
    %549 = vmatmul.f32.gmra.mxu0 %v114
    %v550 = vpop.f32.mrf.mxu0
    %v551 = vadd.f32 %v342, %v550
    %552 = vmatmul.f32.gmra.mxu0 %v116
    %v553 = vpop.f32.mrf.mxu0
    %v554 = vadd.f32 %v345, %v553
    %555 = vmatmul.f32.gmra.mxu0 %v118
    %v556 = vpop.f32.mrf.mxu0
    %v557 = vadd.f32 %v348, %v556
    %558 = vmatmul.f32.gmra.mxu0 %v120
    %v559 = vpop.f32.mrf.mxu0
    %v560 = vadd.f32 %v351, %v559
    %561 = vmatmul.f32.gmra.mxu0 %v122
    %v562 = vpop.f32.mrf.mxu0
    %v563 = vadd.f32 %v354, %v562
    %564 = vmatmul.f32.gmra.mxu0 %v124
    %v565 = vpop.f32.mrf.mxu0
    %v566 = vadd.f32 %v357, %v565
    %567 = vmatmul.f32.gmra.mxu0 %v126
    %v568 = vpop.f32.mrf.mxu0
    %v569 = vadd.f32 %v360, %v568
    %570 = vmatmul.f32.gmra.mxu0 %v128
    %v571 = vpop.f32.mrf.mxu0
    %v572 = vadd.f32 %v363, %v571
    %573 = vmatmul.f32.gmra.mxu0 %v130
    %v574 = vpop.f32.mrf.mxu0
    %v575 = vadd.f32 %v366, %v574
    %576 = vmatmul.f32.gmra.mxu0 %v132
    %v577 = vpop.f32.mrf.mxu0
    %v578 = vadd.f32 %v369, %v577
    %579 = vmatmul.f32.gmra.mxu0 %v134
    %v580 = vpop.f32.mrf.mxu0
    %v581 = vadd.f32 %v372, %v580
    %582 = vmatmul.f32.gmra.mxu0 %v136
    %v583 = vpop.f32.mrf.mxu0
    %v584 = vadd.f32 %v375, %v583
    %585 = vmatmul.f32.gmra.mxu0 %v138
    %v586 = vpop.f32.mrf.mxu0
    %v587 = vadd.f32 %v378, %v586
    %588 = vmatmul.f32.gmra.mxu0 %v140
    %v589 = vpop.f32.mrf.mxu0
    %v590 = vadd.f32 %v381, %v589
    %591 = vmatmul.f32.gmra.mxu0 %v142
    %v592 = vpop.f32.mrf.mxu0
    %v593 = vadd.f32 %v384, %v592
    %594 = vmatmul.f32.gmra.mxu0 %v144
    %v595 = vpop.f32.mrf.mxu0
    %v596 = vadd.f32 %v387, %v595
    %597 = vmatmul.f32.gmra.mxu0 %v146
    %v598 = vpop.f32.mrf.mxu0
    %v599 = vadd.f32 %v390, %v598
    %600 = vdwg.mxu0
    %601 = vst [vmem:[%s3] sm:$0xff] %v410
    %602 = vst [vmem:[%s3 + $0x8] sm:$0xff] %v413
    %603 = vst [vmem:[%s3 + $0x10] sm:$0xff] %v416
    %604 = vst [vmem:[%s3 + $0x18] sm:$0xff] %v419
    %605 = vst [vmem:[%s3 + $0x20] sm:$0xff] %v422
    %606 = vst [vmem:[%s3 + $0x28] sm:$0xff] %v425
    %607 = vst [vmem:[%s3 + $0x30] sm:$0xff] %v428
    %608 = vst [vmem:[%s3 + $0x38] sm:$0xff] %v431
    %609 = vst [vmem:[%s3 + $0x40] sm:$0xff] %v434
    %610 = vst [vmem:[%s3 + $0x48] sm:$0xff] %v437
    %611 = vst [vmem:[%s3 + $0x50] sm:$0xff] %v440
    %612 = vst [vmem:[%s3 + $0x58] sm:$0xff] %v443
    %613 = vst [vmem:[%s3 + $0x60] sm:$0xff] %v446
    %614 = vst [vmem:[%s3 + $0x68] sm:$0xff] %v449
    %615 = vst [vmem:[%s3 + $0x70] sm:$0xff] %v452
    %616 = vst [vmem:[%s3 + $0x78] sm:$0xff] %v455
    %617 = vst [vmem:[%s3 + $0x80] sm:$0xff] %v458
    %618 = vst [vmem:[%s3 + $0x88] sm:$0xff] %v461
    %619 = vst [vmem:[%s3 + $0x90] sm:$0xff] %v464
    %620 = vst [vmem:[%s3 + $0x98] sm:$0xff] %v467
    %621 = vst [vmem:[%s3 + $0xa0] sm:$0xff] %v470
    %622 = vst [vmem:[%s3 + $0xa8] sm:$0xff] %v473
    %623 = vst [vmem:[%s3 + $0xb0] sm:$0xff] %v476
    %624 = vst [vmem:[%s3 + $0xb8] sm:$0xff] %v479
    %625 = vst [vmem:[%s3 + $0xc0] sm:$0xff] %v482
    %626 = vst [vmem:[%s3 + $0xc8] sm:$0xff] %v485
    %627 = vst [vmem:[%s3 + $0xd0] sm:$0xff] %v488
    %628 = vst [vmem:[%s3 + $0xd8] sm:$0xff] %v491
    %629 = vst [vmem:[%s3 + $0xe0] sm:$0xff] %v494
    %630 = vst [vmem:[%s3 + $0xe8] sm:$0xff] %v497
    %631 = vst [vmem:[%s3 + $0xf0] sm:$0xff] %v500
    %632 = vst [vmem:[%s3 + $0xf8] sm:$0xff] %v503
    %633 = vst [vmem:[%s3 + $0x100] sm:$0xff] %v506
    %634 = vst [vmem:[%s3 + $0x108] sm:$0xff] %v509
    %635 = vst [vmem:[%s3 + $0x110] sm:$0xff] %v512
    %636 = vst [vmem:[%s3 + $0x118] sm:$0xff] %v515
    %637 = vst [vmem:[%s3 + $0x120] sm:$0xff] %v518
    %638 = vst [vmem:[%s3 + $0x128] sm:$0xff] %v521
    %639 = vst [vmem:[%s3 + $0x130] sm:$0xff] %v524
    %640 = vst [vmem:[%s3 + $0x138] sm:$0xff] %v527
    %641 = vst [vmem:[%s3 + $0x140] sm:$0xff] %v530
    %642 = vst [vmem:[%s3 + $0x148] sm:$0xff] %v533
    %643 = vst [vmem:[%s3 + $0x150] sm:$0xff] %v536
    %644 = vst [vmem:[%s3 + $0x158] sm:$0xff] %v539
    %645 = vst [vmem:[%s3 + $0x160] sm:$0xff] %v542
    %646 = vst [vmem:[%s3 + $0x168] sm:$0xff] %v545
    %647 = vst [vmem:[%s3 + $0x170] sm:$0xff] %v548
    %648 = vst [vmem:[%s3 + $0x178] sm:$0xff] %v551
    %649 = vst [vmem:[%s3 + $0x180] sm:$0xff] %v554
    %650 = vst [vmem:[%s3 + $0x188] sm:$0xff] %v557
    %651 = vst [vmem:[%s3 + $0x190] sm:$0xff] %v560
    %652 = vst [vmem:[%s3 + $0x198] sm:$0xff] %v563
    %653 = vst [vmem:[%s3 + $0x1a0] sm:$0xff] %v566
    %654 = vst [vmem:[%s3 + $0x1a8] sm:$0xff] %v569
    %655 = vst [vmem:[%s3 + $0x1b0] sm:$0xff] %v572
    %656 = vst [vmem:[%s3 + $0x1b8] sm:$0xff] %v575
    %657 = vst [vmem:[%s3 + $0x1c0] sm:$0xff] %v578
    %658 = vst [vmem:[%s3 + $0x1c8] sm:$0xff] %v581
    %659 = vst [vmem:[%s3 + $0x1d0] sm:$0xff] %v584
    %660 = vst [vmem:[%s3 + $0x1d8] sm:$0xff] %v587
    %661 = vst [vmem:[%s3 + $0x1e0] sm:$0xff] %v590
    %662 = vst [vmem:[%s3 + $0x1e8] sm:$0xff] %v593
    %663 = vst [vmem:[%s3 + $0x1f0] sm:$0xff] %v596
    %664 = vst [vmem:[%s3 + $0x1f8] sm:$0xff] %v599
    %v665 = vadd.f32 %v410, %v413
    %v666 = vadd.f32 %v665, %v416
    %v667 = vadd.f32 %v666, %v419
    %v668 = vadd.f32 %v667, %v422
    %v669 = vadd.f32 %v668, %v425
    %v670 = vadd.f32 %v669, %v428
    %v671 = vadd.f32 %v670, %v431
    %v672 = vadd.f32 %v671, %v434
    %v673 = vadd.f32 %v672, %v437
    %v674 = vadd.f32 %v673, %v440
    %v675 = vadd.f32 %v674, %v443
    %v676 = vadd.f32 %v675, %v446
    %v677 = vadd.f32 %v676, %v449
    %v678 = vadd.f32 %v677, %v452
    %v679 = vadd.f32 %v678, %v455
    %v680 = vadd.f32 %v679, %v458
    %v681 = vadd.f32 %v680, %v461
    %v682 = vadd.f32 %v681, %v464
    %v683 = vadd.f32 %v682, %v467
    %v684 = vadd.f32 %v683, %v470
    %v685 = vadd.f32 %v684, %v473
    %v686 = vadd.f32 %v685, %v476
    %v687 = vadd.f32 %v686, %v479
    %v688 = vadd.f32 %v687, %v482
    %v689 = vadd.f32 %v688, %v485
    %v690 = vadd.f32 %v689, %v488
    %v691 = vadd.f32 %v690, %v491
    %v692 = vadd.f32 %v691, %v494
    %v693 = vadd.f32 %v692, %v497
    %v694 = vadd.f32 %v693, %v500
    %v695 = vadd.f32 %v694, %v503
    %v696 = vadd.f32 %v695, %v506
    %v697 = vadd.f32 %v696, %v509
    %v698 = vadd.f32 %v697, %v512
    %v699 = vadd.f32 %v698, %v515
    %v700 = vadd.f32 %v699, %v518
    %v701 = vadd.f32 %v700, %v521
    %v702 = vadd.f32 %v701, %v524
    %v703 = vadd.f32 %v702, %v527
    %v704 = vadd.f32 %v703, %v530
    %v705 = vadd.f32 %v704, %v533
    %v706 = vadd.f32 %v705, %v536
    %v707 = vadd.f32 %v706, %v539
    %v708 = vadd.f32 %v707, %v542
    %v709 = vadd.f32 %v708, %v545
    %v710 = vadd.f32 %v709, %v548
    %v711 = vadd.f32 %v710, %v551
    %v712 = vadd.f32 %v711, %v554
    %v713 = vadd.f32 %v712, %v557
    %v714 = vadd.f32 %v713, %v560
    %v715 = vadd.f32 %v714, %v563
    %v716 = vadd.f32 %v715, %v566
    %v717 = vadd.f32 %v716, %v569
    %v718 = vadd.f32 %v717, %v572
    %v719 = vadd.f32 %v718, %v575
    %v720 = vadd.f32 %v719, %v578
    %v721 = vadd.f32 %v720, %v581
    %v722 = vadd.f32 %v721, %v584
    %v723 = vadd.f32 %v722, %v587
    %v724 = vadd.f32 %v723, %v590
    %v725 = vadd.f32 %v724, %v593
    %v726 = vadd.f32 %v725, %v596
    %v727 = vadd.f32 %v726, %v599
    %v728 = vrot.slane %v727, 4
    %v729 = vadd.f32 %v727, %v728
    %v730 = vrot.slane %v729, 2
    %v731 = vadd.f32 %v729, %v730
    %v732 = vrot.slane %v731, 1
    %v733 = vadd.f32 %v731, %v732
    %734 = vst [vmem:[#allocation2] sm:$0xff] %v733
    %v735 = vmul.f32 %v410, %v410
    %v736 = vmul.f32 %v413, %v413
    %v737 = vmul.f32 %v416, %v416
    %v738 = vmul.f32 %v419, %v419
    %v739 = vmul.f32 %v422, %v422
    %v740 = vmul.f32 %v425, %v425
    %v741 = vmul.f32 %v428, %v428
    %v742 = vmul.f32 %v431, %v431
    %v743 = vmul.f32 %v434, %v434
    %v744 = vmul.f32 %v437, %v437
    %v745 = vmul.f32 %v440, %v440
    %v746 = vmul.f32 %v443, %v443
    %v747 = vmul.f32 %v446, %v446
    %v748 = vmul.f32 %v449, %v449
    %v749 = vmul.f32 %v452, %v452
    %v750 = vmul.f32 %v455, %v455
    %v751 = vmul.f32 %v458, %v458
    %v752 = vmul.f32 %v461, %v461
    %v753 = vmul.f32 %v464, %v464
    %v754 = vmul.f32 %v467, %v467
    %v755 = vmul.f32 %v470, %v470
    %v756 = vmul.f32 %v473, %v473
    %v757 = vmul.f32 %v476, %v476
    %v758 = vmul.f32 %v479, %v479
    %v759 = vmul.f32 %v482, %v482
    %v760 = vmul.f32 %v485, %v485
    %v761 = vmul.f32 %v488, %v488
    %v762 = vmul.f32 %v491, %v491
    %v763 = vmul.f32 %v494, %v494
    %v764 = vmul.f32 %v497, %v497
    %v765 = vmul.f32 %v500, %v500
    %v766 = vmul.f32 %v503, %v503
    %v767 = vmul.f32 %v506, %v506
    %v768 = vmul.f32 %v509, %v509
    %v769 = vmul.f32 %v512, %v512
    %v770 = vmul.f32 %v515, %v515
    %v771 = vmul.f32 %v518, %v518
    %v772 = vmul.f32 %v521, %v521
    %v773 = vmul.f32 %v524, %v524
    %v774 = vmul.f32 %v527, %v527
    %v775 = vmul.f32 %v530, %v530
    %v776 = vmul.f32 %v533, %v533
    %v777 = vmul.f32 %v536, %v536
    %v778 = vmul.f32 %v539, %v539
    %v779 = vmul.f32 %v542, %v542
    %v780 = vmul.f32 %v545, %v545
    %v781 = vmul.f32 %v548, %v548
    %v782 = vmul.f32 %v551, %v551
    %v783 = vmul.f32 %v554, %v554
    %v784 = vmul.f32 %v557, %v557
    %v785 = vmul.f32 %v560, %v560
    %v786 = vmul.f32 %v563, %v563
    %v787 = vmul.f32 %v566, %v566
    %v788 = vmul.f32 %v569, %v569
    %v789 = vmul.f32 %v572, %v572
    %v790 = vmul.f32 %v575, %v575
    %v791 = vmul.f32 %v578, %v578
    %v792 = vmul.f32 %v581, %v581
    %v793 = vmul.f32 %v584, %v584
    %v794 = vmul.f32 %v587, %v587
    %v795 = vmul.f32 %v590, %v590
    %v796 = vmul.f32 %v593, %v593
    %v797 = vmul.f32 %v596, %v596
    %v798 = vmul.f32 %v599, %v599
    %v799 = vadd.f32 %v735, %v736
    %v800 = vadd.f32 %v799, %v737
    %v801 = vadd.f32 %v800, %v738
    %v802 = vadd.f32 %v801, %v739
    %v803 = vadd.f32 %v802, %v740
    %v804 = vadd.f32 %v803, %v741
    %v805 = vadd.f32 %v804, %v742
    %v806 = vadd.f32 %v805, %v743
    %v807 = vadd.f32 %v806, %v744
    %v808 = vadd.f32 %v807, %v745
    %v809 = vadd.f32 %v808, %v746
    %v810 = vadd.f32 %v809, %v747
    %v811 = vadd.f32 %v810, %v748
    %v812 = vadd.f32 %v811, %v749
    %v813 = vadd.f32 %v812, %v750
    %v814 = vadd.f32 %v813, %v751
    %v815 = vadd.f32 %v814, %v752
    %v816 = vadd.f32 %v815, %v753
    %v817 = vadd.f32 %v816, %v754
    %v818 = vadd.f32 %v817, %v755
    %v819 = vadd.f32 %v818, %v756
    %v820 = vadd.f32 %v819, %v757
    %v821 = vadd.f32 %v820, %v758
    %v822 = vadd.f32 %v821, %v759
    %v823 = vadd.f32 %v822, %v760
    %v824 = vadd.f32 %v823, %v761
    %v825 = vadd.f32 %v824, %v762
    %v826 = vadd.f32 %v825, %v763
    %v827 = vadd.f32 %v826, %v764
    %v828 = vadd.f32 %v827, %v765
    %v829 = vadd.f32 %v828, %v766
    %v830 = vadd.f32 %v829, %v767
    %v831 = vadd.f32 %v830, %v768
    %v832 = vadd.f32 %v831, %v769
    %v833 = vadd.f32 %v832, %v770
    %v834 = vadd.f32 %v833, %v771
    %v835 = vadd.f32 %v834, %v772
    %v836 = vadd.f32 %v835, %v773
    %v837 = vadd.f32 %v836, %v774
    %v838 = vadd.f32 %v837, %v775
    %v839 = vadd.f32 %v838, %v776
    %v840 = vadd.f32 %v839, %v777
    %v841 = vadd.f32 %v840, %v778
    %v842 = vadd.f32 %v841, %v779
    %v843 = vadd.f32 %v842, %v780
    %v844 = vadd.f32 %v843, %v781
    %v845 = vadd.f32 %v844, %v782
    %v846 = vadd.f32 %v845, %v783
    %v847 = vadd.f32 %v846, %v784
    %v848 = vadd.f32 %v847, %v785
    %v849 = vadd.f32 %v848, %v786
    %v850 = vadd.f32 %v849, %v787
    %v851 = vadd.f32 %v850, %v788
    %v852 = vadd.f32 %v851, %v789
    %v853 = vadd.f32 %v852, %v790
    %v854 = vadd.f32 %v853, %v791
    %v855 = vadd.f32 %v854, %v792
    %v856 = vadd.f32 %v855, %v793
    %v857 = vadd.f32 %v856, %v794
    %v858 = vadd.f32 %v857, %v795
    %v859 = vadd.f32 %v858, %v796
    %v860 = vadd.f32 %v859, %v797
    %v861 = vadd.f32 %v860, %v798
    %v862 = vrot.slane %v861, 4
    %v863 = vadd.f32 %v861, %v862
    %v864 = vrot.slane %v863, 2
    %v865 = vadd.f32 %v863, %v864
    %v866 = vrot.slane %v865, 1
    %v867 = vadd.f32 %v865, %v866
    %868 = vst [vmem:[#allocation4] sm:$0xff] %v867
    // Predicated region
    $region14: #{decoder_forward.11} parent=1 // pred_check
      _
    $region15: #{decoder_forward.11} parent=1 // pred_check_branch
      %870 = sbr.rel (0) target = $region17
    $region16: #{decoder_forward.11} parent=1 // pred_region
      _
    $region17: #{decoder_forward.11} parent=1 // pred_fallthru
      _
    // Predicated region
    $region18: #{decoder_forward.11} parent=1 // pred_check
      _
    $region19: #{decoder_forward.11} parent=1 // pred_check_branch
      %872 = sbr.rel (0) target = $region21
    $region20: #{decoder_forward.11} parent=1 // pred_region
      %874 = vsyncadd [#allocation3], 0
      %s876 = sshll.u32 [#allocation2], 4
      %s877 = int_to_ptr.vmem [resolvable:$true] %s876
      %s878 = sshll.u32 %s4, 4
      %s879 = int_to_ptr.hbm [resolvable:$true] %s878
      %881 = dma.vmem_to_hbm [thread:$0]  %s877, 128, %s879, [#allocation3]
    $region21: #{decoder_forward.11} parent=1 // pred_fallthru
      _
    // Predicated region
    $region22: #{decoder_forward.11} parent=1 // pred_check
      _
    $region23: #{decoder_forward.11} parent=1 // pred_check_branch
      %883 = sbr.rel (0) target = $region25
    $region24: #{decoder_forward.11} parent=1 // pred_region
      %885 = vsyncadd [#allocation5], 0
      %s887 = sshll.u32 [#allocation4], 4
      %s888 = int_to_ptr.vmem [resolvable:$true] %s887
      %s889 = sshll.u32 %s5, 4
      %s890 = int_to_ptr.hbm [resolvable:$true] %s889
      %892 = dma.vmem_to_hbm [thread:$0]  %s888, 128, %s890, [#allocation5]
    $region25: #{decoder_forward.11} parent=1 // pred_fallthru
      _
    // Predicated region
    $region26: #{decoder_forward.11} parent=1 // pred_check
      _
    $region27: #{decoder_forward.11} parent=1 // pred_check_branch
      %894 = sbr.rel (0) target = $region29
    $region28: #{decoder_forward.11} parent=1 // pred_region
      _
    $region29: #{decoder_forward.11} parent=1 // pred_fallthru
      _
    // Predicated region
    $region30: #{decoder_forward.11} parent=1 // pred_check
      _
    $region31: #{decoder_forward.11} parent=1 // pred_check_branch
      %896 = sbr.rel (0) target = $region33
    $region32: #{decoder_forward.11} parent=1 // pred_region
      %898 = dma.done [#allocation3], 128
    $region33: #{decoder_forward.11} parent=1 // pred_fallthru
      _
    // Predicated region
    $region34: #{decoder_forward.11} parent=1 // pred_check
      _
    $region35: #{decoder_forward.11} parent=1 // pred_check_branch
      %900 = sbr.rel (0) target = $region37
    $region36: #{decoder_forward.11} parent=1 // pred_region
      %902 = dma.done [#allocation5], 128
    $region37: #{decoder_forward.11} parent=1 // pred_fallthru
      _
    %903 = vsyncpa [#allocation3], 1
    %904 = vsyncpa [#allocation5], 1

</llo_original>
